<compile_context>
chip_gen: v5e
topology: v5e:2x2
jax: 0.10.0
libtpu: 0.0.40
codegen_flags: <defaults>
</compile_context>

<pallas_src>
import functools

import jax
import jax.numpy as jnp
from jax.experimental import pallas as pl
from jax.experimental.pallas import tpu as pltpu

EPS = 1e-5
LANE = 128


def _round_up(v, m):
    return (v + m - 1) // m * m


# ------------------------------ fused kernel --------------------------------

def _fused_block_kernel(x_ref, w1_ref, b1_ref, w2_ref, b2_ref, *rest,
                        taps1, taps2, rows, wb, wo, mid_off, sc_r0, project):
    """One image: conv1+bn1+relu -> (VMEM) -> conv2+bn2 (+shortcut) +add+relu."""
    if project:
        wsc_ref, bsc_ref, o_ref, mid_ref, acc_ref = rest
    else:
        o_ref, mid_ref, acc_ref = rest

    # ---- conv1 (+ folded bn1), taps accumulated into f32 scratch ----
    for t, r0 in enumerate(taps1):
        prod = jnp.dot(x_ref[pl.ds(r0, rows), :], w1_ref[t],
                       preferred_element_type=jnp.float32)
        if t == 0:
            acc_ref[...] = prod
        else:
            acc_ref[...] += prod
    a1 = jnp.maximum(acc_ref[...] + b1_ref[...], 0.0)

    # Zero the 2 "garbage" columns (w >= wo inside each wb-wide flattened row);
    # after the shift below they become conv2's left/right zero padding.
    col = jax.lax.broadcasted_iota(jnp.int32, a1.shape, 0) % wb
    a1 = jnp.where(col < wo, a1, 0.0)

    # Place into conv2's zero-padded input slab, kept in VMEM (never hits HBM).
    mid_ref[...] = jnp.zeros_like(mid_ref)
    mid_ref[pl.ds(mid_off, rows), :] = a1.astype(mid_ref.dtype)

    # ---- conv2 (+ folded bn2) ----
    for t, r0 in enumerate(taps2):
        prod = jnp.dot(mid_ref[pl.ds(r0, rows), :], w2_ref[t],
                       preferred_element_type=jnp.float32)
        if t == 0:
            acc_ref[...] = prod
        else:
            acc_ref[...] += prod
    out = acc_ref[...] + b2_ref[...]

    # ---- shortcut: slices the conv1 input slab already resident in VMEM ----
    sc = x_ref[pl.ds(sc_r0, rows), :]
    if project:
        out = out + jnp.dot(sc, wsc_ref[...], preferred_element_type=jnp.float32)
        out = out + bsc_ref[...]
    else:
        out = out + sc.astype(jnp.float32)

    o_ref[...] = jnp.maximum(out, 0.0).astype(o_ref.dtype)


# ------------------------------- param prep ---------------------------------

def _fold_bn(gamma, beta, mean, var):
    scale = gamma / jnp.sqrt(var + EPS)
    bias = beta - mean * scale
    return scale, bias


def _prep_bias(bias, cout_p):
    return jnp.zeros((1, cout_p), jnp.float32).at[0, :bias.shape[0]].set(bias)


def prepare_block_params(params, stride):
    """Fold eval-mode BN into conv weights and re-layout once per param set."""
    if stride not in (1, 2):
        raise NotImplementedError("stride must be 1 or 2")
    cout, cin = params["w1"].shape[0], params["w1"].shape[1]
    cin_p, cout_p = _round_up(cin, LANE), _round_up(cout, LANE)

    s1, b1 = _fold_bn(*params["bn1"])
    s2, b2 = _fold_bn(*params["bn2"])

    # conv2: 9 taps, (9, cout_p, cout_p) bf16 with BN scale folded in.
    w2t = jnp.transpose(params["w2"], (2, 3, 1, 0)) * s2           # (3,3,ci,co)
    w2p = jnp.zeros((3, 3, cout_p, cout_p), jnp.float32)
    w2p = w2p.at[:, :, :cout, :cout].set(w2t).reshape(9, cout_p, cout_p)

    w1t = jnp.transpose(params["w1"], (2, 3, 1, 0)) * s1           # (3,3,ci,co)
    if stride == 1:
        w1p = jnp.zeros((3, 3, cin_p, cout_p), jnp.float32)
        w1p = w1p.at[:, :, :cin, :cout].set(w1t).reshape(9, cin_p, cout_p)
    else:
        # 9 taps merged into 4 spatial groups (kh//2, kw//2); the space-to-depth
        # phase selection lives in zero sub-blocks of the weight so activation
        # slices stay full-width and lane-dense. Channels padded AFTER S2D.
        cg = _round_up(4 * cin, LANE)
        w1p = jnp.zeros((4, cg, cout_p), jnp.float32)
        for kh in range(3):
            for kw in range(3):
                g = (kh // 2) * 2 + (kw // 2)
                p = (kh % 2) * 2 + (kw % 2)
                w1p = w1p.at[g, p * cin:(p + 1) * cin, :cout].set(w1t[kh, kw])

    prepped = {
        "w1": w1p.astype(jnp.bfloat16), "b1": _prep_bias(b1, cout_p),
        "w2": w2p.astype(jnp.bfloat16), "b2": _prep_bias(b2, cout_p),
        "cin": cin, "cout": cout, "stride": stride,
    }

    if (stride != 1) or (cin != cout):                      # projection shortcut
        ssc, bsc = _fold_bn(*params["bn_sc"])
        wsc = jnp.transpose(params["w_sc"][:, :, 0, 0], (1, 0)) * ssc  # (ci,co)
        if stride == 1:
            wscp = jnp.zeros((cin_p, cout_p), jnp.float32)
            wscp = wscp.at[:cin, :cout].set(wsc)
        else:
            # shortcut reads S2D phase (1,1): channel rows [3*cin, 4*cin)
            wscp = jnp.zeros((w1p.shape[1], cout_p), jnp.float32)
            wscp = wscp.at[3 * cin:4 * cin, :cout].set(wsc)
        prepped["w_sc"] = wscp.astype(jnp.bfloat16)
        prepped["b_sc"] = _prep_bias(bsc, cout_p)
    return prepped


# ------------------------------ forward pass --------------------------------

def basic_block_forward(x_nchw, prepped):
    """Pallas BasicBlock.forward (eval-mode BN), NCHW f32 in / NCHW f32 out."""
    stride = prepped["stride"]
    N, Cin, H, W = x_nchw.shape
    assert Cin == prepped["cin"]
    Cout = prepped["cout"]
    Cin_p = _round_up(Cin, LANE)
    Cout_p = prepped["w1"].shape[-1]
    ck1 = prepped["w1"].shape[1]
    Ho = (H - 1) // stride + 1
    Wo = (W - 1) // stride + 1
    Wb = Wo + 2                      # width of both flattened work slabs
    rows = Ho * Wb                   # conv1-output rows == conv2-output rows
    project = "w_sc" in prepped

    # ---- XLA-side prep: NHWC, spatial pad, (stride-2: space-to-depth),
    #      lane-pad channels, flatten rows, bf16. Single pass. ----
    x = jnp.transpose(x_nchw, (0, 2, 3, 1))                       # NHWC
    if stride == 1:
        xp = jnp.pad(x, ((0, 0), (1, 2), (1, 1), (0, Cin_p - Cin)))
        xa = xp.reshape(N, (H + 3) * Wb, Cin_p)
        taps1 = tuple(kh * Wb + kw for kh in range(3) for kw in range(3))
        sc_r0 = Wb + 1
    else:
        Hq, Wq = Ho + 2, Wo + 2
        xp = jnp.pad(x, ((0, 0), (1, 2 * Hq - H - 1), (1, 2 * Wq - W - 1), (0, 0)))
        xsd = xp.reshape(N, Hq, 2, Wq, 2, Cin).transpose(0, 1, 3, 2, 4, 5)
        xsd = xsd.reshape(N, Hq, Wq, 4 * Cin)
        xsd = jnp.pad(xsd, ((0, 0), (0, 0), (0, 0), (0, ck1 - 4 * Cin)))
        xa = xsd.reshape(N, Hq * Wq, ck1)
        taps1 = tuple(dh * Wq + dw for dh in range(2) for dw in range(2))
        sc_r0 = 0
    xa = xa.astype(jnp.bfloat16)
    Ra, Ca = xa.shape[1], xa.shape[2]

    taps2 = tuple(kh * Wb + kw for kh in range(3) for kw in range(3))
    mid_rows = (Ho + 3) * Wb
    mid_off = Wb + 1

    # Advisory cost estimate on TRUE channel counts.
    flops = 2 * N * Ho * Wo * 9 * (Cin * Cout + Cout * Cout)
    bytes_accessed = (xa.size * 2 + prepped["w1"].size * 2 + prepped["w2"].size * 2
                      + N * rows * Cout_p * 4)
    if project:
        flops += 2 * N * Ho * Wo * Cin * Cout
        bytes_accessed += prepped["w_sc"].size * 2

    kern = functools.partial(
        _fused_block_kernel,
        taps1=taps1, taps2=taps2, rows=rows, wb=Wb, wo=Wo,
        mid_off=mid_off, sc_r0=sc_r0, project=project)

    in_specs = [
        pl.BlockSpec((None, Ra, Ca), lambda i: (i, 0, 0)),
        pl.BlockSpec(prepped["w1"].shape, lambda i: (0, 0, 0)),
        pl.BlockSpec((1, Cout_p), lambda i: (0, 0)),
        pl.BlockSpec(prepped["w2"].shape, lambda i: (0, 0, 0)),
        pl.BlockSpec((1, Cout_p), lambda i: (0, 0)),
    ]
    args = [xa, prepped["w1"], prepped["b1"], prepped["w2"], prepped["b2"]]
    if project:
        in_specs += [pl.BlockSpec(prepped["w_sc"].shape, lambda i: (0, 0)),
                     pl.BlockSpec((1, Cout_p), lambda i: (0, 0))]
        args += [prepped["w_sc"], prepped["b_sc"]]

    out = pl.pallas_call(
        kern,
        out_shape=jax.ShapeDtypeStruct((N, rows, Cout_p), jnp.float32),
        grid=(N,),
        in_specs=in_specs,
        out_specs=pl.BlockSpec((None, rows, Cout_p), lambda i: (i, 0, 0)),
        scratch_shapes=[pltpu.VMEM((mid_rows, Cout_p), jnp.bfloat16),  # conv1->conv2 slab
                        pltpu.VMEM((rows, Cout_p), jnp.float32)],      # f32 accumulator
        compiler_params=pltpu.CompilerParams(
            dimension_semantics=("parallel",),
            # Raise for larger row tiles on v5e/v6e (128 MiB physical VMEM).
            vmem_limit_bytes=32 * 1024 * 1024),
        cost_estimate=pl.CostEstimate(flops=int(flops), transcendentals=0,
                                      bytes_accessed=int(bytes_accessed)),
    )(*args)

    y = out.reshape(N, Ho, Wb, Cout_p)[:, :, :Wo, :Cout]
    return jnp.transpose(y, (0, 3, 1, 2))                         # -> NCHW f32


# ------------------------ pure-JAX reference (check) ------------------------

def _bn_ref(y_nchw, gamma, beta, mean, var):
    sh = (1, -1, 1, 1)
    return (y_nchw - mean.reshape(sh)) / jnp.sqrt(var.reshape(sh) + EPS) \
        * gamma.reshape(sh) + beta.reshape(sh)


def _conv_ref(x_nchw, w, stride, pad):
    return jax.lax.conv_general_dilated(
        x_nchw, w, window_strides=(stride, stride),
        padding=((pad, pad), (pad, pad)),
        dimension_numbers=("NCHW", "OIHW", "NCHW"),
        precision=jax.lax.Precision.HIGHEST)


def basic_block_reference(x, params, stride):
    Cin, Cout = x.shape[1], params["w1"].shape[0]
    out = jax.nn.relu(_bn_ref(_conv_ref(x, params["w1"], stride, 1), *params["bn1"]))
    out = _bn_ref(_conv_ref(out, params["w2"], 1, 1), *params["bn2"])
    if stride != 1 or Cin != Cout:
        sc = _bn_ref(_conv_ref(x, params["w_sc"], stride, 0), *params["bn_sc"])
    else:
        sc = x
    return jax.nn.relu(out + sc)


# --------------------------------- main -------------------------------------

def _init_bn(key, c):
    k1, k2, k3, k4 = jax.random.split(key, 4)
    gamma = 1.0 + 0.1 * jax.random.normal(k1, (c,), jnp.float32)
    beta = 0.1 * jax.random.normal(k2, (c,), jnp.float32)
    mean = 0.1 * jax.random.normal(k3, (c,), jnp.float32)
    var = 0.5 + jnp.abs(jax.random.normal(k4, (c,), jnp.float32)) * 0.5
    return (gamma, beta, mean, var)


if __name__ == "__main__":
    # Downsampling BasicBlock: stride 2, Cin != Cout -> projection shortcut.
    N, Cin, H, W = 2, 16, 16, 16
    Cout, stride = 32, 2

    keys = jax.random.split(jax.random.PRNGKey(0), 8)
    params = {
        "w1": 0.1 * jax.random.normal(keys[0], (Cout, Cin, 3, 3), jnp.float32),
        "w2": 0.1 * jax.random.normal(keys[1], (Cout, Cout, 3, 3), jnp.float32),
        "w_sc": 0.1 * jax.random.normal(keys[2], (Cout, Cin, 1, 1), jnp.float32),
        "bn1": _init_bn(keys[3], Cout),
        "bn2": _init_bn(keys[4], Cout),
        "bn_sc": _init_bn(keys[5], Cout),
    }
    x = jax.random.normal(keys[6], (N, Cin, H, W), jnp.float32)

    prepped = prepare_block_params(params, stride)          # hoisted, once per param set
    y = basic_block_forward(x, prepped)
    jax.block_until_ready(y)
    y_ref = basic_block_reference(x, params, stride)
    assert y.shape == (N, Cout, H // stride, W // stride)
    assert jnp.allclose(y, y_ref, atol=5e-2, rtol=5e-2), \
        float(jnp.max(jnp.abs(y - y_ref)))

    # Identity-shortcut BasicBlock: stride 1, Cin == Cout.
    params_id = {
        "w1": 0.1 * jax.random.normal(keys[7], (Cin, Cin, 3, 3), jnp.float32),
        "w2": 0.1 * jax.random.normal(keys[0], (Cin, Cin, 3, 3), jnp.float32),
        "bn1": _init_bn(keys[1], Cin),
        "bn2": _init_bn(keys[2], Cin),
    }
    prepped_id = prepare_block_params(params_id, 1)
    y2 = basic_block_forward(x, prepped_id)
    jax.block_until_ready(y2)
    y2_ref = basic_block_reference(x, params_id, 1)
    assert y2.shape == (N, Cin, H, W)
    assert jnp.allclose(y2, y2_ref, atol=5e-2, rtol=5e-2), \
        float(jnp.max(jnp.abs(y2 - y2_ref)))

    print("KERNEL_OK")
</pallas_src>

<mosaic_0001>
module attributes {stable_mosaic.version = 11 : i64} {
  func.func @_fused_block_kernel(%arg0: i32, %arg1: memref<1x100x128xbf16, #tpu.memory_space<vmem>>, %arg2: memref<4x128x128xbf16, #tpu.memory_space<vmem>>, %arg3: memref<1x128xf32, #tpu.memory_space<vmem>>, %arg4: memref<9x128x128xbf16, #tpu.memory_space<vmem>>, %arg5: memref<1x128xf32, #tpu.memory_space<vmem>>, %arg6: memref<128x128xbf16, #tpu.memory_space<vmem>>, %arg7: memref<1x128xf32, #tpu.memory_space<vmem>>, %arg8: memref<1x80x128xf32, #tpu.memory_space<vmem>>, %arg9: memref<110x128xbf16, #tpu.memory_space<vmem>>, %arg10: memref<80x128xf32, #tpu.memory_space<vmem>>) attributes {dimension_semantics = [#tpu.dimension_semantics<parallel>], iteration_bounds = array<i64: 2>, scalar_prefetch = 0 : i64, scratch_operands = 2 : i64, tpu.core_type = #tpu.core_type<tc>, window_params = [{transform_indices = @transform_0, window_bounds = array<i64: 1, 100, 128>}, {pipeline_mode = #tpu.pipeline_mode<synchronous>, transform_indices = @transform_1, window_bounds = array<i64: 4, 128, 128>}, {pipeline_mode = #tpu.pipeline_mode<synchronous>, transform_indices = @transform_2, window_bounds = array<i64: 1, 128>}, {pipeline_mode = #tpu.pipeline_mode<synchronous>, transform_indices = @transform_3, window_bounds = array<i64: 9, 128, 128>}, {pipeline_mode = #tpu.pipeline_mode<synchronous>, transform_indices = @transform_4, window_bounds = array<i64: 1, 128>}, {pipeline_mode = #tpu.pipeline_mode<synchronous>, transform_indices = @transform_5, window_bounds = array<i64: 128, 128>}, {pipeline_mode = #tpu.pipeline_mode<synchronous>, transform_indices = @transform_6, window_bounds = array<i64: 1, 128>}, {transform_indices = @transform_7, window_bounds = array<i64: 1, 80, 128>}]} {
    %c0 = arith.constant 0 : index
    %c0_0 = arith.constant 0 : index
    %c0_1 = arith.constant 0 : index
    %0 = vector.load %arg1[%c0, %c0_0, %c0_1] : memref<1x100x128xbf16, #tpu.memory_space<vmem>>, vector<1x80x128xbf16>
    %1 = vector.shape_cast %0 : vector<1x80x128xbf16> to vector<80x128xbf16>
    %c0_2 = arith.constant 0 : index
    %c0_3 = arith.constant 0 : index
    %c0_4 = arith.constant 0 : index
    %2 = vector.load %arg2[%c0_2, %c0_3, %c0_4] : memref<4x128x128xbf16, #tpu.memory_space<vmem>>, vector<1x128x128xbf16>
    %3 = vector.shape_cast %2 : vector<1x128x128xbf16> to vector<128x128xbf16>
    %cst = arith.constant dense<0.000000e+00> : vector<80x128xf32>
    %4 = tpu.matmul %1, %3, %cst {dimension_numbers = #tpu.dot_dimension_numbers<[1], [0], [0], [1], [0, 0, 1, 1], [], []>} : vector<80x128xbf16>, vector<128x128xbf16>, vector<80x128xf32> -> vector<80x128xf32>
    %c0_5 = arith.constant 0 : index
    %c0_6 = arith.constant 0 : index
    %5 = vector.load %arg10[%c0_5, %c0_6] : memref<80x128xf32, #tpu.memory_space<vmem>>, vector<80x128xf32>
    tpu.vector_store %arg10[%c0_5, %c0_6], %4 {strides = array<i32>} : memref<80x128xf32, #tpu.memory_space<vmem>>, vector<80x128xf32>,
    %c0_7 = arith.constant 0 : index
    %c1 = arith.constant 1 : index
    %c0_8 = arith.constant 0 : index
    %6 = vector.load %arg1[%c0_7, %c1, %c0_8] : memref<1x100x128xbf16, #tpu.memory_space<vmem>>, vector<1x80x128xbf16>
    %7 = vector.shape_cast %6 : vector<1x80x128xbf16> to vector<80x128xbf16>
    %c1_9 = arith.constant 1 : index
    %c0_10 = arith.constant 0 : index
    %c0_11 = arith.constant 0 : index
    %8 = vector.load %arg2[%c1_9, %c0_10, %c0_11] : memref<4x128x128xbf16, #tpu.memory_space<vmem>>, vector<1x128x128xbf16>
    %9 = vector.shape_cast %8 : vector<1x128x128xbf16> to vector<128x128xbf16>
    %cst_12 = arith.constant dense<0.000000e+00> : vector<80x128xf32>
    %10 = tpu.matmul %7, %9, %cst_12 {dimension_numbers = #tpu.dot_dimension_numbers<[1], [0], [0], [1], [0, 0, 1, 1], [], []>} : vector<80x128xbf16>, vector<128x128xbf16>, vector<80x128xf32> -> vector<80x128xf32>
    %c0_13 = arith.constant 0 : index
    %c0_14 = arith.constant 0 : index
    %11 = vector.load %arg10[%c0_13, %c0_14] : memref<80x128xf32, #tpu.memory_space<vmem>>, vector<80x128xf32>
    %12 = arith.addf %11, %10 : vector<80x128xf32>
    %c0_15 = arith.constant 0 : index
    %c0_16 = arith.constant 0 : index
    %13 = vector.load %arg10[%c0_15, %c0_16] : memref<80x128xf32, #tpu.memory_space<vmem>>, vector<80x128xf32>
    tpu.vector_store %arg10[%c0_15, %c0_16], %12 {strides = array<i32>} : memref<80x128xf32, #tpu.memory_space<vmem>>, vector<80x128xf32>,
    %c0_17 = arith.constant 0 : index
    %c10 = arith.constant 10 : index
    %c0_18 = arith.constant 0 : index
    %14 = vector.load %arg1[%c0_17, %c10, %c0_18] : memref<1x100x128xbf16, #tpu.memory_space<vmem>>, vector<1x80x128xbf16>
    %15 = vector.shape_cast %14 : vector<1x80x128xbf16> to vector<80x128xbf16>
    %c2 = arith.constant 2 : index
    %c0_19 = arith.constant 0 : index
    %c0_20 = arith.constant 0 : index
    %16 = vector.load %arg2[%c2, %c0_19, %c0_20] : memref<4x128x128xbf16, #tpu.memory_space<vmem>>, vector<1x128x128xbf16>
    %17 = vector.shape_cast %16 : vector<1x128x128xbf16> to vector<128x128xbf16>
    %cst_21 = arith.constant dense<0.000000e+00> : vector<80x128xf32>
    %18 = tpu.matmul %15, %17, %cst_21 {dimension_numbers = #tpu.dot_dimension_numbers<[1], [0], [0], [1], [0, 0, 1, 1], [], []>} : vector<80x128xbf16>, vector<128x128xbf16>, vector<80x128xf32> -> vector<80x128xf32>
    %c0_22 = arith.constant 0 : index
    %c0_23 = arith.constant 0 : index
    %19 = vector.load %arg10[%c0_22, %c0_23] : memref<80x128xf32, #tpu.memory_space<vmem>>, vector<80x128xf32>
    %20 = arith.addf %19, %18 : vector<80x128xf32>
    %c0_24 = arith.constant 0 : index
    %c0_25 = arith.constant 0 : index
    %21 = vector.load %arg10[%c0_24, %c0_25] : memref<80x128xf32, #tpu.memory_space<vmem>>, vector<80x128xf32>
    tpu.vector_store %arg10[%c0_24, %c0_25], %20 {strides = array<i32>} : memref<80x128xf32, #tpu.memory_space<vmem>>, vector<80x128xf32>,
    %c0_26 = arith.constant 0 : index
    %c11 = arith.constant 11 : index
    %c0_27 = arith.constant 0 : index
    %22 = vector.load %arg1[%c0_26, %c11, %c0_27] : memref<1x100x128xbf16, #tpu.memory_space<vmem>>, vector<1x80x128xbf16>
    %23 = vector.shape_cast %22 : vector<1x80x128xbf16> to vector<80x128xbf16>
    %c3 = arith.constant 3 : index
    %c0_28 = arith.constant 0 : index
    %c0_29 = arith.constant 0 : index
    %24 = vector.load %arg2[%c3, %c0_28, %c0_29] : memref<4x128x128xbf16, #tpu.memory_space<vmem>>, vector<1x128x128xbf16>
    %25 = vector.shape_cast %24 : vector<1x128x128xbf16> to vector<128x128xbf16>
    %cst_30 = arith.constant dense<0.000000e+00> : vector<80x128xf32>
    %26 = tpu.matmul %23, %25, %cst_30 {dimension_numbers = #tpu.dot_dimension_numbers<[1], [0], [0], [1], [0, 0, 1, 1], [], []>} : vector<80x128xbf16>, vector<128x128xbf16>, vector<80x128xf32> -> vector<80x128xf32>
    %c0_31 = arith.constant 0 : index
    %c0_32 = arith.constant 0 : index
    %27 = vector.load %arg10[%c0_31, %c0_32] : memref<80x128xf32, #tpu.memory_space<vmem>>, vector<80x128xf32>
    %28 = arith.addf %27, %26 : vector<80x128xf32>
    %c0_33 = arith.constant 0 : index
    %c0_34 = arith.constant 0 : index
    %29 = vector.load %arg10[%c0_33, %c0_34] : memref<80x128xf32, #tpu.memory_space<vmem>>, vector<80x128xf32>
    tpu.vector_store %arg10[%c0_33, %c0_34], %28 {strides = array<i32>} : memref<80x128xf32, #tpu.memory_space<vmem>>, vector<80x128xf32>,
    %c0_35 = arith.constant 0 : index
    %c0_36 = arith.constant 0 : index
    %30 = vector.load %arg10[%c0_35, %c0_36] : memref<80x128xf32, #tpu.memory_space<vmem>>, vector<80x128xf32>
    %c0_37 = arith.constant 0 : index
    %c0_38 = arith.constant 0 : index
    %31 = vector.load %arg3[%c0_37, %c0_38] : memref<1x128xf32, #tpu.memory_space<vmem>>, vector<1x128xf32>
    %32 = vector.broadcast %31 : vector<1x128xf32> to vector<80x128xf32>
    %33 = arith.addf %30, %32 : vector<80x128xf32>
    %cst_39 = arith.constant 0.000000e+00 : f32
    %34 = vector.broadcast %cst_39 : f32 to vector<80x128xf32>
    %35 = arith.maximumf %33, %34 : vector<80x128xf32>
    %36 = tpu.iota {dimensions = array<i32: 0>} : vector<80x128xi32>
    %c10_i32 = arith.constant 10 : i32
    %c0_i32 = arith.constant 0 : i32
    %37 = arith.cmpi eq, %c10_i32, %c0_i32 : i32
    %c1_i32 = arith.constant 1 : i32
    %38 = arith.select %37, %c1_i32, %c10_i32 : i32
    %39 = vector.broadcast %38 : i32 to vector<80x128xi32>
    %40 = arith.remsi %36, %39 : vector<80x128xi32>
    %c0_i32_40 = arith.constant 0 : i32
    %41 = vector.broadcast %c0_i32_40 : i32 to vector<80x128xi32>
    %42 = arith.cmpi ne, %40, %41 : vector<80x128xi32>
    %c0_i32_41 = arith.constant 0 : i32
    %43 = vector.broadcast %c0_i32_41 : i32 to vector<80x128xi32>
    %44 = arith.cmpi slt, %40, %43 : vector<80x128xi32>
    %c0_i32_42 = arith.constant 0 : i32
    %45 = arith.cmpi slt, %38, %c0_i32_42 : i32
    %46 = vector.broadcast %45 : i1 to vector<80x128xi1>
    %47 = vector.broadcast %46 : vector<80x128xi1> to vector<80x128xi1>
    %48 = arith.xori %44, %47 : vector<80x128xi1>
    %49 = arith.andi %48, %42 : vector<80x128xi1>
    %50 = vector.broadcast %38 : i32 to vector<80x128xi32>
    %51 = arith.addi %40, %50 : vector<80x128xi32>
    %52 = arith.select %49, %51, %40 : vector<80x128xi1>, vector<80x128xi32>
    %c8_i32 = arith.constant 8 : i32
    %53 = vector.broadcast %c8_i32 : i32 to vector<80x128xi32>
    %54 = arith.cmpi slt, %52, %53 : vector<80x128xi32>
    %cst_43 = arith.constant 0.000000e+00 : f32
    %55 = vector.broadcast %cst_43 : f32 to vector<80x128xf32>
    %56 = arith.select %54, %35, %55 : vector<80x128xi1>, vector<80x128xf32>
    %cst_44 = arith.constant 0.000000e+00 : bf16
    %57 = vector.broadcast %cst_44 : bf16 to vector<110x128xbf16>
    %c0_45 = arith.constant 0 : index
    %c0_46 = arith.constant 0 : index
    %58 = vector.load %arg9[%c0_45, %c0_46] : memref<110x128xbf16, #tpu.memory_space<vmem>>, vector<110x128xbf16>
    tpu.vector_store %arg9[%c0_45, %c0_46], %57 {strides = array<i32>} : memref<110x128xbf16, #tpu.memory_space<vmem>>, vector<110x128xbf16>,
    %59 = arith.truncf %56 : vector<80x128xf32> to vector<80x128xbf16>
    %c11_47 = arith.constant 11 : index
    %c0_48 = arith.constant 0 : index
    %60 = vector.load %arg9[%c11_47, %c0_48] : memref<110x128xbf16, #tpu.memory_space<vmem>>, vector<80x128xbf16>
    tpu.vector_store %arg9[%c11_47, %c0_48], %59 {strides = array<i32>} : memref<110x128xbf16, #tpu.memory_space<vmem>>, vector<80x128xbf16>,
    %c0_49 = arith.constant 0 : index
    %c0_50 = arith.constant 0 : index
    %61 = vector.load %arg9[%c0_49, %c0_50] : memref<110x128xbf16, #tpu.memory_space<vmem>>, vector<80x128xbf16>
    %c0_51 = arith.constant 0 : index
    %c0_52 = arith.constant 0 : index
    %c0_53 = arith.constant 0 : index
    %62 = vector.load %arg4[%c0_51, %c0_52, %c0_53] : memref<9x128x128xbf16, #tpu.memory_space<vmem>>, vector<1x128x128xbf16>
    %63 = vector.shape_cast %62 : vector<1x128x128xbf16> to vector<128x128xbf16>
    %cst_54 = arith.constant dense<0.000000e+00> : vector<80x128xf32>
    %64 = tpu.matmul %61, %63, %cst_54 {dimension_numbers = #tpu.dot_dimension_numbers<[1], [0], [0], [1], [0, 0, 1, 1], [], []>} : vector<80x128xbf16>, vector<128x128xbf16>, vector<80x128xf32> -> vector<80x128xf32>
    %c0_55 = arith.constant 0 : index
    %c0_56 = arith.constant 0 : index
    %65 = vector.load %arg10[%c0_55, %c0_56] : memref<80x128xf32, #tpu.memory_space<vmem>>, vector<80x128xf32>
    tpu.vector_store %arg10[%c0_55, %c0_56], %64 {strides = array<i32>} : memref<80x128xf32, #tpu.memory_space<vmem>>, vector<80x128xf32>,
    %c1_57 = arith.constant 1 : index
    %c0_58 = arith.constant 0 : index
    %66 = vector.load %arg9[%c1_57, %c0_58] : memref<110x128xbf16, #tpu.memory_space<vmem>>, vector<80x128xbf16>
    %c1_59 = arith.constant 1 : index
    %c0_60 = arith.constant 0 : index
    %c0_61 = arith.constant 0 : index
    %67 = vector.load %arg4[%c1_59, %c0_60, %c0_61] : memref<9x128x128xbf16, #tpu.memory_space<vmem>>, vector<1x128x128xbf16>
    %68 = vector.shape_cast %67 : vector<1x128x128xbf16> to vector<128x128xbf16>
    %cst_62 = arith.constant dense<0.000000e+00> : vector<80x128xf32>
    %69 = tpu.matmul %66, %68, %cst_62 {dimension_numbers = #tpu.dot_dimension_numbers<[1], [0], [0], [1], [0, 0, 1, 1], [], []>} : vector<80x128xbf16>, vector<128x128xbf16>, vector<80x128xf32> -> vector<80x128xf32>
    %c0_63 = arith.constant 0 : index
    %c0_64 = arith.constant 0 : index
    %70 = vector.load %arg10[%c0_63, %c0_64] : memref<80x128xf32, #tpu.memory_space<vmem>>, vector<80x128xf32>
    %71 = arith.addf %70, %69 : vector<80x128xf32>
    %c0_65 = arith.constant 0 : index
    %c0_66 = arith.constant 0 : index
    %72 = vector.load %arg10[%c0_65, %c0_66] : memref<80x128xf32, #tpu.memory_space<vmem>>, vector<80x128xf32>
    tpu.vector_store %arg10[%c0_65, %c0_66], %71 {strides = array<i32>} : memref<80x128xf32, #tpu.memory_space<vmem>>, vector<80x128xf32>,
    %c2_67 = arith.constant 2 : index
    %c0_68 = arith.constant 0 : index
    %73 = vector.load %arg9[%c2_67, %c0_68] : memref<110x128xbf16, #tpu.memory_space<vmem>>, vector<80x128xbf16>
    %c2_69 = arith.constant 2 : index
    %c0_70 = arith.constant 0 : index
    %c0_71 = arith.constant 0 : index
    %74 = vector.load %arg4[%c2_69, %c0_70, %c0_71] : memref<9x128x128xbf16, #tpu.memory_space<vmem>>, vector<1x128x128xbf16>
    %75 = vector.shape_cast %74 : vector<1x128x128xbf16> to vector<128x128xbf16>
    %cst_72 = arith.constant dense<0.000000e+00> : vector<80x128xf32>
    %76 = tpu.matmul %73, %75, %cst_72 {dimension_numbers = #tpu.dot_dimension_numbers<[1], [0], [0], [1], [0, 0, 1, 1], [], []>} : vector<80x128xbf16>, vector<128x128xbf16>, vector<80x128xf32> -> vector<80x128xf32>
    %c0_73 = arith.constant 0 : index
    %c0_74 = arith.constant 0 : index
    %77 = vector.load %arg10[%c0_73, %c0_74] : memref<80x128xf32, #tpu.memory_space<vmem>>, vector<80x128xf32>
    %78 = arith.addf %77, %76 : vector<80x128xf32>
    %c0_75 = arith.constant 0 : index
    %c0_76 = arith.constant 0 : index
    %79 = vector.load %arg10[%c0_75, %c0_76] : memref<80x128xf32, #tpu.memory_space<vmem>>, vector<80x128xf32>
    tpu.vector_store %arg10[%c0_75, %c0_76], %78 {strides = array<i32>} : memref<80x128xf32, #tpu.memory_space<vmem>>, vector<80x128xf32>,
    %c10_77 = arith.constant 10 : index
    %c0_78 = arith.constant 0 : index
    %80 = vector.load %arg9[%c10_77, %c0_78] : memref<110x128xbf16, #tpu.memory_space<vmem>>, vector<80x128xbf16>
    %c3_79 = arith.constant 3 : index
    %c0_80 = arith.constant 0 : index
    %c0_81 = arith.constant 0 : index
    %81 = vector.load %arg4[%c3_79, %c0_80, %c0_81] : memref<9x128x128xbf16, #tpu.memory_space<vmem>>, vector<1x128x128xbf16>
    %82 = vector.shape_cast %81 : vector<1x128x128xbf16> to vector<128x128xbf16>
    %cst_82 = arith.constant dense<0.000000e+00> : vector<80x128xf32>
    %83 = tpu.matmul %80, %82, %cst_82 {dimension_numbers = #tpu.dot_dimension_numbers<[1], [0], [0], [1], [0, 0, 1, 1], [], []>} : vector<80x128xbf16>, vector<128x128xbf16>, vector<80x128xf32> -> vector<80x128xf32>
    %c0_83 = arith.constant 0 : index
    %c0_84 = arith.constant 0 : index
    %84 = vector.load %arg10[%c0_83, %c0_84] : memref<80x128xf32, #tpu.memory_space<vmem>>, vector<80x128xf32>
    %85 = arith.addf %84, %83 : vector<80x128xf32>
    %c0_85 = arith.constant 0 : index
    %c0_86 = arith.constant 0 : index
    %86 = vector.load %arg10[%c0_85, %c0_86] : memref<80x128xf32, #tpu.memory_space<vmem>>, vector<80x128xf32>
    tpu.vector_store %arg10[%c0_85, %c0_86], %85 {strides = array<i32>} : memref<80x128xf32, #tpu.memory_space<vmem>>, vector<80x128xf32>,
    %c11_87 = arith.constant 11 : index
    %c0_88 = arith.constant 0 : index
    %87 = vector.load %arg9[%c11_87, %c0_88] : memref<110x128xbf16, #tpu.memory_space<vmem>>, vector<80x128xbf16>
    %c4 = arith.constant 4 : index
    %c0_89 = arith.constant 0 : index
    %c0_90 = arith.constant 0 : index
    %88 = vector.load %arg4[%c4, %c0_89, %c0_90] : memref<9x128x128xbf16, #tpu.memory_space<vmem>>, vector<1x128x128xbf16>
    %89 = vector.shape_cast %88 : vector<1x128x128xbf16> to vector<128x128xbf16>
    %cst_91 = arith.constant dense<0.000000e+00> : vector<80x128xf32>
    %90 = tpu.matmul %87, %89, %cst_91 {dimension_numbers = #tpu.dot_dimension_numbers<[1], [0], [0], [1], [0, 0, 1, 1], [], []>} : vector<80x128xbf16>, vector<128x128xbf16>, vector<80x128xf32> -> vector<80x128xf32>
    %c0_92 = arith.constant 0 : index
    %c0_93 = arith.constant 0 : index
    %91 = vector.load %arg10[%c0_92, %c0_93] : memref<80x128xf32, #tpu.memory_space<vmem>>, vector<80x128xf32>
    %92 = arith.addf %91, %90 : vector<80x128xf32>
    %c0_94 = arith.constant 0 : index
    %c0_95 = arith.constant 0 : index
    %93 = vector.load %arg10[%c0_94, %c0_95] : memref<80x128xf32, #tpu.memory_space<vmem>>, vector<80x128xf32>
    tpu.vector_store %arg10[%c0_94, %c0_95], %92 {strides = array<i32>} : memref<80x128xf32, #tpu.memory_space<vmem>>, vector<80x128xf32>,
    %c12 = arith.constant 12 : index
    %c0_96 = arith.constant 0 : index
    %94 = vector.load %arg9[%c12, %c0_96] : memref<110x128xbf16, #tpu.memory_space<vmem>>, vector<80x128xbf16>
    %c5 = arith.constant 5 : index
    %c0_97 = arith.constant 0 : index
    %c0_98 = arith.constant 0 : index
    %95 = vector.load %arg4[%c5, %c0_97, %c0_98] : memref<9x128x128xbf16, #tpu.memory_space<vmem>>, vector<1x128x128xbf16>
    %96 = vector.shape_cast %95 : vector<1x128x128xbf16> to vector<128x128xbf16>
    %cst_99 = arith.constant dense<0.000000e+00> : vector<80x128xf32>
    %97 = tpu.matmul %94, %96, %cst_99 {dimension_numbers = #tpu.dot_dimension_numbers<[1], [0], [0], [1], [0, 0, 1, 1], [], []>} : vector<80x128xbf16>, vector<128x128xbf16>, vector<80x128xf32> -> vector<80x128xf32>
    %c0_100 = arith.constant 0 : index
    %c0_101 = arith.constant 0 : index
    %98 = vector.load %arg10[%c0_100, %c0_101] : memref<80x128xf32, #tpu.memory_space<vmem>>, vector<80x128xf32>
    %99 = arith.addf %98, %97 : vector<80x128xf32>
    %c0_102 = arith.constant 0 : index
    %c0_103 = arith.constant 0 : index
    %100 = vector.load %arg10[%c0_102, %c0_103] : memref<80x128xf32, #tpu.memory_space<vmem>>, vector<80x128xf32>
    tpu.vector_store %arg10[%c0_102, %c0_103], %99 {strides = array<i32>} : memref<80x128xf32, #tpu.memory_space<vmem>>, vector<80x128xf32>,
    %c20 = arith.constant 20 : index
    %c0_104 = arith.constant 0 : index
    %101 = vector.load %arg9[%c20, %c0_104] : memref<110x128xbf16, #tpu.memory_space<vmem>>, vector<80x128xbf16>
    %c6 = arith.constant 6 : index
    %c0_105 = arith.constant 0 : index
    %c0_106 = arith.constant 0 : index
    %102 = vector.load %arg4[%c6, %c0_105, %c0_106] : memref<9x128x128xbf16, #tpu.memory_space<vmem>>, vector<1x128x128xbf16>
    %103 = vector.shape_cast %102 : vector<1x128x128xbf16> to vector<128x128xbf16>
    %cst_107 = arith.constant dense<0.000000e+00> : vector<80x128xf32>
    %104 = tpu.matmul %101, %103, %cst_107 {dimension_numbers = #tpu.dot_dimension_numbers<[1], [0], [0], [1], [0, 0, 1, 1], [], []>} : vector<80x128xbf16>, vector<128x128xbf16>, vector<80x128xf32> -> vector<80x128xf32>
    %c0_108 = arith.constant 0 : index
    %c0_109 = arith.constant 0 : index
    %105 = vector.load %arg10[%c0_108, %c0_109] : memref<80x128xf32, #tpu.memory_space<vmem>>, vector<80x128xf32>
    %106 = arith.addf %105, %104 : vector<80x128xf32>
    %c0_110 = arith.constant 0 : index
    %c0_111 = arith.constant 0 : index
    %107 = vector.load %arg10[%c0_110, %c0_111] : memref<80x128xf32, #tpu.memory_space<vmem>>, vector<80x128xf32>
    tpu.vector_store %arg10[%c0_110, %c0_111], %106 {strides = array<i32>} : memref<80x128xf32, #tpu.memory_space<vmem>>, vector<80x128xf32>,
    %c21 = arith.constant 21 : index
    %c0_112 = arith.constant 0 : index
    %108 = vector.load %arg9[%c21, %c0_112] : memref<110x128xbf16, #tpu.memory_space<vmem>>, vector<80x128xbf16>
    %c7 = arith.constant 7 : index
    %c0_113 = arith.constant 0 : index
    %c0_114 = arith.constant 0 : index
    %109 = vector.load %arg4[%c7, %c0_113, %c0_114] : memref<9x128x128xbf16, #tpu.memory_space<vmem>>, vector<1x128x128xbf16>
    %110 = vector.shape_cast %109 : vector<1x128x128xbf16> to vector<128x128xbf16>
    %cst_115 = arith.constant dense<0.000000e+00> : vector<80x128xf32>
    %111 = tpu.matmul %108, %110, %cst_115 {dimension_numbers = #tpu.dot_dimension_numbers<[1], [0], [0], [1], [0, 0, 1, 1], [], []>} : vector<80x128xbf16>, vector<128x128xbf16>, vector<80x128xf32> -> vector<80x128xf32>
    %c0_116 = arith.constant 0 : index
    %c0_117 = arith.constant 0 : index
    %112 = vector.load %arg10[%c0_116, %c0_117] : memref<80x128xf32, #tpu.memory_space<vmem>>, vector<80x128xf32>
    %113 = arith.addf %112, %111 : vector<80x128xf32>
    %c0_118 = arith.constant 0 : index
    %c0_119 = arith.constant 0 : index
    %114 = vector.load %arg10[%c0_118, %c0_119] : memref<80x128xf32, #tpu.memory_space<vmem>>, vector<80x128xf32>
    tpu.vector_store %arg10[%c0_118, %c0_119], %113 {strides = array<i32>} : memref<80x128xf32, #tpu.memory_space<vmem>>, vector<80x128xf32>,
    %c22 = arith.constant 22 : index
    %c0_120 = arith.constant 0 : index
    %115 = vector.load %arg9[%c22, %c0_120] : memref<110x128xbf16, #tpu.memory_space<vmem>>, vector<80x128xbf16>
    %c8 = arith.constant 8 : index
    %c0_121 = arith.constant 0 : index
    %c0_122 = arith.constant 0 : index
    %116 = vector.load %arg4[%c8, %c0_121, %c0_122] : memref<9x128x128xbf16, #tpu.memory_space<vmem>>, vector<1x128x128xbf16>
    %117 = vector.shape_cast %116 : vector<1x128x128xbf16> to vector<128x128xbf16>
    %cst_123 = arith.constant dense<0.000000e+00> : vector<80x128xf32>
    %118 = tpu.matmul %115, %117, %cst_123 {dimension_numbers = #tpu.dot_dimension_numbers<[1], [0], [0], [1], [0, 0, 1, 1], [], []>} : vector<80x128xbf16>, vector<128x128xbf16>, vector<80x128xf32> -> vector<80x128xf32>
    %c0_124 = arith.constant 0 : index
    %c0_125 = arith.constant 0 : index
    %119 = vector.load %arg10[%c0_124, %c0_125] : memref<80x128xf32, #tpu.memory_space<vmem>>, vector<80x128xf32>
    %120 = arith.addf %119, %118 : vector<80x128xf32>
    %c0_126 = arith.constant 0 : index
    %c0_127 = arith.constant 0 : index
    %121 = vector.load %arg10[%c0_126, %c0_127] : memref<80x128xf32, #tpu.memory_space<vmem>>, vector<80x128xf32>
    tpu.vector_store %arg10[%c0_126, %c0_127], %120 {strides = array<i32>} : memref<80x128xf32, #tpu.memory_space<vmem>>, vector<80x128xf32>,
    %c0_128 = arith.constant 0 : index
    %c0_129 = arith.constant 0 : index
    %122 = vector.load %arg10[%c0_128, %c0_129] : memref<80x128xf32, #tpu.memory_space<vmem>>, vector<80x128xf32>
    %c0_130 = arith.constant 0 : index
    %c0_131 = arith.constant 0 : index
    %123 = vector.load %arg5[%c0_130, %c0_131] : memref<1x128xf32, #tpu.memory_space<vmem>>, vector<1x128xf32>
    %124 = vector.broadcast %123 : vector<1x128xf32> to vector<80x128xf32>
    %125 = arith.addf %122, %124 : vector<80x128xf32>
    %c0_132 = arith.constant 0 : index
    %c0_133 = arith.constant 0 : index
    %c0_134 = arith.constant 0 : index
    %126 = vector.load %arg1[%c0_132, %c0_133, %c0_134] : memref<1x100x128xbf16, #tpu.memory_space<vmem>>, vector<1x80x128xbf16>
    %127 = vector.shape_cast %126 : vector<1x80x128xbf16> to vector<80x128xbf16>
    %c0_135 = arith.constant 0 : index
    %c0_136 = arith.constant 0 : index
    %128 = vector.load %arg6[%c0_135, %c0_136] : memref<128x128xbf16, #tpu.memory_space<vmem>>, vector<128x128xbf16>
    %cst_137 = arith.constant dense<0.000000e+00> : vector<80x128xf32>
    %129 = tpu.matmul %127, %128, %cst_137 {dimension_numbers = #tpu.dot_dimension_numbers<[1], [0], [0], [1], [0, 0, 1, 1], [], []>} : vector<80x128xbf16>, vector<128x128xbf16>, vector<80x128xf32> -> vector<80x128xf32>
    %130 = arith.addf %125, %129 : vector<80x128xf32>
    %c0_138 = arith.constant 0 : index
    %c0_139 = arith.constant 0 : index
    %131 = vector.load %arg7[%c0_138, %c0_139] : memref<1x128xf32, #tpu.memory_space<vmem>>, vector<1x128xf32>
    %132 = vector.broadcast %131 : vector<1x128xf32> to vector<80x128xf32>
    %133 = arith.addf %130, %132 : vector<80x128xf32>
    %cst_140 = arith.constant 0.000000e+00 : f32
    %134 = vector.broadcast %cst_140 : f32 to vector<80x128xf32>
    %135 = arith.maximumf %133, %134 : vector<80x128xf32>
    %c0_141 = arith.constant 0 : index
    %c0_142 = arith.constant 0 : index
    %c0_143 = arith.constant 0 : index
    %136 = vector.load %arg8[%c0_141, %c0_142, %c0_143] : memref<1x80x128xf32, #tpu.memory_space<vmem>>, vector<1x80x128xf32>
    %137 = vector.shape_cast %136 : vector<1x80x128xf32> to vector<80x128xf32>
    %138 = vector.shape_cast %135 : vector<80x128xf32> to vector<1x80x128xf32>
    tpu.vector_store %arg8[%c0_141, %c0_142, %c0_143], %138 {strides = array<i32>} : memref<1x80x128xf32, #tpu.memory_space<vmem>>, vector<1x80x128xf32>,
    return
  }
  func.func @transform_0(%arg0: i32) -> (i32, i32, i32) {
    %c0_i32 = arith.constant 0 : i32
    %c0_i32_0 = arith.constant 0 : i32
    %c0_i32_1 = arith.constant 0 : i32
    return %arg0, %c0_i32, %c0_i32_0 : i32, i32, i32
  }
  func.func @transform_1(%arg0: i32) -> (i32, i32, i32) {
    %c0_i32 = arith.constant 0 : i32
    %c0_i32_0 = arith.constant 0 : i32
    %c0_i32_1 = arith.constant 0 : i32
    %c0_i32_2 = arith.constant 0 : i32
    return %c0_i32, %c0_i32_0, %c0_i32_1 : i32, i32, i32
  }
  func.func @transform_2(%arg0: i32) -> (i32, i32) {
    %c0_i32 = arith.constant 0 : i32
    %c0_i32_0 = arith.constant 0 : i32
    %c0_i32_1 = arith.constant 0 : i32
    return %c0_i32, %c0_i32_0 : i32, i32
  }
  func.func @transform_3(%arg0: i32) -> (i32, i32, i32) {
    %c0_i32 = arith.constant 0 : i32
    %c0_i32_0 = arith.constant 0 : i32
    %c0_i32_1 = arith.constant 0 : i32
    %c0_i32_2 = arith.constant 0 : i32
    return %c0_i32, %c0_i32_0, %c0_i32_1 : i32, i32, i32
  }
  func.func @transform_4(%arg0: i32) -> (i32, i32) {
    %c0_i32 = arith.constant 0 : i32
    %c0_i32_0 = arith.constant 0 : i32
    %c0_i32_1 = arith.constant 0 : i32
    return %c0_i32, %c0_i32_0 : i32, i32
  }
  func.func @transform_5(%arg0: i32) -> (i32, i32) {
    %c0_i32 = arith.constant 0 : i32
    %c0_i32_0 = arith.constant 0 : i32
    %c0_i32_1 = arith.constant 0 : i32
    return %c0_i32, %c0_i32_0 : i32, i32
  }
  func.func @transform_6(%arg0: i32) -> (i32, i32) {
    %c0_i32 = arith.constant 0 : i32
    %c0_i32_0 = arith.constant 0 : i32
    %c0_i32_1 = arith.constant 0 : i32
    return %c0_i32, %c0_i32_0 : i32, i32
  }
  func.func @transform_7(%arg0: i32) -> (i32, i32, i32) {
    %c0_i32 = arith.constant 0 : i32
    %c0_i32_0 = arith.constant 0 : i32
    %c0_i32_1 = arith.constant 0 : i32
    return %arg0, %c0_i32, %c0_i32_0 : i32, i32, i32
  }
}

</mosaic_0001>

<llo_original>
// kernel: tpu_custom_call.1
$region0: #{tpu_custom_call.1}
  #allocation0 [shape = 'u32[]', space=smem, size = 0x4, offset = 0x4, fixed_abs, tag = 'smem constant byte address 0x4 - core index']
  #allocation1 [shape = 'u32[72,128]{1,0:T(1,128)}', space=vmem, size = 0x9000, scoped, tag = 'internal scratch']
  #allocation2 [shape = 'bf16[110,128]{1,0:T(8,128)(2,1)}', space=vmem, size = 0x7000, scoped, tag = 'scratch operand']
  #allocation3 [shape = 'f32[80,128]{1,0:T(8,128)}', space=vmem, size = 0xa000, scoped, tag = 'scratch operand']
  %s0 = inlined_call_operand.vmem [shape: bf16[2,100,128], index: 0, kind: input, shape index: {}]
  %s1 = inlined_call_operand.hbm [shape: bf16[4,128,128], index: 1, kind: input, shape index: {}]
  %s2 = inlined_call_operand.vmem [shape: f32[1,128], index: 2, kind: input, shape index: {}]
  %s3 = inlined_call_operand.hbm [shape: bf16[9,128,128], index: 3, kind: input, shape index: {}]
  %s4 = inlined_call_operand.vmem [shape: f32[1,128], index: 4, kind: input, shape index: {}]
  %s5 = inlined_call_operand.vmem [shape: bf16[128,128], index: 5, kind: input, shape index: {}]
  %s6 = inlined_call_operand.vmem [shape: f32[1,128], index: 6, kind: input, shape index: {}]
  %s7 = inlined_call_operand.hbm [shape: f32[2,80,128], index: 7, kind: output, shape index: {}]
  %s8 = sld [smem:[#allocation0]]
  $region69: #{tpu_custom_call.1} parent=0
    _
  %s10 = ssub.s32 1, %s8
  %s11 = scalar_select 0, %s10, %s8
  $region1: #{tpu_custom_call.1} parent=0
    #allocation4 [shape = 'u8[131072]{0}', space=vmem, size = 0x20000, scoped, tag = 'input window, operand 1, single buffered']
    #allocation5 [shape = 's32[2]{0}', space=sflag, size = 0x8, scoped, tag = 'scoped memory for tpu_custom_call.1']
    #allocation6 [shape = 's32[2]{0}', space=sflag, size = 0x8, scoped, tag = 'scoped memory for tpu_custom_call.1']
    #allocation7 [shape = 'u8[294912]{0}', space=vmem, size = 0x48000, scoped, tag = 'input window, operand 3, single buffered']
    #allocation8 [shape = 's32[1]{0}', space=sflag, size = 0x4, scoped, tag = 'scoped memory for tpu_custom_call.1']
    #allocation9 [shape = 'u8[81920]{0}', space=vmem, size = 0x14000, scoped, tag = 'output window, operand 0']
    %12 = vsyncpa [#allocation5], 0
    %13 = vsyncpa [#allocation8], 0
    %14 = vsyncpa [#allocation6], 0
    %s15 = scalar_lea.sflag [#allocation6], 1
    %16 = vsyncpa %s15, 0
    loop: start=0, step=1, limit=4
    $region2: #{tpu_custom_call.1} parent=1 // loop_pre_header
      _
    $region3: #{tpu_custom_call.1} parent=1 // loop_header
      %s18 = sphi 0, %s22
      %p19 = scmp.ge.s32.totalorder %s18, 4
      %s28 = sphi 0, %s30
      %s31 = sphi 0, %s28
      %s32 = sphi 0, %s31
      %s48 = sphi 0, %s32
      %s52 = sphi 0, %s52
      %s54 = sphi 0, %s52
      %s55 = sphi 0, %s54
      %s69 = sphi 0, %s55
      %s73 = sphi 0, %s73
      %s75 = sphi 0, %s73
      %s76 = sphi 0, %s75
      %s90 = sphi 0, %s76
      %s94 = sphi 0, %s94
      %s96 = sphi 0, %s94
      %s97 = sphi 0, %s96
      %s111 = sphi 0, %s97
      %s115 = sphi 0, %s115
      %s117 = sphi 0, %s115
      %s118 = sphi 0, %s117
      %s132 = sphi 0, %s118
      %s136 = sphi 0, %s136
      %s138 = sphi 0, %s136
      %s139 = sphi 0, %s138
      %s153 = sphi 0, %s139
      %s157 = sphi 0, %s157
      %s159 = sphi 0, %s157
      %s160 = sphi 0, %s159
      %s174 = sphi 0, %s160
      %s180 = sphi 0, %s182
      %s183 = sphi 0, %s180
      %s184 = sphi 0, %s183
      %s200 = sphi 0, %s184
    $region4: #{tpu_custom_call.1} parent=1 // loop_header_branch
      %21 = sbr.rel (%p19) target = $region8
    $region5: #{tpu_custom_call.1} parent=1 // loop_body
      %s23 = ssub.s32 %s18, 1
      %s24 = ssub.s32 %s18, 2
      %s25 = sadd.s32 %s18, 1
      %s26 = ssub.s32 %s18, %s25
      %p27 = scmp.eq.s32.totalorder %s26, 0
      %s29 = sadd.s32 %s28, 1
      %s30 = scalar_select %p27, %s28, %s29
      %p33 = pneg %p27
      %p34 = scmp.eq.s32.totalorder %s18, 1
      %p35 = por %p33, %p34
      %p36 = scmp.ne.s32.totalorder %s28, %s31
      %p37 = scmp.eq.s32.totalorder %s18, 0
      %p38 = por %p36, %p37
      %p39 = scmp.ne.s32.totalorder %s28, %s31
      %p40 = scmp.eq.s32.totalorder %s23, 1
      %p41 = por %p39, %p40
      %p42 = scmp.ne.s32.totalorder %s31, %s32
      %p43 = scmp.eq.s32.totalorder %s23, 0
      %p44 = por %p42, %p43
      %p45 = scmp.ne.s32.totalorder %s31, %s32
      %p46 = scmp.eq.s32.totalorder %s24, 1
      %p47 = por %p45, %p46
      %p49 = scmp.ne.s32.totalorder %s32, %s48
      %p50 = scmp.eq.s32.totalorder %s24, 0
      %p51 = por %p49, %p50
      %s53 = sadd.s32 %s52, 1
      %p56 = scmp.eq.s32.totalorder %s18, 1
      %p57 = scmp.ne.s32.totalorder %s52, %s54
      %p58 = scmp.eq.s32.totalorder %s18, 0
      %p59 = por %p57, %p58
      %p60 = scmp.ne.s32.totalorder %s52, %s54
      %p61 = scmp.eq.s32.totalorder %s23, 1
      %p62 = por %p60, %p61
      %p63 = scmp.ne.s32.totalorder %s54, %s55
      %p64 = scmp.eq.s32.totalorder %s23, 0
      %p65 = por %p63, %p64
      %p66 = scmp.ne.s32.totalorder %s54, %s55
      %p67 = scmp.eq.s32.totalorder %s24, 1
      %p68 = por %p66, %p67
      %p70 = scmp.ne.s32.totalorder %s55, %s69
      %p71 = scmp.eq.s32.totalorder %s24, 0
      %p72 = por %p70, %p71
      %s74 = sadd.s32 %s73, 1
      %p77 = scmp.eq.s32.totalorder %s18, 1
      %p78 = scmp.ne.s32.totalorder %s73, %s75
      %p79 = scmp.eq.s32.totalorder %s18, 0
      %p80 = por %p78, %p79
      %p81 = scmp.ne.s32.totalorder %s73, %s75
      %p82 = scmp.eq.s32.totalorder %s23, 1
      %p83 = por %p81, %p82
      %p84 = scmp.ne.s32.totalorder %s75, %s76
      %p85 = scmp.eq.s32.totalorder %s23, 0
      %p86 = por %p84, %p85
      %p87 = scmp.ne.s32.totalorder %s75, %s76
      %p88 = scmp.eq.s32.totalorder %s24, 1
      %p89 = por %p87, %p88
      %p91 = scmp.ne.s32.totalorder %s76, %s90
      %p92 = scmp.eq.s32.totalorder %s24, 0
      %p93 = por %p91, %p92
      %s95 = sadd.s32 %s94, 1
      %p98 = scmp.eq.s32.totalorder %s18, 1
      %p99 = scmp.ne.s32.totalorder %s94, %s96
      %p100 = scmp.eq.s32.totalorder %s18, 0
      %p101 = por %p99, %p100
      %p102 = scmp.ne.s32.totalorder %s94, %s96
      %p103 = scmp.eq.s32.totalorder %s23, 1
      %p104 = por %p102, %p103
      %p105 = scmp.ne.s32.totalorder %s96, %s97
      %p106 = scmp.eq.s32.totalorder %s23, 0
      %p107 = por %p105, %p106
      %p108 = scmp.ne.s32.totalorder %s96, %s97
      %p109 = scmp.eq.s32.totalorder %s24, 1
      %p110 = por %p108, %p109
      %p112 = scmp.ne.s32.totalorder %s97, %s111
      %p113 = scmp.eq.s32.totalorder %s24, 0
      %p114 = por %p112, %p113
      %s116 = sadd.s32 %s115, 1
      %p119 = scmp.eq.s32.totalorder %s18, 1
      %p120 = scmp.ne.s32.totalorder %s115, %s117
      %p121 = scmp.eq.s32.totalorder %s18, 0
      %p122 = por %p120, %p121
      %p123 = scmp.ne.s32.totalorder %s115, %s117
      %p124 = scmp.eq.s32.totalorder %s23, 1
      %p125 = por %p123, %p124
      %p126 = scmp.ne.s32.totalorder %s117, %s118
      %p127 = scmp.eq.s32.totalorder %s23, 0
      %p128 = por %p126, %p127
      %p129 = scmp.ne.s32.totalorder %s117, %s118
      %p130 = scmp.eq.s32.totalorder %s24, 1
      %p131 = por %p129, %p130
      %p133 = scmp.ne.s32.totalorder %s118, %s132
      %p134 = scmp.eq.s32.totalorder %s24, 0
      %p135 = por %p133, %p134
      %s137 = sadd.s32 %s136, 1
      %p140 = scmp.eq.s32.totalorder %s18, 1
      %p141 = scmp.ne.s32.totalorder %s136, %s138
      %p142 = scmp.eq.s32.totalorder %s18, 0
      %p143 = por %p141, %p142
      %p144 = scmp.ne.s32.totalorder %s136, %s138
      %p145 = scmp.eq.s32.totalorder %s23, 1
      %p146 = por %p144, %p145
      %p147 = scmp.ne.s32.totalorder %s138, %s139
      %p148 = scmp.eq.s32.totalorder %s23, 0
      %p149 = por %p147, %p148
      %p150 = scmp.ne.s32.totalorder %s138, %s139
      %p151 = scmp.eq.s32.totalorder %s24, 1
      %p152 = por %p150, %p151
      %p154 = scmp.ne.s32.totalorder %s139, %s153
      %p155 = scmp.eq.s32.totalorder %s24, 0
      %p156 = por %p154, %p155
      %s158 = sadd.s32 %s157, 1
      %p161 = scmp.eq.s32.totalorder %s18, 1
      %p162 = scmp.ne.s32.totalorder %s157, %s159
      %p163 = scmp.eq.s32.totalorder %s18, 0
      %p164 = por %p162, %p163
      %p165 = scmp.ne.s32.totalorder %s157, %s159
      %p166 = scmp.eq.s32.totalorder %s23, 1
      %p167 = por %p165, %p166
      %p168 = scmp.ne.s32.totalorder %s159, %s160
      %p169 = scmp.eq.s32.totalorder %s23, 0
      %p170 = por %p168, %p169
      %p171 = scmp.ne.s32.totalorder %s159, %s160
      %p172 = scmp.eq.s32.totalorder %s24, 1
      %p173 = por %p171, %p172
      %p175 = scmp.ne.s32.totalorder %s160, %s174
      %p176 = scmp.eq.s32.totalorder %s24, 0
      %p177 = por %p175, %p176
      %s178 = ssub.s32 %s18, %s25
      %p179 = scmp.eq.s32.totalorder %s178, 0
      %s181 = sadd.s32 %s180, 1
      %s182 = scalar_select %p179, %s180, %s181
      %p185 = pneg %p179
      %p186 = scmp.eq.s32.totalorder %s18, 1
      %p187 = por %p185, %p186
      %p188 = scmp.ne.s32.totalorder %s180, %s183
      %p189 = scmp.eq.s32.totalorder %s18, 0
      %p190 = por %p188, %p189
      %p191 = scmp.ne.s32.totalorder %s180, %s183
      %p192 = scmp.eq.s32.totalorder %s23, 1
      %p193 = por %p191, %p192
      %p194 = scmp.ne.s32.totalorder %s183, %s184
      %p195 = scmp.eq.s32.totalorder %s23, 0
      %p196 = por %p194, %p195
      %p197 = scmp.ne.s32.totalorder %s183, %s184
      %p198 = scmp.eq.s32.totalorder %s24, 1
      %p199 = por %p197, %p198
      %p201 = scmp.ne.s32.totalorder %s184, %s200
      %p202 = scmp.eq.s32.totalorder %s24, 0
      %p203 = por %p201, %p202
      %p204 = scmp.le.s32.totalorder 1, %s18
      %p205 = scmp.lt.s32.totalorder %s18, 3
      %p206 = pnand %p204, %p205
      %p207 = pneg %p206
      // Predicated region
      $region9: #{tpu_custom_call.1} parent=5 // pred_check
        _
      $region10: #{tpu_custom_call.1} parent=5 // pred_check_branch
        %209 = sbr.rel (%p206) target = $region12
      $region11: #{tpu_custom_call.1} parent=5 // pred_region
        %s210 = ssub.s32 %s18, 1
        // Predicated region
        $region13: #{tpu_custom_call.1} parent=11 // pred_check
          %p211 = pneg %p65
        $region14: #{tpu_custom_call.1} parent=11 // pred_check_branch
          %213 = sbr.rel (%p211) target = $region16
        $region15: #{tpu_custom_call.1} parent=11 // pred_region
          %215 = vsyncadd [#allocation5], 0
          %s216 = sshll.u32 %s1, 4
          %s217 = int_to_ptr.hbm [resolvable:$true] %s216
          %s218 = sshll.u32 [#allocation4], 4
          %s219 = int_to_ptr.vmem [resolvable:$true] %s218
          %224 = dma.hbm_to_vmem [thread:$0]  %s217, 4096, %s219, [#allocation5], 64, 64, 4
        $region16: #{tpu_custom_call.1} parent=11 // pred_fallthru
          _
        // Predicated region
        $region17: #{tpu_custom_call.1} parent=11 // pred_check
          %p225 = pneg %p86
        $region18: #{tpu_custom_call.1} parent=11 // pred_check_branch
          %227 = sbr.rel (%p225) target = $region20
        $region19: #{tpu_custom_call.1} parent=11 // pred_region
          _
        $region20: #{tpu_custom_call.1} parent=11 // pred_fallthru
          _
        // Predicated region
        $region21: #{tpu_custom_call.1} parent=11 // pred_check
          %p228 = pneg %p107
        $region22: #{tpu_custom_call.1} parent=11 // pred_check_branch
          %230 = sbr.rel (%p228) target = $region24
        $region23: #{tpu_custom_call.1} parent=11 // pred_region
          %232 = vsyncadd [#allocation8], 0
          %s233 = sshll.u32 %s3, 4
          %s234 = int_to_ptr.hbm [resolvable:$true] %s233
          %s235 = sshll.u32 [#allocation7], 4
          %s236 = int_to_ptr.vmem [resolvable:$true] %s235
          %241 = dma.hbm_to_vmem [thread:$0]  %s234, 9216, %s236, [#allocation8], 64, 64, 4
        $region24: #{tpu_custom_call.1} parent=11 // pred_fallthru
          _
        // Predicated region
        $region25: #{tpu_custom_call.1} parent=11 // pred_check
          %p242 = pneg %p128
        $region26: #{tpu_custom_call.1} parent=11 // pred_check_branch
          %244 = sbr.rel (%p242) target = $region28
        $region27: #{tpu_custom_call.1} parent=11 // pred_region
          _
        $region28: #{tpu_custom_call.1} parent=11 // pred_fallthru
          _
        // Predicated region
        $region29: #{tpu_custom_call.1} parent=11 // pred_check
          %p245 = pneg %p149
        $region30: #{tpu_custom_call.1} parent=11 // pred_check_branch
          %247 = sbr.rel (%p245) target = $region32
        $region31: #{tpu_custom_call.1} parent=11 // pred_region
          _
        $region32: #{tpu_custom_call.1} parent=11 // pred_fallthru
          _
        // Predicated region
        $region33: #{tpu_custom_call.1} parent=11 // pred_check
          %p248 = pneg %p170
        $region34: #{tpu_custom_call.1} parent=11 // pred_check_branch
          %250 = sbr.rel (%p248) target = $region36
        $region35: #{tpu_custom_call.1} parent=11 // pred_region
          _
        $region36: #{tpu_custom_call.1} parent=11 // pred_fallthru
          _
      $region12: #{tpu_custom_call.1} parent=5 // pred_fallthru
        _
      %p251 = scmp.lt.s32.totalorder %s18, 2
      // Predicated region
      $region37: #{tpu_custom_call.1} parent=5 // pred_check
        %p252 = pneg %p251
      $region38: #{tpu_custom_call.1} parent=5 // pred_check_branch
        %254 = sbr.rel (%p252) target = $region40
      $region39: #{tpu_custom_call.1} parent=5 // pred_region
        // Predicated region
        $region41: #{tpu_custom_call.1} parent=39 // pred_check
          %p255 = pneg %p38
        $region42: #{tpu_custom_call.1} parent=39 // pred_check_branch
          %257 = sbr.rel (%p255) target = $region44
        $region43: #{tpu_custom_call.1} parent=39 // pred_region
          %p258 = scmp.lt.s32.totalorder %s18, 1
          %s259 = scalar_select %p258, %s18, 1
          %s260 = smul.addr %s259, 13
          %s261 = smul.addr %s260, 4
          %s262 = scalar_lea.vmem %s0, %s261
        $region44: #{tpu_custom_call.1} parent=39 // pred_fallthru
          _
      $region40: #{tpu_custom_call.1} parent=5 // pred_fallthru
        _
      %p263 = scmp.le.s32.totalorder 1, %s18
      %p264 = scmp.lt.s32.totalorder %s18, 3
      %p265 = pnand %p263, %p264
      %p266 = pneg %p265
      // Predicated region
      $region45: #{tpu_custom_call.1} parent=5 // pred_check
        _
      $region46: #{tpu_custom_call.1} parent=5 // pred_check_branch
        %268 = sbr.rel (%p265) target = $region48
      $region47: #{tpu_custom_call.1} parent=5 // pred_region
        %s269 = ssub.s32 %s18, 1
        // Predicated region
        $region49: #{tpu_custom_call.1} parent=47 // pred_check
          %p270 = pneg %p65
        $region50: #{tpu_custom_call.1} parent=47 // pred_check_branch
          %272 = sbr.rel (%p270) target = $region52
        $region51: #{tpu_custom_call.1} parent=47 // pred_region
          %274 = dma.done [#allocation5], 4096
        $region52: #{tpu_custom_call.1} parent=47 // pred_fallthru
          _
        // Predicated region
        $region53: #{tpu_custom_call.1} parent=47 // pred_check
          %p275 = pneg %p107
        $region54: #{tpu_custom_call.1} parent=47 // pred_check_branch
          %277 = sbr.rel (%p275) target = $region56
        $region55: #{tpu_custom_call.1} parent=47 // pred_region
          %279 = dma.done [#allocation8], 9216
        $region56: #{tpu_custom_call.1} parent=47 // pred_fallthru
          _
        %p280 = scmp.lt.s32.totalorder %s23, 1
        %s281 = scalar_select %p280, %s23, 1
        %s282 = smul.addr %s281, 13
        %s283 = smul.addr %s282, 4
        %s284 = scalar_lea.vmem %s0, %s283
        %p285 = pneg %p44
        %p286 = pneg %p41
        %p287 = pneg %p65
        %p288 = pneg %p62
        %p289 = pneg %p86
        %p290 = pneg %p83
        %p291 = pneg %p107
        %p292 = pneg %p104
        %p293 = pneg %p128
        %p294 = pneg %p125
        %p295 = pneg %p149
        %p296 = pneg %p146
        %p297 = pneg %p170
        %p298 = pneg %p167
        %p299 = pneg %p196
        %p300 = pneg %p193
        %s301 = sand.u32 %s183, 1
        %s302 = scalar_lea.sflag [#allocation6], %s301
        %s303 = sand.u32 %s183, 1
        %s304 = smul.addr %s303, 80
        %s305 = scalar_lea.vmem [#allocation9], %s304
        %p306 = scmp.lt.s32.totalorder %s23, 1
        %s307 = scalar_select %p306, %s23, 1
        %s308 = smul.addr %s307, 13
        %s309 = smul.addr %s308, 4
        %s310 = scalar_lea.vmem %s0, %s309
        %v312 = vld [vmem:[%s310] sm:$0xf]
        %v313 = vld [vmem:[%s310 + $0x4] sm:$0xf]
        %v314 = vld [vmem:[%s310 + $0x8] sm:$0xf]
        %v315 = vld [vmem:[%s310 + $0xc] sm:$0xf]
        %v316 = vld [vmem:[%s310 + $0x10] sm:$0xf]
        %v317 = vld [vmem:[%s310 + $0x14] sm:$0xf]
        %v318 = vld [vmem:[%s310 + $0x18] sm:$0xf]
        %v319 = vld [vmem:[%s310 + $0x1c] sm:$0xf]
        %v320 = vld [vmem:[%s310 + $0x20] sm:$0xf]
        %v321 = vld [vmem:[%s310 + $0x24] sm:$0xf]
        %v322 = vld [vmem:[#allocation4] sm:$0xf]
        %v323 = vld [vmem:[#allocation4 + $0x4] sm:$0xf]
        %v324 = vld [vmem:[#allocation4 + $0x8] sm:$0xf]
        %v325 = vld [vmem:[#allocation4 + $0xc] sm:$0xf]
        %v326 = vld [vmem:[#allocation4 + $0x10] sm:$0xf]
        %v327 = vld [vmem:[#allocation4 + $0x14] sm:$0xf]
        %v328 = vld [vmem:[#allocation4 + $0x18] sm:$0xf]
        %v329 = vld [vmem:[#allocation4 + $0x1c] sm:$0xf]
        %v330 = vld [vmem:[#allocation4 + $0x20] sm:$0xf]
        %v331 = vld [vmem:[#allocation4 + $0x24] sm:$0xf]
        %v332 = vld [vmem:[#allocation4 + $0x28] sm:$0xf]
        %v333 = vld [vmem:[#allocation4 + $0x2c] sm:$0xf]
        %v334 = vld [vmem:[#allocation4 + $0x30] sm:$0xf]
        %v335 = vld [vmem:[#allocation4 + $0x34] sm:$0xf]
        %v336 = vld [vmem:[#allocation4 + $0x38] sm:$0xf]
        %v337 = vld [vmem:[#allocation4 + $0x3c] sm:$0xf]
        %v348 = vunpack.c.l.b16 %v312
        %v349 = vunpack.c.l.b16 %v313
        %v350 = vunpack.c.l.b16 %v314
        %v351 = vunpack.c.l.b16 %v315
        %v352 = vunpack.c.l.b16 %v316
        %v353 = vunpack.c.l.b16 %v317
        %v354 = vunpack.c.l.b16 %v318
        %v355 = vunpack.c.l.b16 %v319
        %v356 = vunpack.c.l.b16 %v320
        %v357 = vunpack.c.l.b16 %v321
        %v358 = vpack.c.b16 %v349, %v348
        %v359 = vpack.c.b16 %v351, %v350
        %v360 = vpack.c.b16 %v353, %v352
        %v361 = vpack.c.b16 %v355, %v354
        %v362 = vpack.c.b16 %v357, %v356
        %v384 = vunpack.c.l.b16 %v322
        %v385 = vunpack.c.l.b16 %v323
        %v386 = vunpack.c.l.b16 %v324
        %v387 = vunpack.c.l.b16 %v325
        %v388 = vunpack.c.l.b16 %v326
        %v389 = vunpack.c.l.b16 %v327
        %v390 = vunpack.c.l.b16 %v328
        %v391 = vunpack.c.l.b16 %v329
        %v392 = vunpack.c.l.b16 %v330
        %v393 = vunpack.c.l.b16 %v331
        %v394 = vunpack.c.l.b16 %v332
        %v395 = vunpack.c.l.b16 %v333
        %v396 = vunpack.c.l.b16 %v334
        %v397 = vunpack.c.l.b16 %v335
        %v398 = vunpack.c.l.b16 %v336
        %v399 = vunpack.c.l.b16 %v337
        %v400 = vpack.c.b16 %v385, %v384
        %v401 = vpack.c.b16 %v387, %v386
        %v402 = vpack.c.b16 %v389, %v388
        %v403 = vpack.c.b16 %v391, %v390
        %v404 = vpack.c.b16 %v393, %v392
        %v405 = vpack.c.b16 %v395, %v394
        %v406 = vpack.c.b16 %v397, %v396
        %v407 = vpack.c.b16 %v399, %v398
        %416 = vmatpush.bf16.msra.mxu0 %v407
        %417 = vmatpush.bf16.msra.mxu0 %v406
        %418 = vmatpush.bf16.msra.mxu0 %v405
        %419 = vmatpush.bf16.msra.mxu0 %v404
        %420 = vmatpush.bf16.msra.mxu0 %v403
        %421 = vmatpush.bf16.msra.mxu0 %v402
        %422 = vmatpush.bf16.msra.mxu0 %v401
        %423 = vmatpush.bf16.msra.mxu0 %v400
        %424 = vmatmul.bf16.gmra.mxu0 %v358
        %v425 = vpop.f32.mrf.mxu0
        %v426 = vadd.f32 0.0, %v425
        %v427 = vpop.f32.mrf.mxu0
        %v428 = vadd.f32 0.0, %v427
        %429 = vmatmul.bf16.gmra.mxu0 %v359
        %v430 = vpop.f32.mrf.mxu0
        %v431 = vadd.f32 0.0, %v430
        %v432 = vpop.f32.mrf.mxu0
        %v433 = vadd.f32 0.0, %v432
        %434 = vmatmul.bf16.gmra.mxu0 %v360
        %v435 = vpop.f32.mrf.mxu0
        %v436 = vadd.f32 0.0, %v435
        %v437 = vpop.f32.mrf.mxu0
        %v438 = vadd.f32 0.0, %v437
        %439 = vmatmul.bf16.gmra.mxu0 %v361
        %v440 = vpop.f32.mrf.mxu0
        %v441 = vadd.f32 0.0, %v440
        %v442 = vpop.f32.mrf.mxu0
        %v443 = vadd.f32 0.0, %v442
        %444 = vmatmul.bf16.gmra.mxu0 %v362
        %v445 = vpop.f32.mrf.mxu0
        %v446 = vadd.f32 0.0, %v445
        %v447 = vpop.f32.mrf.mxu0
        %v448 = vadd.f32 0.0, %v447
        %449 = vdwg.mxu0
        %450 = vst [vmem:[#allocation3] sm:$0xff] %v426
        %451 = vst [vmem:[#allocation3 + $0x8] sm:$0xff] %v428
        %452 = vst [vmem:[#allocation3 + $0x10] sm:$0xff] %v431
        %453 = vst [vmem:[#allocation3 + $0x18] sm:$0xff] %v433
        %454 = vst [vmem:[#allocation3 + $0x20] sm:$0xff] %v436
        %455 = vst [vmem:[#allocation3 + $0x28] sm:$0xff] %v438
        %456 = vst [vmem:[#allocation3 + $0x30] sm:$0xff] %v441
        %457 = vst [vmem:[#allocation3 + $0x38] sm:$0xff] %v443
        %458 = vst [vmem:[#allocation3 + $0x40] sm:$0xff] %v446
        %459 = vst [vmem:[#allocation3 + $0x48] sm:$0xff] %v448
        %v460 = vld [vmem:[%s310] sm:$0xf]
        %v461 = vld [vmem:[%s310 + $0x4] sm:$0xf]
        %v462 = vld [vmem:[%s310 + $0x8] sm:$0xf]
        %v463 = vld [vmem:[%s310 + $0xc] sm:$0xf]
        %v464 = vld [vmem:[%s310 + $0x10] sm:$0xf]
        %v465 = vld [vmem:[%s310 + $0x14] sm:$0xf]
        %v466 = vld [vmem:[%s310 + $0x18] sm:$0xf]
        %v467 = vld [vmem:[%s310 + $0x1c] sm:$0xf]
        %v468 = vld [vmem:[%s310 + $0x20] sm:$0xf]
        %v469 = vld [vmem:[%s310 + $0x24] sm:$0xf]
        %v470 = vld [vmem:[%s310 + $0x28] sm:$0x1]
        %s471 = scalar_lea.vmem [#allocation4], 64
        %v472 = vld [vmem:[%s471] sm:$0xf]
        %v473 = vld [vmem:[%s471 + $0x4] sm:$0xf]
        %v474 = vld [vmem:[%s471 + $0x8] sm:$0xf]
        %v475 = vld [vmem:[%s471 + $0xc] sm:$0xf]
        %v476 = vld [vmem:[%s471 + $0x10] sm:$0xf]
        %v477 = vld [vmem:[%s471 + $0x14] sm:$0xf]
        %v478 = vld [vmem:[%s471 + $0x18] sm:$0xf]
        %v479 = vld [vmem:[%s471 + $0x1c] sm:$0xf]
        %v480 = vld [vmem:[%s471 + $0x20] sm:$0xf]
        %v481 = vld [vmem:[%s471 + $0x24] sm:$0xf]
        %v482 = vld [vmem:[%s471 + $0x28] sm:$0xf]
        %v483 = vld [vmem:[%s471 + $0x2c] sm:$0xf]
        %v484 = vld [vmem:[%s471 + $0x30] sm:$0xf]
        %v485 = vld [vmem:[%s471 + $0x34] sm:$0xf]
        %v486 = vld [vmem:[%s471 + $0x38] sm:$0xf]
        %v487 = vld [vmem:[%s471 + $0x3c] sm:$0xf]
        %v499 = vunpack.c.l.b16 %v460
        %v500 = vunpack.c.l.b16 %v461
        %v501 = vunpack.c.l.b16 %v462
        %v502 = vunpack.c.l.b16 %v463
        %v503 = vunpack.c.l.b16 %v464
        %v504 = vunpack.c.l.b16 %v465
        %v505 = vunpack.c.l.b16 %v466
        %v506 = vunpack.c.l.b16 %v467
        %v507 = vunpack.c.l.b16 %v468
        %v508 = vunpack.c.l.b16 %v469
        %v509 = vunpack.c.l.b16 %v470
        %v510 = vpack.c.b16 %v500, %v499
        %v511 = vpack.c.b16 %v502, %v501
        %v512 = vpack.c.b16 %v504, %v503
        %v513 = vpack.c.b16 %v506, %v505
        %v514 = vpack.c.b16 %v508, %v507
        %v515 = vpack.c.b16 %v509, %v509
        %vm516 = vsmask.f32 7424
        %v518 = vshrl.u32 %v510, 16
        %v520 = vshll.u32 %v510, 16
        %v522 = vrot.slane %v520, 1
        %v523 = vor.u32 %v518, %v522
        %v525 = vshll.u32 %v511, 16
        %v527 = vrot.slane %v525, 1
        %v528 = vsel %vm516, %v523, %v527
        %v529 = vshrl.u32 %v511, 16
        %v531 = vor.u32 %v529, %v527
        %v533 = vshll.u32 %v512, 16
        %v535 = vrot.slane %v533, 1
        %v536 = vsel %vm516, %v531, %v535
        %v537 = vshrl.u32 %v512, 16
        %v539 = vor.u32 %v537, %v535
        %v541 = vshll.u32 %v513, 16
        %v543 = vrot.slane %v541, 1
        %v544 = vsel %vm516, %v539, %v543
        %v545 = vshrl.u32 %v513, 16
        %v547 = vor.u32 %v545, %v543
        %v549 = vshll.u32 %v514, 16
        %v551 = vrot.slane %v549, 1
        %v552 = vsel %vm516, %v547, %v551
        %v553 = vshrl.u32 %v514, 16
        %v555 = vor.u32 %v553, %v551
        %v557 = vshll.u32 %v515, 16
        %v559 = vrot.slane %v557, 1
        %v560 = vsel %vm516, %v555, %v559
        %v582 = vunpack.c.l.b16 %v472
        %v583 = vunpack.c.l.b16 %v473
        %v584 = vunpack.c.l.b16 %v474
        %v585 = vunpack.c.l.b16 %v475
        %v586 = vunpack.c.l.b16 %v476
        %v587 = vunpack.c.l.b16 %v477
        %v588 = vunpack.c.l.b16 %v478
        %v589 = vunpack.c.l.b16 %v479
        %v590 = vunpack.c.l.b16 %v480
        %v591 = vunpack.c.l.b16 %v481
        %v592 = vunpack.c.l.b16 %v482
        %v593 = vunpack.c.l.b16 %v483
        %v594 = vunpack.c.l.b16 %v484
        %v595 = vunpack.c.l.b16 %v485
        %v596 = vunpack.c.l.b16 %v486
        %v597 = vunpack.c.l.b16 %v487
        %v598 = vpack.c.b16 %v583, %v582
        %v599 = vpack.c.b16 %v585, %v584
        %v600 = vpack.c.b16 %v587, %v586
        %v601 = vpack.c.b16 %v589, %v588
        %v602 = vpack.c.b16 %v591, %v590
        %v603 = vpack.c.b16 %v593, %v592
        %v604 = vpack.c.b16 %v595, %v594
        %v605 = vpack.c.b16 %v597, %v596
        %614 = vmatpush.bf16.msra.mxu0 %v605
        %615 = vmatpush.bf16.msra.mxu0 %v604
        %616 = vmatpush.bf16.msra.mxu0 %v603
        %617 = vmatpush.bf16.msra.mxu0 %v602
        %618 = vmatpush.bf16.msra.mxu0 %v601
        %619 = vmatpush.bf16.msra.mxu0 %v600
        %620 = vmatpush.bf16.msra.mxu0 %v599
        %621 = vmatpush.bf16.msra.mxu0 %v598
        %622 = vmatmul.bf16.gmra.mxu0 %v528
        %v623 = vpop.f32.mrf.mxu0
        %v624 = vadd.f32 0.0, %v623
        %v625 = vpop.f32.mrf.mxu0
        %v626 = vadd.f32 0.0, %v625
        %627 = vmatmul.bf16.gmra.mxu0 %v536
        %v628 = vpop.f32.mrf.mxu0
        %v629 = vadd.f32 0.0, %v628
        %v630 = vpop.f32.mrf.mxu0
        %v631 = vadd.f32 0.0, %v630
        %632 = vmatmul.bf16.gmra.mxu0 %v544
        %v633 = vpop.f32.mrf.mxu0
        %v634 = vadd.f32 0.0, %v633
        %v635 = vpop.f32.mrf.mxu0
        %v636 = vadd.f32 0.0, %v635
        %637 = vmatmul.bf16.gmra.mxu0 %v552
        %v638 = vpop.f32.mrf.mxu0
        %v639 = vadd.f32 0.0, %v638
        %v640 = vpop.f32.mrf.mxu0
        %v641 = vadd.f32 0.0, %v640
        %642 = vmatmul.bf16.gmra.mxu0 %v560
        %v643 = vpop.f32.mrf.mxu0
        %v644 = vadd.f32 0.0, %v643
        %v645 = vpop.f32.mrf.mxu0
        %v646 = vadd.f32 0.0, %v645
        %647 = vdwg.mxu0
        %v648 = vld [vmem:[#allocation3] sm:$0xff]
        %v649 = vld [vmem:[#allocation3 + $0x8] sm:$0xff]
        %v650 = vld [vmem:[#allocation3 + $0x10] sm:$0xff]
        %v651 = vld [vmem:[#allocation3 + $0x18] sm:$0xff]
        %v652 = vld [vmem:[#allocation3 + $0x20] sm:$0xff]
        %v653 = vld [vmem:[#allocation3 + $0x28] sm:$0xff]
        %v654 = vld [vmem:[#allocation3 + $0x30] sm:$0xff]
        %v655 = vld [vmem:[#allocation3 + $0x38] sm:$0xff]
        %v656 = vld [vmem:[#allocation3 + $0x40] sm:$0xff]
        %v657 = vld [vmem:[#allocation3 + $0x48] sm:$0xff]
        %v658 = vadd.f32 %v648, %v624
        %v659 = vadd.f32 %v649, %v626
        %v660 = vadd.f32 %v650, %v629
        %v661 = vadd.f32 %v651, %v631
        %v662 = vadd.f32 %v652, %v634
        %v663 = vadd.f32 %v653, %v636
        %v664 = vadd.f32 %v654, %v639
        %v665 = vadd.f32 %v655, %v641
        %v666 = vadd.f32 %v656, %v644
        %v667 = vadd.f32 %v657, %v646
        %668 = vst [vmem:[#allocation3] sm:$0xff] %v658
        %669 = vst [vmem:[#allocation3 + $0x8] sm:$0xff] %v659
        %670 = vst [vmem:[#allocation3 + $0x10] sm:$0xff] %v660
        %671 = vst [vmem:[#allocation3 + $0x18] sm:$0xff] %v661
        %672 = vst [vmem:[#allocation3 + $0x20] sm:$0xff] %v662
        %673 = vst [vmem:[#allocation3 + $0x28] sm:$0xff] %v663
        %674 = vst [vmem:[#allocation3 + $0x30] sm:$0xff] %v664
        %675 = vst [vmem:[#allocation3 + $0x38] sm:$0xff] %v665
        %676 = vst [vmem:[#allocation3 + $0x40] sm:$0xff] %v666
        %677 = vst [vmem:[#allocation3 + $0x48] sm:$0xff] %v667
        %v678 = vld [vmem:[%s310 + $0x4] sm:$0xe]
        %v679 = vld [vmem:[%s310 + $0x8] sm:$0xf]
        %v680 = vld [vmem:[%s310 + $0xc] sm:$0xf]
        %v681 = vld [vmem:[%s310 + $0x10] sm:$0xf]
        %v682 = vld [vmem:[%s310 + $0x14] sm:$0xf]
        %v683 = vld [vmem:[%s310 + $0x18] sm:$0xf]
        %v684 = vld [vmem:[%s310 + $0x1c] sm:$0xf]
        %v685 = vld [vmem:[%s310 + $0x20] sm:$0xf]
        %v686 = vld [vmem:[%s310 + $0x24] sm:$0xf]
        %v687 = vld [vmem:[%s310 + $0x28] sm:$0xf]
        %v688 = vld [vmem:[%s310 + $0x2c] sm:$0x1]
        %s689 = scalar_lea.vmem [#allocation4], 128
        %v690 = vld [vmem:[%s689] sm:$0xf]
        %v691 = vld [vmem:[%s689 + $0x4] sm:$0xf]
        %v692 = vld [vmem:[%s689 + $0x8] sm:$0xf]
        %v693 = vld [vmem:[%s689 + $0xc] sm:$0xf]
        %v694 = vld [vmem:[%s689 + $0x10] sm:$0xf]
        %v695 = vld [vmem:[%s689 + $0x14] sm:$0xf]
        %v696 = vld [vmem:[%s689 + $0x18] sm:$0xf]
        %v697 = vld [vmem:[%s689 + $0x1c] sm:$0xf]
        %v698 = vld [vmem:[%s689 + $0x20] sm:$0xf]
        %v699 = vld [vmem:[%s689 + $0x24] sm:$0xf]
        %v700 = vld [vmem:[%s689 + $0x28] sm:$0xf]
        %v701 = vld [vmem:[%s689 + $0x2c] sm:$0xf]
        %v702 = vld [vmem:[%s689 + $0x30] sm:$0xf]
        %v703 = vld [vmem:[%s689 + $0x34] sm:$0xf]
        %v704 = vld [vmem:[%s689 + $0x38] sm:$0xf]
        %v705 = vld [vmem:[%s689 + $0x3c] sm:$0xf]
        %v717 = vunpack.c.l.b16 %v678
        %v718 = vunpack.c.l.b16 %v679
        %v719 = vunpack.c.l.b16 %v680
        %v720 = vunpack.c.l.b16 %v681
        %v721 = vunpack.c.l.b16 %v682
        %v722 = vunpack.c.l.b16 %v683
        %v723 = vunpack.c.l.b16 %v684
        %v724 = vunpack.c.l.b16 %v685
        %v725 = vunpack.c.l.b16 %v686
        %v726 = vunpack.c.l.b16 %v687
        %v727 = vunpack.c.l.b16 %v688
        %v728 = vpack.c.b16 %v718, %v717
        %v729 = vpack.c.b16 %v720, %v719
        %v730 = vpack.c.b16 %v722, %v721
        %v731 = vpack.c.b16 %v724, %v723
        %v732 = vpack.c.b16 %v726, %v725
        %v733 = vpack.c.b16 %v727, %v727
        %vm734 = vcmask 1046528
        %v735 = vrot.slane %v728, 1
        %v736 = vrot.slane %v729, 1
        %v737 = vsel %vm734, %v735, %v736
        %v738 = vrot.slane %v730, 1
        %v739 = vsel %vm734, %v736, %v738
        %v740 = vrot.slane %v731, 1
        %v741 = vsel %vm734, %v738, %v740
        %v742 = vrot.slane %v732, 1
        %v743 = vsel %vm734, %v740, %v742
        %v744 = vrot.slane %v733, 1
        %v745 = vsel %vm734, %v742, %v744
        %v767 = vunpack.c.l.b16 %v690
        %v768 = vunpack.c.l.b16 %v691
        %v769 = vunpack.c.l.b16 %v692
        %v770 = vunpack.c.l.b16 %v693
        %v771 = vunpack.c.l.b16 %v694
        %v772 = vunpack.c.l.b16 %v695
        %v773 = vunpack.c.l.b16 %v696
        %v774 = vunpack.c.l.b16 %v697
        %v775 = vunpack.c.l.b16 %v698
        %v776 = vunpack.c.l.b16 %v699
        %v777 = vunpack.c.l.b16 %v700
        %v778 = vunpack.c.l.b16 %v701
        %v779 = vunpack.c.l.b16 %v702
        %v780 = vunpack.c.l.b16 %v703
        %v781 = vunpack.c.l.b16 %v704
        %v782 = vunpack.c.l.b16 %v705
        %v783 = vpack.c.b16 %v768, %v767
        %v784 = vpack.c.b16 %v770, %v769
        %v785 = vpack.c.b16 %v772, %v771
        %v786 = vpack.c.b16 %v774, %v773
        %v787 = vpack.c.b16 %v776, %v775
        %v788 = vpack.c.b16 %v778, %v777
        %v789 = vpack.c.b16 %v780, %v779
        %v790 = vpack.c.b16 %v782, %v781
        %799 = vmatpush.bf16.msra.mxu0 %v790
        %800 = vmatpush.bf16.msra.mxu0 %v789
        %801 = vmatpush.bf16.msra.mxu0 %v788
        %802 = vmatpush.bf16.msra.mxu0 %v787
        %803 = vmatpush.bf16.msra.mxu0 %v786
        %804 = vmatpush.bf16.msra.mxu0 %v785
        %805 = vmatpush.bf16.msra.mxu0 %v784
        %806 = vmatpush.bf16.msra.mxu0 %v783
        %807 = vmatmul.bf16.gmra.mxu0 %v737
        %v808 = vpop.f32.mrf.mxu0
        %v809 = vadd.f32 0.0, %v808
        %v810 = vpop.f32.mrf.mxu0
        %v811 = vadd.f32 0.0, %v810
        %812 = vmatmul.bf16.gmra.mxu0 %v739
        %v813 = vpop.f32.mrf.mxu0
        %v814 = vadd.f32 0.0, %v813
        %v815 = vpop.f32.mrf.mxu0
        %v816 = vadd.f32 0.0, %v815
        %817 = vmatmul.bf16.gmra.mxu0 %v741
        %v818 = vpop.f32.mrf.mxu0
        %v819 = vadd.f32 0.0, %v818
        %v820 = vpop.f32.mrf.mxu0
        %v821 = vadd.f32 0.0, %v820
        %822 = vmatmul.bf16.gmra.mxu0 %v743
        %v823 = vpop.f32.mrf.mxu0
        %v824 = vadd.f32 0.0, %v823
        %v825 = vpop.f32.mrf.mxu0
        %v826 = vadd.f32 0.0, %v825
        %827 = vmatmul.bf16.gmra.mxu0 %v745
        %v828 = vpop.f32.mrf.mxu0
        %v829 = vadd.f32 0.0, %v828
        %v830 = vpop.f32.mrf.mxu0
        %v831 = vadd.f32 0.0, %v830
        %832 = vdwg.mxu0
        %v833 = vld [vmem:[#allocation3] sm:$0xff]
        %v834 = vld [vmem:[#allocation3 + $0x8] sm:$0xff]
        %v835 = vld [vmem:[#allocation3 + $0x10] sm:$0xff]
        %v836 = vld [vmem:[#allocation3 + $0x18] sm:$0xff]
        %v837 = vld [vmem:[#allocation3 + $0x20] sm:$0xff]
        %v838 = vld [vmem:[#allocation3 + $0x28] sm:$0xff]
        %v839 = vld [vmem:[#allocation3 + $0x30] sm:$0xff]
        %v840 = vld [vmem:[#allocation3 + $0x38] sm:$0xff]
        %v841 = vld [vmem:[#allocation3 + $0x40] sm:$0xff]
        %v842 = vld [vmem:[#allocation3 + $0x48] sm:$0xff]
        %v843 = vadd.f32 %v833, %v809
        %v844 = vadd.f32 %v834, %v811
        %v845 = vadd.f32 %v835, %v814
        %v846 = vadd.f32 %v836, %v816
        %v847 = vadd.f32 %v837, %v819
        %v848 = vadd.f32 %v838, %v821
        %v849 = vadd.f32 %v839, %v824
        %v850 = vadd.f32 %v840, %v826
        %v851 = vadd.f32 %v841, %v829
        %v852 = vadd.f32 %v842, %v831
        %853 = vst [vmem:[#allocation3] sm:$0xff] %v843
        %854 = vst [vmem:[#allocation3 + $0x8] sm:$0xff] %v844
        %855 = vst [vmem:[#allocation3 + $0x10] sm:$0xff] %v845
        %856 = vst [vmem:[#allocation3 + $0x18] sm:$0xff] %v846
        %857 = vst [vmem:[#allocation3 + $0x20] sm:$0xff] %v847
        %858 = vst [vmem:[#allocation3 + $0x28] sm:$0xff] %v848
        %859 = vst [vmem:[#allocation3 + $0x30] sm:$0xff] %v849
        %860 = vst [vmem:[#allocation3 + $0x38] sm:$0xff] %v850
        %861 = vst [vmem:[#allocation3 + $0x40] sm:$0xff] %v851
        %862 = vst [vmem:[#allocation3 + $0x48] sm:$0xff] %v852
        %v863 = vld [vmem:[%s310 + $0x4] sm:$0xe]
        %v864 = vld [vmem:[%s310 + $0x8] sm:$0xf]
        %v865 = vld [vmem:[%s310 + $0xc] sm:$0xf]
        %v866 = vld [vmem:[%s310 + $0x10] sm:$0xf]
        %v867 = vld [vmem:[%s310 + $0x14] sm:$0xf]
        %v868 = vld [vmem:[%s310 + $0x18] sm:$0xf]
        %v869 = vld [vmem:[%s310 + $0x1c] sm:$0xf]
        %v870 = vld [vmem:[%s310 + $0x20] sm:$0xf]
        %v871 = vld [vmem:[%s310 + $0x24] sm:$0xf]
        %v872 = vld [vmem:[%s310 + $0x28] sm:$0xf]
        %v873 = vld [vmem:[%s310 + $0x2c] sm:$0x3]
        %s874 = scalar_lea.vmem [#allocation4], 192
        %v875 = vld [vmem:[%s874] sm:$0xf]
        %v876 = vld [vmem:[%s874 + $0x4] sm:$0xf]
        %v877 = vld [vmem:[%s874 + $0x8] sm:$0xf]
        %v878 = vld [vmem:[%s874 + $0xc] sm:$0xf]
        %v879 = vld [vmem:[%s874 + $0x10] sm:$0xf]
        %v880 = vld [vmem:[%s874 + $0x14] sm:$0xf]
        %v881 = vld [vmem:[%s874 + $0x18] sm:$0xf]
        %v882 = vld [vmem:[%s874 + $0x1c] sm:$0xf]
        %v883 = vld [vmem:[%s874 + $0x20] sm:$0xf]
        %v884 = vld [vmem:[%s874 + $0x24] sm:$0xf]
        %v885 = vld [vmem:[%s874 + $0x28] sm:$0xf]
        %v886 = vld [vmem:[%s874 + $0x2c] sm:$0xf]
        %v887 = vld [vmem:[%s874 + $0x30] sm:$0xf]
        %v888 = vld [vmem:[%s874 + $0x34] sm:$0xf]
        %v889 = vld [vmem:[%s874 + $0x38] sm:$0xf]
        %v890 = vld [vmem:[%s874 + $0x3c] sm:$0xf]
        %v902 = vunpack.c.l.b16 %v863
        %v903 = vunpack.c.l.b16 %v864
        %v904 = vunpack.c.l.b16 %v865
        %v905 = vunpack.c.l.b16 %v866
        %v906 = vunpack.c.l.b16 %v867
        %v907 = vunpack.c.l.b16 %v868
        %v908 = vunpack.c.l.b16 %v869
        %v909 = vunpack.c.l.b16 %v870
        %v910 = vunpack.c.l.b16 %v871
        %v911 = vunpack.c.l.b16 %v872
        %v912 = vunpack.c.l.b16 %v873
        %v913 = vpack.c.b16 %v903, %v902
        %v914 = vpack.c.b16 %v905, %v904
        %v915 = vpack.c.b16 %v907, %v906
        %v916 = vpack.c.b16 %v909, %v908
        %v917 = vpack.c.b16 %v911, %v910
        %v918 = vpack.c.b16 %v912, %v912
        %vm919 = vsmask.f32 6400
        %v921 = vshrl.u32 %v913, 16
        %v923 = vrot.slane %v921, 1
        %v924 = vshll.u32 %v913, 16
        %v926 = vrot.slane %v924, 2
        %v927 = vor.u32 %v923, %v926
        %v929 = vshrl.u32 %v914, 16
        %v931 = vrot.slane %v929, 1
        %v932 = vshll.u32 %v914, 16
        %v934 = vrot.slane %v932, 2
        %v935 = vor.u32 %v931, %v934
        %v936 = vsel %vm919, %v927, %v935
        %v938 = vshrl.u32 %v915, 16
        %v940 = vrot.slane %v938, 1
        %v941 = vshll.u32 %v915, 16
        %v943 = vrot.slane %v941, 2
        %v944 = vor.u32 %v940, %v943
        %v945 = vsel %vm919, %v935, %v944
        %v947 = vshrl.u32 %v916, 16
        %v949 = vrot.slane %v947, 1
        %v950 = vshll.u32 %v916, 16
        %v952 = vrot.slane %v950, 2
        %v953 = vor.u32 %v949, %v952
        %v954 = vsel %vm919, %v944, %v953
        %v956 = vshrl.u32 %v917, 16
        %v958 = vrot.slane %v956, 1
        %v959 = vshll.u32 %v917, 16
        %v961 = vrot.slane %v959, 2
        %v962 = vor.u32 %v958, %v961
        %v963 = vsel %vm919, %v953, %v962
        %v965 = vshrl.u32 %v918, 16
        %v967 = vrot.slane %v965, 1
        %v968 = vshll.u32 %v918, 16
        %v970 = vrot.slane %v968, 2
        %v971 = vor.u32 %v967, %v970
        %v972 = vsel %vm919, %v962, %v971
        %v994 = vunpack.c.l.b16 %v875
        %v995 = vunpack.c.l.b16 %v876
        %v996 = vunpack.c.l.b16 %v877
        %v997 = vunpack.c.l.b16 %v878
        %v998 = vunpack.c.l.b16 %v879
        %v999 = vunpack.c.l.b16 %v880
        %v1000 = vunpack.c.l.b16 %v881
        %v1001 = vunpack.c.l.b16 %v882
        %v1002 = vunpack.c.l.b16 %v883
        %v1003 = vunpack.c.l.b16 %v884
        %v1004 = vunpack.c.l.b16 %v885
        %v1005 = vunpack.c.l.b16 %v886
        %v1006 = vunpack.c.l.b16 %v887
        %v1007 = vunpack.c.l.b16 %v888
        %v1008 = vunpack.c.l.b16 %v889
        %v1009 = vunpack.c.l.b16 %v890
        %v1010 = vpack.c.b16 %v995, %v994
        %v1011 = vpack.c.b16 %v997, %v996
        %v1012 = vpack.c.b16 %v999, %v998
        %v1013 = vpack.c.b16 %v1001, %v1000
        %v1014 = vpack.c.b16 %v1003, %v1002
        %v1015 = vpack.c.b16 %v1005, %v1004
        %v1016 = vpack.c.b16 %v1007, %v1006
        %v1017 = vpack.c.b16 %v1009, %v1008
        %1026 = vmatpush.bf16.msra.mxu0 %v1017
        %1027 = vmatpush.bf16.msra.mxu0 %v1016
        %1028 = vmatpush.bf16.msra.mxu0 %v1015
        %1029 = vmatpush.bf16.msra.mxu0 %v1014
        %1030 = vmatpush.bf16.msra.mxu0 %v1013
        %1031 = vmatpush.bf16.msra.mxu0 %v1012
        %1032 = vmatpush.bf16.msra.mxu0 %v1011
        %1033 = vmatpush.bf16.msra.mxu0 %v1010
        %1034 = vmatmul.bf16.gmra.mxu0 %v936
        %v1035 = vpop.f32.mrf.mxu0
        %v1036 = vadd.f32 0.0, %v1035
        %v1037 = vpop.f32.mrf.mxu0
        %v1038 = vadd.f32 0.0, %v1037
        %1039 = vmatmul.bf16.gmra.mxu0 %v945
        %v1040 = vpop.f32.mrf.mxu0
        %v1041 = vadd.f32 0.0, %v1040
        %v1042 = vpop.f32.mrf.mxu0
        %v1043 = vadd.f32 0.0, %v1042
        %1044 = vmatmul.bf16.gmra.mxu0 %v954
        %v1045 = vpop.f32.mrf.mxu0
        %v1046 = vadd.f32 0.0, %v1045
        %v1047 = vpop.f32.mrf.mxu0
        %v1048 = vadd.f32 0.0, %v1047
        %1049 = vmatmul.bf16.gmra.mxu0 %v963
        %v1050 = vpop.f32.mrf.mxu0
        %v1051 = vadd.f32 0.0, %v1050
        %v1052 = vpop.f32.mrf.mxu0
        %v1053 = vadd.f32 0.0, %v1052
        %1054 = vmatmul.bf16.gmra.mxu0 %v972
        %v1055 = vpop.f32.mrf.mxu0
        %v1056 = vadd.f32 0.0, %v1055
        %v1057 = vpop.f32.mrf.mxu0
        %v1058 = vadd.f32 0.0, %v1057
        %1059 = vdwg.mxu0
        %v1060 = vld [vmem:[#allocation3] sm:$0xff]
        %v1061 = vld [vmem:[#allocation3 + $0x8] sm:$0xff]
        %v1062 = vld [vmem:[#allocation3 + $0x10] sm:$0xff]
        %v1063 = vld [vmem:[#allocation3 + $0x18] sm:$0xff]
        %v1064 = vld [vmem:[#allocation3 + $0x20] sm:$0xff]
        %v1065 = vld [vmem:[#allocation3 + $0x28] sm:$0xff]
        %v1066 = vld [vmem:[#allocation3 + $0x30] sm:$0xff]
        %v1067 = vld [vmem:[#allocation3 + $0x38] sm:$0xff]
        %v1068 = vld [vmem:[#allocation3 + $0x40] sm:$0xff]
        %v1069 = vld [vmem:[#allocation3 + $0x48] sm:$0xff]
        %v1070 = vadd.f32 %v1060, %v1036
        %v1071 = vadd.f32 %v1061, %v1038
        %v1072 = vadd.f32 %v1062, %v1041
        %v1073 = vadd.f32 %v1063, %v1043
        %v1074 = vadd.f32 %v1064, %v1046
        %v1075 = vadd.f32 %v1065, %v1048
        %v1076 = vadd.f32 %v1066, %v1051
        %v1077 = vadd.f32 %v1067, %v1053
        %v1078 = vadd.f32 %v1068, %v1056
        %v1079 = vadd.f32 %v1069, %v1058
        %1080 = vst [vmem:[#allocation3] sm:$0xff] %v1070
        %1081 = vst [vmem:[#allocation3 + $0x8] sm:$0xff] %v1071
        %1082 = vst [vmem:[#allocation3 + $0x10] sm:$0xff] %v1072
        %1083 = vst [vmem:[#allocation3 + $0x18] sm:$0xff] %v1073
        %1084 = vst [vmem:[#allocation3 + $0x20] sm:$0xff] %v1074
        %1085 = vst [vmem:[#allocation3 + $0x28] sm:$0xff] %v1075
        %1086 = vst [vmem:[#allocation3 + $0x30] sm:$0xff] %v1076
        %1087 = vst [vmem:[#allocation3 + $0x38] sm:$0xff] %v1077
        %1088 = vst [vmem:[#allocation3 + $0x40] sm:$0xff] %v1078
        %1089 = vst [vmem:[#allocation3 + $0x48] sm:$0xff] %v1079
        %v1090 = vld [vmem:[#allocation3] sm:$0xff]
        %v1091 = vld [vmem:[#allocation3 + $0x8] sm:$0xff]
        %v1092 = vld [vmem:[#allocation3 + $0x10] sm:$0xff]
        %v1093 = vld [vmem:[#allocation3 + $0x18] sm:$0xff]
        %v1094 = vld [vmem:[#allocation3 + $0x20] sm:$0xff]
        %v1095 = vld [vmem:[#allocation3 + $0x28] sm:$0xff]
        %v1096 = vld [vmem:[#allocation3 + $0x30] sm:$0xff]
        %v1097 = vld [vmem:[#allocation3 + $0x38] sm:$0xff]
        %v1098 = vld [vmem:[#allocation3 + $0x40] sm:$0xff]
        %v1099 = vld [vmem:[#allocation3 + $0x48] sm:$0xff]
        %v1100 = vld [vmem:[%s2] sm:$0x1]
        %v1102 = vperm.slane %v1100, 0
        %v1104 = vadd.f32 %v1090, %v1102
        %v1105 = vadd.f32 %v1091, %v1102
        %v1106 = vadd.f32 %v1092, %v1102
        %v1107 = vadd.f32 %v1093, %v1102
        %v1108 = vadd.f32 %v1094, %v1102
        %v1109 = vadd.f32 %v1095, %v1102
        %v1110 = vadd.f32 %v1096, %v1102
        %v1111 = vadd.f32 %v1097, %v1102
        %v1112 = vadd.f32 %v1098, %v1102
        %v1113 = vadd.f32 %v1099, %v1102
        %v1114 = vmax.f32 %v1104, 0.0
        %v1115 = vmax.f32 %v1105, 0.0
        %v1116 = vmax.f32 %v1106, 0.0
        %v1117 = vmax.f32 %v1107, 0.0
        %v1118 = vmax.f32 %v1108, 0.0
        %v1119 = vmax.f32 %v1109, 0.0
        %v1120 = vmax.f32 %v1110, 0.0
        %v1121 = vmax.f32 %v1111, 0.0
        %v1122 = vmax.f32 %v1112, 0.0
        %v1123 = vmax.f32 %v1113, 0.0
        %v1124 = vlaneseq
        %v1125 = vshrl.u32 %v1124, 7
        %v1126 = vadd.s32 %v1125, 8
        %v1127 = vadd.s32 %v1125, 16
        %v1128 = vadd.s32 %v1125, 24
        %v1129 = vadd.s32 %v1125, 32
        %v1130 = vadd.s32 %v1125, 40
        %v1131 = vadd.s32 %v1125, 48
        %v1132 = vadd.s32 %v1125, 56
        %v1133 = vadd.s32 %v1125, 64
        %v1134 = vadd.s32 %v1125, 72
        %vm1135 = vcmp.lt.s32.totalorder %v1125, 0
        %v1136 = vsub.s32 0, %v1125
        %v1137 = vsel %vm1135, %v1136, %v1125
        %v1138 = vand.u32 %v1137, 65535
        %v1139 = vshrl.u32 %v1137, 16
        %v1141 = vmul.u32 %v1138, 52429
        %v1142 = vmul.u32 %v1138, 52428
        %v1143 = vmul.u32 %v1139, 52429
        %v1144 = vmul.u32 %v1139, 52428
        %v1145 = vshll.u32 %v1142, 16
        %v1146 = vshrl.u32 %v1142, 16
        %v1147 = vshll.u32 %v1143, 16
        %v1148 = vshrl.u32 %v1143, 16
        %vm1149 = vc.u32 %v1141, %v1145
        %v1150 = vsel %vm1149, 1, 0
        %v1151 = vadd.s32 %v1141, %v1145
        %v1152 = vadd.s32 %v1144, %v1150
        %vm1153 = vc.u32 %v1151, %v1147
        %v1154 = vsel %vm1153, 1, 0
        %v1155 = vadd.s32 %v1151, %v1147
        %v1156 = vadd.s32 %v1152, %v1154
        %v1157 = vadd.s32 %v1156, %v1146
        %v1158 = vadd.s32 %v1157, %v1148
        %v1159 = vshrl.u32 %v1158, 3
        %v1160 = vmul.u32 %v1159, 10
        %v1161 = vsub.s32 %v1137, %v1160
        %v1162 = vsub.s32 0, %v1161
        %v1163 = vsel %vm1135, %v1162, %v1161
        %vm1164 = vcmp.lt.s32.totalorder %v1126, 0
        %v1165 = vsub.s32 0, %v1126
        %v1166 = vsel %vm1164, %v1165, %v1126
        %v1167 = vand.u32 %v1166, 65535
        %v1168 = vshrl.u32 %v1166, 16
        %v1170 = vmul.u32 %v1167, 52429
        %v1171 = vmul.u32 %v1167, 52428
        %v1172 = vmul.u32 %v1168, 52429
        %v1173 = vmul.u32 %v1168, 52428
        %v1174 = vshll.u32 %v1171, 16
        %v1175 = vshrl.u32 %v1171, 16
        %v1176 = vshll.u32 %v1172, 16
        %v1177 = vshrl.u32 %v1172, 16
        %vm1178 = vc.u32 %v1170, %v1174
        %v1179 = vsel %vm1178, 1, 0
        %v1180 = vadd.s32 %v1170, %v1174
        %v1181 = vadd.s32 %v1173, %v1179
        %vm1182 = vc.u32 %v1180, %v1176
        %v1183 = vsel %vm1182, 1, 0
        %v1184 = vadd.s32 %v1180, %v1176
        %v1185 = vadd.s32 %v1181, %v1183
        %v1186 = vadd.s32 %v1185, %v1175
        %v1187 = vadd.s32 %v1186, %v1177
        %v1188 = vshrl.u32 %v1187, 3
        %v1189 = vmul.u32 %v1188, 10
        %v1190 = vsub.s32 %v1166, %v1189
        %v1191 = vsub.s32 0, %v1190
        %v1192 = vsel %vm1164, %v1191, %v1190
        %vm1193 = vcmp.lt.s32.totalorder %v1127, 0
        %v1194 = vsub.s32 0, %v1127
        %v1195 = vsel %vm1193, %v1194, %v1127
        %v1196 = vand.u32 %v1195, 65535
        %v1197 = vshrl.u32 %v1195, 16
        %v1199 = vmul.u32 %v1196, 52429
        %v1200 = vmul.u32 %v1196, 52428
        %v1201 = vmul.u32 %v1197, 52429
        %v1202 = vmul.u32 %v1197, 52428
        %v1203 = vshll.u32 %v1200, 16
        %v1204 = vshrl.u32 %v1200, 16
        %v1205 = vshll.u32 %v1201, 16
        %v1206 = vshrl.u32 %v1201, 16
        %vm1207 = vc.u32 %v1199, %v1203
        %v1208 = vsel %vm1207, 1, 0
        %v1209 = vadd.s32 %v1199, %v1203
        %v1210 = vadd.s32 %v1202, %v1208
        %vm1211 = vc.u32 %v1209, %v1205
        %v1212 = vsel %vm1211, 1, 0
        %v1213 = vadd.s32 %v1209, %v1205
        %v1214 = vadd.s32 %v1210, %v1212
        %v1215 = vadd.s32 %v1214, %v1204
        %v1216 = vadd.s32 %v1215, %v1206
        %v1217 = vshrl.u32 %v1216, 3
        %v1218 = vmul.u32 %v1217, 10
        %v1219 = vsub.s32 %v1195, %v1218
        %v1220 = vsub.s32 0, %v1219
        %v1221 = vsel %vm1193, %v1220, %v1219
        %vm1222 = vcmp.lt.s32.totalorder %v1128, 0
        %v1223 = vsub.s32 0, %v1128
        %v1224 = vsel %vm1222, %v1223, %v1128
        %v1225 = vand.u32 %v1224, 65535
        %v1226 = vshrl.u32 %v1224, 16
        %v1228 = vmul.u32 %v1225, 52429
        %v1229 = vmul.u32 %v1225, 52428
        %v1230 = vmul.u32 %v1226, 52429
        %v1231 = vmul.u32 %v1226, 52428
        %v1232 = vshll.u32 %v1229, 16
        %v1233 = vshrl.u32 %v1229, 16
        %v1234 = vshll.u32 %v1230, 16
        %v1235 = vshrl.u32 %v1230, 16
        %vm1236 = vc.u32 %v1228, %v1232
        %v1237 = vsel %vm1236, 1, 0
        %v1238 = vadd.s32 %v1228, %v1232
        %v1239 = vadd.s32 %v1231, %v1237
        %vm1240 = vc.u32 %v1238, %v1234
        %v1241 = vsel %vm1240, 1, 0
        %v1242 = vadd.s32 %v1238, %v1234
        %v1243 = vadd.s32 %v1239, %v1241
        %v1244 = vadd.s32 %v1243, %v1233
        %v1245 = vadd.s32 %v1244, %v1235
        %v1246 = vshrl.u32 %v1245, 3
        %v1247 = vmul.u32 %v1246, 10
        %v1248 = vsub.s32 %v1224, %v1247
        %v1249 = vsub.s32 0, %v1248
        %v1250 = vsel %vm1222, %v1249, %v1248
        %vm1251 = vcmp.lt.s32.totalorder %v1129, 0
        %v1252 = vsub.s32 0, %v1129
        %v1253 = vsel %vm1251, %v1252, %v1129
        %v1254 = vand.u32 %v1253, 65535
        %v1255 = vshrl.u32 %v1253, 16
        %v1257 = vmul.u32 %v1254, 52429
        %v1258 = vmul.u32 %v1254, 52428
        %v1259 = vmul.u32 %v1255, 52429
        %v1260 = vmul.u32 %v1255, 52428
        %v1261 = vshll.u32 %v1258, 16
        %v1262 = vshrl.u32 %v1258, 16
        %v1263 = vshll.u32 %v1259, 16
        %v1264 = vshrl.u32 %v1259, 16
        %vm1265 = vc.u32 %v1257, %v1261
        %v1266 = vsel %vm1265, 1, 0
        %v1267 = vadd.s32 %v1257, %v1261
        %v1268 = vadd.s32 %v1260, %v1266
        %vm1269 = vc.u32 %v1267, %v1263
        %v1270 = vsel %vm1269, 1, 0
        %v1271 = vadd.s32 %v1267, %v1263
        %v1272 = vadd.s32 %v1268, %v1270
        %v1273 = vadd.s32 %v1272, %v1262
        %v1274 = vadd.s32 %v1273, %v1264
        %v1275 = vshrl.u32 %v1274, 3
        %v1276 = vmul.u32 %v1275, 10
        %v1277 = vsub.s32 %v1253, %v1276
        %v1278 = vsub.s32 0, %v1277
        %v1279 = vsel %vm1251, %v1278, %v1277
        %vm1280 = vcmp.lt.s32.totalorder %v1130, 0
        %v1281 = vsub.s32 0, %v1130
        %v1282 = vsel %vm1280, %v1281, %v1130
        %v1283 = vand.u32 %v1282, 65535
        %v1284 = vshrl.u32 %v1282, 16
        %v1286 = vmul.u32 %v1283, 52429
        %v1287 = vmul.u32 %v1283, 52428
        %v1288 = vmul.u32 %v1284, 52429
        %v1289 = vmul.u32 %v1284, 52428
        %v1290 = vshll.u32 %v1287, 16
        %v1291 = vshrl.u32 %v1287, 16
        %v1292 = vshll.u32 %v1288, 16
        %v1293 = vshrl.u32 %v1288, 16
        %vm1294 = vc.u32 %v1286, %v1290
        %v1295 = vsel %vm1294, 1, 0
        %v1296 = vadd.s32 %v1286, %v1290
        %v1297 = vadd.s32 %v1289, %v1295
        %vm1298 = vc.u32 %v1296, %v1292
        %v1299 = vsel %vm1298, 1, 0
        %v1300 = vadd.s32 %v1296, %v1292
        %v1301 = vadd.s32 %v1297, %v1299
        %v1302 = vadd.s32 %v1301, %v1291
        %v1303 = vadd.s32 %v1302, %v1293
        %v1304 = vshrl.u32 %v1303, 3
        %v1305 = vmul.u32 %v1304, 10
        %v1306 = vsub.s32 %v1282, %v1305
        %v1307 = vsub.s32 0, %v1306
        %v1308 = vsel %vm1280, %v1307, %v1306
        %vm1309 = vcmp.lt.s32.totalorder %v1131, 0
        %v1310 = vsub.s32 0, %v1131
        %v1311 = vsel %vm1309, %v1310, %v1131
        %v1312 = vand.u32 %v1311, 65535
        %v1313 = vshrl.u32 %v1311, 16
        %v1315 = vmul.u32 %v1312, 52429
        %v1316 = vmul.u32 %v1312, 52428
        %v1317 = vmul.u32 %v1313, 52429
        %v1318 = vmul.u32 %v1313, 52428
        %v1319 = vshll.u32 %v1316, 16
        %v1320 = vshrl.u32 %v1316, 16
        %v1321 = vshll.u32 %v1317, 16
        %v1322 = vshrl.u32 %v1317, 16
        %vm1323 = vc.u32 %v1315, %v1319
        %v1324 = vsel %vm1323, 1, 0
        %v1325 = vadd.s32 %v1315, %v1319
        %v1326 = vadd.s32 %v1318, %v1324
        %vm1327 = vc.u32 %v1325, %v1321
        %v1328 = vsel %vm1327, 1, 0
        %v1329 = vadd.s32 %v1325, %v1321
        %v1330 = vadd.s32 %v1326, %v1328
        %v1331 = vadd.s32 %v1330, %v1320
        %v1332 = vadd.s32 %v1331, %v1322
        %v1333 = vshrl.u32 %v1332, 3
        %v1334 = vmul.u32 %v1333, 10
        %v1335 = vsub.s32 %v1311, %v1334
        %v1336 = vsub.s32 0, %v1335
        %v1337 = vsel %vm1309, %v1336, %v1335
        %vm1338 = vcmp.lt.s32.totalorder %v1132, 0
        %v1339 = vsub.s32 0, %v1132
        %v1340 = vsel %vm1338, %v1339, %v1132
        %v1341 = vand.u32 %v1340, 65535
        %v1342 = vshrl.u32 %v1340, 16
        %v1344 = vmul.u32 %v1341, 52429
        %v1345 = vmul.u32 %v1341, 52428
        %v1346 = vmul.u32 %v1342, 52429
        %v1347 = vmul.u32 %v1342, 52428
        %v1348 = vshll.u32 %v1345, 16
        %v1349 = vshrl.u32 %v1345, 16
        %v1350 = vshll.u32 %v1346, 16
        %v1351 = vshrl.u32 %v1346, 16
        %vm1352 = vc.u32 %v1344, %v1348
        %v1353 = vsel %vm1352, 1, 0
        %v1354 = vadd.s32 %v1344, %v1348
        %v1355 = vadd.s32 %v1347, %v1353
        %vm1356 = vc.u32 %v1354, %v1350
        %v1357 = vsel %vm1356, 1, 0
        %v1358 = vadd.s32 %v1354, %v1350
        %v1359 = vadd.s32 %v1355, %v1357
        %v1360 = vadd.s32 %v1359, %v1349
        %v1361 = vadd.s32 %v1360, %v1351
        %v1362 = vshrl.u32 %v1361, 3
        %v1363 = vmul.u32 %v1362, 10
        %v1364 = vsub.s32 %v1340, %v1363
        %v1365 = vsub.s32 0, %v1364
        %v1366 = vsel %vm1338, %v1365, %v1364
        %vm1367 = vcmp.lt.s32.totalorder %v1133, 0
        %v1368 = vsub.s32 0, %v1133
        %v1369 = vsel %vm1367, %v1368, %v1133
        %v1370 = vand.u32 %v1369, 65535
        %v1371 = vshrl.u32 %v1369, 16
        %v1373 = vmul.u32 %v1370, 52429
        %v1374 = vmul.u32 %v1370, 52428
        %v1375 = vmul.u32 %v1371, 52429
        %v1376 = vmul.u32 %v1371, 52428
        %v1377 = vshll.u32 %v1374, 16
        %v1378 = vshrl.u32 %v1374, 16
        %v1379 = vshll.u32 %v1375, 16
        %v1380 = vshrl.u32 %v1375, 16
        %vm1381 = vc.u32 %v1373, %v1377
        %v1382 = vsel %vm1381, 1, 0
        %v1383 = vadd.s32 %v1373, %v1377
        %v1384 = vadd.s32 %v1376, %v1382
        %vm1385 = vc.u32 %v1383, %v1379
        %v1386 = vsel %vm1385, 1, 0
        %v1387 = vadd.s32 %v1383, %v1379
        %v1388 = vadd.s32 %v1384, %v1386
        %v1389 = vadd.s32 %v1388, %v1378
        %v1390 = vadd.s32 %v1389, %v1380
        %v1391 = vshrl.u32 %v1390, 3
        %v1392 = vmul.u32 %v1391, 10
        %v1393 = vsub.s32 %v1369, %v1392
        %v1394 = vsub.s32 0, %v1393
        %v1395 = vsel %vm1367, %v1394, %v1393
        %vm1396 = vcmp.lt.s32.totalorder %v1134, 0
        %v1397 = vsub.s32 0, %v1134
        %v1398 = vsel %vm1396, %v1397, %v1134
        %v1399 = vand.u32 %v1398, 65535
        %v1400 = vshrl.u32 %v1398, 16
        %v1402 = vmul.u32 %v1399, 52429
        %v1403 = vmul.u32 %v1399, 52428
        %v1404 = vmul.u32 %v1400, 52429
        %v1405 = vmul.u32 %v1400, 52428
        %v1406 = vshll.u32 %v1403, 16
        %v1407 = vshrl.u32 %v1403, 16
        %v1408 = vshll.u32 %v1404, 16
        %v1409 = vshrl.u32 %v1404, 16
        %vm1410 = vc.u32 %v1402, %v1406
        %v1411 = vsel %vm1410, 1, 0
        %v1412 = vadd.s32 %v1402, %v1406
        %v1413 = vadd.s32 %v1405, %v1411
        %vm1414 = vc.u32 %v1412, %v1408
        %v1415 = vsel %vm1414, 1, 0
        %v1416 = vadd.s32 %v1412, %v1408
        %v1417 = vadd.s32 %v1413, %v1415
        %v1418 = vadd.s32 %v1417, %v1407
        %v1419 = vadd.s32 %v1418, %v1409
        %v1420 = vshrl.u32 %v1419, 3
        %v1421 = vmul.u32 %v1420, 10
        %v1422 = vsub.s32 %v1398, %v1421
        %v1423 = vsub.s32 0, %v1422
        %v1424 = vsel %vm1396, %v1423, %v1422
        %vm1425 = vcmp.ne.s32.totalorder %v1163, 0
        %vm1426 = vcmp.ne.s32.totalorder %v1192, 0
        %vm1427 = vcmp.ne.s32.totalorder %v1221, 0
        %vm1428 = vcmp.ne.s32.totalorder %v1250, 0
        %vm1429 = vcmp.ne.s32.totalorder %v1279, 0
        %vm1430 = vcmp.ne.s32.totalorder %v1308, 0
        %vm1431 = vcmp.ne.s32.totalorder %v1337, 0
        %vm1432 = vcmp.ne.s32.totalorder %v1366, 0
        %vm1433 = vcmp.ne.s32.totalorder %v1395, 0
        %vm1434 = vcmp.ne.s32.totalorder %v1424, 0
        %vm1435 = vcmp.lt.s32.totalorder %v1163, 0
        %vm1436 = vcmp.lt.s32.totalorder %v1192, 0
        %vm1437 = vcmp.lt.s32.totalorder %v1221, 0
        %vm1438 = vcmp.lt.s32.totalorder %v1250, 0
        %vm1439 = vcmp.lt.s32.totalorder %v1279, 0
        %vm1440 = vcmp.lt.s32.totalorder %v1308, 0
        %vm1441 = vcmp.lt.s32.totalorder %v1337, 0
        %vm1442 = vcmp.lt.s32.totalorder %v1366, 0
        %vm1443 = vcmp.lt.s32.totalorder %v1395, 0
        %vm1444 = vcmp.lt.s32.totalorder %v1424, 0
        %vm1445 = vmand %vm1435, %vm1425
        %vm1446 = vmand %vm1436, %vm1426
        %vm1447 = vmand %vm1437, %vm1427
        %vm1448 = vmand %vm1438, %vm1428
        %vm1449 = vmand %vm1439, %vm1429
        %vm1450 = vmand %vm1440, %vm1430
        %vm1451 = vmand %vm1441, %vm1431
        %vm1452 = vmand %vm1442, %vm1432
        %vm1453 = vmand %vm1443, %vm1433
        %vm1454 = vmand %vm1444, %vm1434
        %v1455 = vadd.s32 %v1163, 10
        %v1456 = vadd.s32 %v1192, 10
        %v1457 = vadd.s32 %v1221, 10
        %v1458 = vadd.s32 %v1250, 10
        %v1459 = vadd.s32 %v1279, 10
        %v1460 = vadd.s32 %v1308, 10
        %v1461 = vadd.s32 %v1337, 10
        %v1462 = vadd.s32 %v1366, 10
        %v1463 = vadd.s32 %v1395, 10
        %v1464 = vadd.s32 %v1424, 10
        %v1465 = vsel %vm1445, %v1455, %v1163
        %v1466 = vsel %vm1446, %v1456, %v1192
        %v1467 = vsel %vm1447, %v1457, %v1221
        %v1468 = vsel %vm1448, %v1458, %v1250
        %v1469 = vsel %vm1449, %v1459, %v1279
        %v1470 = vsel %vm1450, %v1460, %v1308
        %v1471 = vsel %vm1451, %v1461, %v1337
        %v1472 = vsel %vm1452, %v1462, %v1366
        %v1473 = vsel %vm1453, %v1463, %v1395
        %v1474 = vsel %vm1454, %v1464, %v1424
        %vm1475 = vcmp.lt.s32.totalorder %v1465, 8
        %vm1476 = vcmp.lt.s32.totalorder %v1466, 8
        %vm1477 = vcmp.lt.s32.totalorder %v1467, 8
        %vm1478 = vcmp.lt.s32.totalorder %v1468, 8
        %vm1479 = vcmp.lt.s32.totalorder %v1469, 8
        %vm1480 = vcmp.lt.s32.totalorder %v1470, 8
        %vm1481 = vcmp.lt.s32.totalorder %v1471, 8
        %vm1482 = vcmp.lt.s32.totalorder %v1472, 8
        %vm1483 = vcmp.lt.s32.totalorder %v1473, 8
        %vm1484 = vcmp.lt.s32.totalorder %v1474, 8
        %v1485 = vsel %vm1475, %v1114, 0.0
        %v1486 = vsel %vm1476, %v1115, 0.0
        %v1487 = vsel %vm1477, %v1116, 0.0
        %v1488 = vsel %vm1478, %v1117, 0.0
        %v1489 = vsel %vm1479, %v1118, 0.0
        %v1490 = vsel %vm1480, %v1119, 0.0
        %v1491 = vsel %vm1481, %v1120, 0.0
        %v1492 = vsel %vm1482, %v1121, 0.0
        %v1493 = vsel %vm1483, %v1122, 0.0
        %v1494 = vsel %vm1484, %v1123, 0.0
        %1495 = vst [vmem:[#allocation2] sm:$0xf] 0
        %1496 = vst [vmem:[#allocation2 + $0x4] sm:$0xf] 0
        %1497 = vst [vmem:[#allocation2 + $0x8] sm:$0xf] 0
        %1498 = vst [vmem:[#allocation2 + $0xc] sm:$0xf] 0
        %1499 = vst [vmem:[#allocation2 + $0x10] sm:$0xf] 0
        %1500 = vst [vmem:[#allocation2 + $0x14] sm:$0xf] 0
        %1501 = vst [vmem:[#allocation2 + $0x18] sm:$0xf] 0
        %1502 = vst [vmem:[#allocation2 + $0x1c] sm:$0xf] 0
        %1503 = vst [vmem:[#allocation2 + $0x20] sm:$0xf] 0
        %1504 = vst [vmem:[#allocation2 + $0x24] sm:$0xf] 0
        %1505 = vst [vmem:[#allocation2 + $0x28] sm:$0xf] 0
        %1506 = vst [vmem:[#allocation2 + $0x2c] sm:$0xf] 0
        %1507 = vst [vmem:[#allocation2 + $0x30] sm:$0xf] 0
        %1508 = vst [vmem:[#allocation2 + $0x34] sm:$0x7] 0
        %v1509 = vpack.c.bf16 %v1485, %v1485
        %v1510 = vpack.c.bf16 %v1486, %v1486
        %v1511 = vpack.c.bf16 %v1487, %v1487
        %v1512 = vpack.c.bf16 %v1488, %v1488
        %v1513 = vpack.c.bf16 %v1489, %v1489
        %v1514 = vpack.c.bf16 %v1490, %v1490
        %v1515 = vpack.c.bf16 %v1491, %v1491
        %v1516 = vpack.c.bf16 %v1492, %v1492
        %v1517 = vpack.c.bf16 %v1493, %v1493
        %v1518 = vpack.c.bf16 %v1494, %v1494
        %vm1519 = vsmask.f32 1280
        %vm1520 = vsmask.f32 5392
        %vm1521 = vmor %vm1519, %vm1520
        %v1523 = vshrl.u32 %v1509, 16
        %v1525 = vrot.slane %v1523, 6
        %v1526 = vshll.u32 %v1509, 16
        %v1528 = vrot.slane %v1526, 7
        %v1529 = vor.u32 %v1525, %v1528
        %v1530 = vrot.slane %v1529, 4
        %v1532 = vshrl.u32 %v1510, 16
        %v1534 = vrot.slane %v1532, 6
        %v1535 = vshll.u32 %v1510, 16
        %v1537 = vrot.slane %v1535, 7
        %v1538 = vor.u32 %v1534, %v1537
        %v1539 = vsel %vm1521, %v1530, %v1538
        %v1540 = vrot.slane %v1538, 4
        %v1542 = vshrl.u32 %v1511, 16
        %v1544 = vrot.slane %v1542, 6
        %v1545 = vshll.u32 %v1511, 16
        %v1547 = vrot.slane %v1545, 7
        %v1548 = vor.u32 %v1544, %v1547
        %v1549 = vsel %vm1521, %v1540, %v1548
        %v1550 = vrot.slane %v1548, 4
        %v1552 = vshrl.u32 %v1512, 16
        %v1554 = vrot.slane %v1552, 6
        %v1555 = vshll.u32 %v1512, 16
        %v1557 = vrot.slane %v1555, 7
        %v1558 = vor.u32 %v1554, %v1557
        %v1559 = vsel %vm1521, %v1550, %v1558
        %v1560 = vrot.slane %v1558, 4
        %v1562 = vshrl.u32 %v1513, 16
        %v1564 = vrot.slane %v1562, 6
        %v1565 = vshll.u32 %v1513, 16
        %v1567 = vrot.slane %v1565, 7
        %v1568 = vor.u32 %v1564, %v1567
        %v1569 = vsel %vm1521, %v1560, %v1568
        %v1570 = vrot.slane %v1568, 4
        %v1572 = vshrl.u32 %v1514, 16
        %v1574 = vrot.slane %v1572, 6
        %v1575 = vshll.u32 %v1514, 16
        %v1577 = vrot.slane %v1575, 7
        %v1578 = vor.u32 %v1574, %v1577
        %v1579 = vsel %vm1521, %v1570, %v1578
        %v1580 = vrot.slane %v1578, 4
        %v1582 = vshrl.u32 %v1515, 16
        %v1584 = vrot.slane %v1582, 6
        %v1585 = vshll.u32 %v1515, 16
        %v1587 = vrot.slane %v1585, 7
        %v1588 = vor.u32 %v1584, %v1587
        %v1589 = vsel %vm1521, %v1580, %v1588
        %v1590 = vrot.slane %v1588, 4
        %v1592 = vshrl.u32 %v1516, 16
        %v1594 = vrot.slane %v1592, 6
        %v1595 = vshll.u32 %v1516, 16
        %v1597 = vrot.slane %v1595, 7
        %v1598 = vor.u32 %v1594, %v1597
        %v1599 = vsel %vm1521, %v1590, %v1598
        %v1600 = vrot.slane %v1598, 4
        %v1602 = vshrl.u32 %v1517, 16
        %v1604 = vrot.slane %v1602, 6
        %v1605 = vshll.u32 %v1517, 16
        %v1607 = vrot.slane %v1605, 7
        %v1608 = vor.u32 %v1604, %v1607
        %v1609 = vsel %vm1521, %v1600, %v1608
        %v1610 = vrot.slane %v1608, 4
        %v1612 = vshrl.u32 %v1518, 16
        %v1614 = vrot.slane %v1612, 6
        %v1615 = vshll.u32 %v1518, 16
        %v1617 = vrot.slane %v1615, 7
        %v1618 = vor.u32 %v1614, %v1617
        %v1619 = vsel %vm1521, %v1610, %v1618
        %v1620 = vrot.slane %v1618, 4
        %vm1632 = vcmask 1043457
        %vm1633 = vsmask.f32 7942
        %vm1634 = vmand %vm1632, %vm1633
        %v1635 = vld [vmem:[#allocation2 + $0x4] sm:$0xe]
        %v1636 = vsel %vm1634, %v1529, %v1635
        %1637 = vst [vmem:[#allocation2 + $0x4] sm:$0xe] %v1636
        %1638 = vst [vmem:[#allocation2 + $0x8] sm:$0xf] %v1539
        %1639 = vst [vmem:[#allocation2 + $0xc] sm:$0xf] %v1549
        %1640 = vst [vmem:[#allocation2 + $0x10] sm:$0xf] %v1559
        %1641 = vst [vmem:[#allocation2 + $0x14] sm:$0xf] %v1569
        %1642 = vst [vmem:[#allocation2 + $0x18] sm:$0xf] %v1579
        %1643 = vst [vmem:[#allocation2 + $0x1c] sm:$0xf] %v1589
        %1644 = vst [vmem:[#allocation2 + $0x20] sm:$0xf] %v1599
        %1645 = vst [vmem:[#allocation2 + $0x24] sm:$0xf] %v1609
        %1646 = vst [vmem:[#allocation2 + $0x28] sm:$0xf] %v1619
        %vm1647 = vcmask 1041408
        %vm1648 = vmand %vm1647, %vm1519
        %v1649 = vld [vmem:[#allocation2 + $0x2c] sm:$0x3]
        %v1650 = vsel %vm1648, %v1620, %v1649
        %1651 = vst [vmem:[#allocation2 + $0x2c] sm:$0x3] %v1650
        %v1652 = vld [vmem:[#allocation2] sm:$0xf]
        %v1653 = vld [vmem:[#allocation2 + $0x4] sm:$0xf]
        %v1654 = vld [vmem:[#allocation2 + $0x8] sm:$0xf]
        %v1655 = vld [vmem:[#allocation2 + $0xc] sm:$0xf]
        %v1656 = vld [vmem:[#allocation2 + $0x10] sm:$0xf]
        %v1657 = vld [vmem:[#allocation2 + $0x14] sm:$0xf]
        %v1658 = vld [vmem:[#allocation2 + $0x18] sm:$0xf]
        %v1659 = vld [vmem:[#allocation2 + $0x1c] sm:$0xf]
        %v1660 = vld [vmem:[#allocation2 + $0x20] sm:$0xf]
        %v1661 = vld [vmem:[#allocation2 + $0x24] sm:$0xf]
        %v1662 = vld [vmem:[#allocation7] sm:$0xf]
        %v1663 = vld [vmem:[#allocation7 + $0x4] sm:$0xf]
        %v1664 = vld [vmem:[#allocation7 + $0x8] sm:$0xf]
        %v1665 = vld [vmem:[#allocation7 + $0xc] sm:$0xf]
        %v1666 = vld [vmem:[#allocation7 + $0x10] sm:$0xf]
        %v1667 = vld [vmem:[#allocation7 + $0x14] sm:$0xf]
        %v1668 = vld [vmem:[#allocation7 + $0x18] sm:$0xf]
        %v1669 = vld [vmem:[#allocation7 + $0x1c] sm:$0xf]
        %v1670 = vld [vmem:[#allocation7 + $0x20] sm:$0xf]
        %v1671 = vld [vmem:[#allocation7 + $0x24] sm:$0xf]
        %v1672 = vld [vmem:[#allocation7 + $0x28] sm:$0xf]
        %v1673 = vld [vmem:[#allocation7 + $0x2c] sm:$0xf]
        %v1674 = vld [vmem:[#allocation7 + $0x30] sm:$0xf]
        %v1675 = vld [vmem:[#allocation7 + $0x34] sm:$0xf]
        %v1676 = vld [vmem:[#allocation7 + $0x38] sm:$0xf]
        %v1677 = vld [vmem:[#allocation7 + $0x3c] sm:$0xf]
        %v1688 = vunpack.c.l.b16 %v1652
        %v1689 = vunpack.c.l.b16 %v1653
        %v1690 = vunpack.c.l.b16 %v1654
        %v1691 = vunpack.c.l.b16 %v1655
        %v1692 = vunpack.c.l.b16 %v1656
        %v1693 = vunpack.c.l.b16 %v1657
        %v1694 = vunpack.c.l.b16 %v1658
        %v1695 = vunpack.c.l.b16 %v1659
        %v1696 = vunpack.c.l.b16 %v1660
        %v1697 = vunpack.c.l.b16 %v1661
        %v1698 = vpack.c.b16 %v1689, %v1688
        %v1699 = vpack.c.b16 %v1691, %v1690
        %v1700 = vpack.c.b16 %v1693, %v1692
        %v1701 = vpack.c.b16 %v1695, %v1694
        %v1702 = vpack.c.b16 %v1697, %v1696
        %v1724 = vunpack.c.l.b16 %v1662
        %v1725 = vunpack.c.l.b16 %v1663
        %v1726 = vunpack.c.l.b16 %v1664
        %v1727 = vunpack.c.l.b16 %v1665
        %v1728 = vunpack.c.l.b16 %v1666
        %v1729 = vunpack.c.l.b16 %v1667
        %v1730 = vunpack.c.l.b16 %v1668
        %v1731 = vunpack.c.l.b16 %v1669
        %v1732 = vunpack.c.l.b16 %v1670
        %v1733 = vunpack.c.l.b16 %v1671
        %v1734 = vunpack.c.l.b16 %v1672
        %v1735 = vunpack.c.l.b16 %v1673
        %v1736 = vunpack.c.l.b16 %v1674
        %v1737 = vunpack.c.l.b16 %v1675
        %v1738 = vunpack.c.l.b16 %v1676
        %v1739 = vunpack.c.l.b16 %v1677
        %v1740 = vpack.c.b16 %v1725, %v1724
        %v1741 = vpack.c.b16 %v1727, %v1726
        %v1742 = vpack.c.b16 %v1729, %v1728
        %v1743 = vpack.c.b16 %v1731, %v1730
        %v1744 = vpack.c.b16 %v1733, %v1732
        %v1745 = vpack.c.b16 %v1735, %v1734
        %v1746 = vpack.c.b16 %v1737, %v1736
        %v1747 = vpack.c.b16 %v1739, %v1738
        %1756 = vmatpush.bf16.msra.mxu0 %v1747
        %1757 = vmatpush.bf16.msra.mxu0 %v1746
        %1758 = vmatpush.bf16.msra.mxu0 %v1745
        %1759 = vmatpush.bf16.msra.mxu0 %v1744
        %1760 = vmatpush.bf16.msra.mxu0 %v1743
        %1761 = vmatpush.bf16.msra.mxu0 %v1742
        %1762 = vmatpush.bf16.msra.mxu0 %v1741
        %1763 = vmatpush.bf16.msra.mxu0 %v1740
        %1764 = vmatmul.bf16.gmra.mxu0 %v1698
        %v1765 = vpop.f32.mrf.mxu0
        %v1766 = vadd.f32 0.0, %v1765
        %v1767 = vpop.f32.mrf.mxu0
        %v1768 = vadd.f32 0.0, %v1767
        %1769 = vmatmul.bf16.gmra.mxu0 %v1699
        %v1770 = vpop.f32.mrf.mxu0
        %v1771 = vadd.f32 0.0, %v1770
        %v1772 = vpop.f32.mrf.mxu0
        %v1773 = vadd.f32 0.0, %v1772
        %1774 = vmatmul.bf16.gmra.mxu0 %v1700
        %v1775 = vpop.f32.mrf.mxu0
        %v1776 = vadd.f32 0.0, %v1775
        %v1777 = vpop.f32.mrf.mxu0
        %v1778 = vadd.f32 0.0, %v1777
        %1779 = vmatmul.bf16.gmra.mxu0 %v1701
        %v1780 = vpop.f32.mrf.mxu0
        %v1781 = vadd.f32 0.0, %v1780
        %v1782 = vpop.f32.mrf.mxu0
        %v1783 = vadd.f32 0.0, %v1782
        %1784 = vmatmul.bf16.gmra.mxu0 %v1702
        %v1785 = vpop.f32.mrf.mxu0
        %v1786 = vadd.f32 0.0, %v1785
        %v1787 = vpop.f32.mrf.mxu0
        %v1788 = vadd.f32 0.0, %v1787
        %1789 = vdwg.mxu0
        %1790 = vst [vmem:[#allocation3] sm:$0xff] %v1766
        %1791 = vst [vmem:[#allocation3 + $0x8] sm:$0xff] %v1768
        %1792 = vst [vmem:[#allocation3 + $0x10] sm:$0xff] %v1771
        %1793 = vst [vmem:[#allocation3 + $0x18] sm:$0xff] %v1773
        %1794 = vst [vmem:[#allocation3 + $0x20] sm:$0xff] %v1776
        %1795 = vst [vmem:[#allocation3 + $0x28] sm:$0xff] %v1778
        %1796 = vst [vmem:[#allocation3 + $0x30] sm:$0xff] %v1781
        %1797 = vst [vmem:[#allocation3 + $0x38] sm:$0xff] %v1783
        %1798 = vst [vmem:[#allocation3 + $0x40] sm:$0xff] %v1786
        %1799 = vst [vmem:[#allocation3 + $0x48] sm:$0xff] %v1788
        %v1800 = vld [vmem:[#allocation2] sm:$0xf]
        %v1801 = vld [vmem:[#allocation2 + $0x4] sm:$0xf]
        %v1802 = vld [vmem:[#allocation2 + $0x8] sm:$0xf]
        %v1803 = vld [vmem:[#allocation2 + $0xc] sm:$0xf]
        %v1804 = vld [vmem:[#allocation2 + $0x10] sm:$0xf]
        %v1805 = vld [vmem:[#allocation2 + $0x14] sm:$0xf]
        %v1806 = vld [vmem:[#allocation2 + $0x18] sm:$0xf]
        %v1807 = vld [vmem:[#allocation2 + $0x1c] sm:$0xf]
        %v1808 = vld [vmem:[#allocation2 + $0x20] sm:$0xf]
        %v1809 = vld [vmem:[#allocation2 + $0x24] sm:$0xf]
        %v1810 = vld [vmem:[#allocation2 + $0x28] sm:$0x1]
        %s1811 = scalar_lea.vmem [#allocation7], 64
        %v1812 = vld [vmem:[%s1811] sm:$0xf]
        %v1813 = vld [vmem:[%s1811 + $0x4] sm:$0xf]
        %v1814 = vld [vmem:[%s1811 + $0x8] sm:$0xf]
        %v1815 = vld [vmem:[%s1811 + $0xc] sm:$0xf]
        %v1816 = vld [vmem:[%s1811 + $0x10] sm:$0xf]
        %v1817 = vld [vmem:[%s1811 + $0x14] sm:$0xf]
        %v1818 = vld [vmem:[%s1811 + $0x18] sm:$0xf]
        %v1819 = vld [vmem:[%s1811 + $0x1c] sm:$0xf]
        %v1820 = vld [vmem:[%s1811 + $0x20] sm:$0xf]
        %v1821 = vld [vmem:[%s1811 + $0x24] sm:$0xf]
        %v1822 = vld [vmem:[%s1811 + $0x28] sm:$0xf]
        %v1823 = vld [vmem:[%s1811 + $0x2c] sm:$0xf]
        %v1824 = vld [vmem:[%s1811 + $0x30] sm:$0xf]
        %v1825 = vld [vmem:[%s1811 + $0x34] sm:$0xf]
        %v1826 = vld [vmem:[%s1811 + $0x38] sm:$0xf]
        %v1827 = vld [vmem:[%s1811 + $0x3c] sm:$0xf]
        %v1839 = vunpack.c.l.b16 %v1800
        %v1840 = vunpack.c.l.b16 %v1801
        %v1841 = vunpack.c.l.b16 %v1802
        %v1842 = vunpack.c.l.b16 %v1803
        %v1843 = vunpack.c.l.b16 %v1804
        %v1844 = vunpack.c.l.b16 %v1805
        %v1845 = vunpack.c.l.b16 %v1806
        %v1846 = vunpack.c.l.b16 %v1807
        %v1847 = vunpack.c.l.b16 %v1808
        %v1848 = vunpack.c.l.b16 %v1809
        %v1849 = vunpack.c.l.b16 %v1810
        %v1850 = vpack.c.b16 %v1840, %v1839
        %v1851 = vpack.c.b16 %v1842, %v1841
        %v1852 = vpack.c.b16 %v1844, %v1843
        %v1853 = vpack.c.b16 %v1846, %v1845
        %v1854 = vpack.c.b16 %v1848, %v1847
        %v1855 = vpack.c.b16 %v1849, %v1849
        %v1857 = vshrl.u32 %v1850, 16
        %v1859 = vshll.u32 %v1850, 16
        %v1861 = vrot.slane %v1859, 1
        %v1862 = vor.u32 %v1857, %v1861
        %v1864 = vshll.u32 %v1851, 16
        %v1866 = vrot.slane %v1864, 1
        %v1867 = vsel %vm516, %v1862, %v1866
        %v1868 = vshrl.u32 %v1851, 16
        %v1870 = vor.u32 %v1868, %v1866
        %v1872 = vshll.u32 %v1852, 16
        %v1874 = vrot.slane %v1872, 1
        %v1875 = vsel %vm516, %v1870, %v1874
        %v1876 = vshrl.u32 %v1852, 16
        %v1878 = vor.u32 %v1876, %v1874
        %v1880 = vshll.u32 %v1853, 16
        %v1882 = vrot.slane %v1880, 1
        %v1883 = vsel %vm516, %v1878, %v1882
        %v1884 = vshrl.u32 %v1853, 16
        %v1886 = vor.u32 %v1884, %v1882
        %v1888 = vshll.u32 %v1854, 16
        %v1890 = vrot.slane %v1888, 1
        %v1891 = vsel %vm516, %v1886, %v1890
        %v1892 = vshrl.u32 %v1854, 16
        %v1894 = vor.u32 %v1892, %v1890
        %v1896 = vshll.u32 %v1855, 16
        %v1898 = vrot.slane %v1896, 1
        %v1899 = vsel %vm516, %v1894, %v1898
        %v1921 = vunpack.c.l.b16 %v1812
        %v1922 = vunpack.c.l.b16 %v1813
        %v1923 = vunpack.c.l.b16 %v1814
        %v1924 = vunpack.c.l.b16 %v1815
        %v1925 = vunpack.c.l.b16 %v1816
        %v1926 = vunpack.c.l.b16 %v1817
        %v1927 = vunpack.c.l.b16 %v1818
        %v1928 = vunpack.c.l.b16 %v1819
        %v1929 = vunpack.c.l.b16 %v1820
        %v1930 = vunpack.c.l.b16 %v1821
        %v1931 = vunpack.c.l.b16 %v1822
        %v1932 = vunpack.c.l.b16 %v1823
        %v1933 = vunpack.c.l.b16 %v1824
        %v1934 = vunpack.c.l.b16 %v1825
        %v1935 = vunpack.c.l.b16 %v1826
        %v1936 = vunpack.c.l.b16 %v1827
        %v1937 = vpack.c.b16 %v1922, %v1921
        %v1938 = vpack.c.b16 %v1924, %v1923
        %v1939 = vpack.c.b16 %v1926, %v1925
        %v1940 = vpack.c.b16 %v1928, %v1927
        %v1941 = vpack.c.b16 %v1930, %v1929
        %v1942 = vpack.c.b16 %v1932, %v1931
        %v1943 = vpack.c.b16 %v1934, %v1933
        %v1944 = vpack.c.b16 %v1936, %v1935
        %1953 = vmatpush.bf16.msra.mxu0 %v1944
        %1954 = vmatpush.bf16.msra.mxu0 %v1943
        %1955 = vmatpush.bf16.msra.mxu0 %v1942
        %1956 = vmatpush.bf16.msra.mxu0 %v1941
        %1957 = vmatpush.bf16.msra.mxu0 %v1940
        %1958 = vmatpush.bf16.msra.mxu0 %v1939
        %1959 = vmatpush.bf16.msra.mxu0 %v1938
        %1960 = vmatpush.bf16.msra.mxu0 %v1937
        %1961 = vmatmul.bf16.gmra.mxu0 %v1867
        %v1962 = vpop.f32.mrf.mxu0
        %v1963 = vadd.f32 0.0, %v1962
        %v1964 = vpop.f32.mrf.mxu0
        %v1965 = vadd.f32 0.0, %v1964
        %1966 = vmatmul.bf16.gmra.mxu0 %v1875
        %v1967 = vpop.f32.mrf.mxu0
        %v1968 = vadd.f32 0.0, %v1967
        %v1969 = vpop.f32.mrf.mxu0
        %v1970 = vadd.f32 0.0, %v1969
        %1971 = vmatmul.bf16.gmra.mxu0 %v1883
        %v1972 = vpop.f32.mrf.mxu0
        %v1973 = vadd.f32 0.0, %v1972
        %v1974 = vpop.f32.mrf.mxu0
        %v1975 = vadd.f32 0.0, %v1974
        %1976 = vmatmul.bf16.gmra.mxu0 %v1891
        %v1977 = vpop.f32.mrf.mxu0
        %v1978 = vadd.f32 0.0, %v1977
        %v1979 = vpop.f32.mrf.mxu0
        %v1980 = vadd.f32 0.0, %v1979
        %1981 = vmatmul.bf16.gmra.mxu0 %v1899
        %v1982 = vpop.f32.mrf.mxu0
        %v1983 = vadd.f32 0.0, %v1982
        %v1984 = vpop.f32.mrf.mxu0
        %v1985 = vadd.f32 0.0, %v1984
        %1986 = vdwg.mxu0
        %v1987 = vld [vmem:[#allocation3] sm:$0xff]
        %v1988 = vld [vmem:[#allocation3 + $0x8] sm:$0xff]
        %v1989 = vld [vmem:[#allocation3 + $0x10] sm:$0xff]
        %v1990 = vld [vmem:[#allocation3 + $0x18] sm:$0xff]
        %v1991 = vld [vmem:[#allocation3 + $0x20] sm:$0xff]
        %v1992 = vld [vmem:[#allocation3 + $0x28] sm:$0xff]
        %v1993 = vld [vmem:[#allocation3 + $0x30] sm:$0xff]
        %v1994 = vld [vmem:[#allocation3 + $0x38] sm:$0xff]
        %v1995 = vld [vmem:[#allocation3 + $0x40] sm:$0xff]
        %v1996 = vld [vmem:[#allocation3 + $0x48] sm:$0xff]
        %v1997 = vadd.f32 %v1987, %v1963
        %v1998 = vadd.f32 %v1988, %v1965
        %v1999 = vadd.f32 %v1989, %v1968
        %v2000 = vadd.f32 %v1990, %v1970
        %v2001 = vadd.f32 %v1991, %v1973
        %v2002 = vadd.f32 %v1992, %v1975
        %v2003 = vadd.f32 %v1993, %v1978
        %v2004 = vadd.f32 %v1994, %v1980
        %v2005 = vadd.f32 %v1995, %v1983
        %v2006 = vadd.f32 %v1996, %v1985
        %2007 = vst [vmem:[#allocation3] sm:$0xff] %v1997
        %2008 = vst [vmem:[#allocation3 + $0x8] sm:$0xff] %v1998
        %2009 = vst [vmem:[#allocation3 + $0x10] sm:$0xff] %v1999
        %2010 = vst [vmem:[#allocation3 + $0x18] sm:$0xff] %v2000
        %2011 = vst [vmem:[#allocation3 + $0x20] sm:$0xff] %v2001
        %2012 = vst [vmem:[#allocation3 + $0x28] sm:$0xff] %v2002
        %2013 = vst [vmem:[#allocation3 + $0x30] sm:$0xff] %v2003
        %2014 = vst [vmem:[#allocation3 + $0x38] sm:$0xff] %v2004
        %2015 = vst [vmem:[#allocation3 + $0x40] sm:$0xff] %v2005
        %2016 = vst [vmem:[#allocation3 + $0x48] sm:$0xff] %v2006
        %v2017 = vld [vmem:[#allocation2] sm:$0xe]
        %v2018 = vld [vmem:[#allocation2 + $0x4] sm:$0xf]
        %v2019 = vld [vmem:[#allocation2 + $0x8] sm:$0xf]
        %v2020 = vld [vmem:[#allocation2 + $0xc] sm:$0xf]
        %v2021 = vld [vmem:[#allocation2 + $0x10] sm:$0xf]
        %v2022 = vld [vmem:[#allocation2 + $0x14] sm:$0xf]
        %v2023 = vld [vmem:[#allocation2 + $0x18] sm:$0xf]
        %v2024 = vld [vmem:[#allocation2 + $0x1c] sm:$0xf]
        %v2025 = vld [vmem:[#allocation2 + $0x20] sm:$0xf]
        %v2026 = vld [vmem:[#allocation2 + $0x24] sm:$0xf]
        %v2027 = vld [vmem:[#allocation2 + $0x28] sm:$0x1]
        %s2028 = scalar_lea.vmem [#allocation7], 128
        %v2029 = vld [vmem:[%s2028] sm:$0xf]
        %v2030 = vld [vmem:[%s2028 + $0x4] sm:$0xf]
        %v2031 = vld [vmem:[%s2028 + $0x8] sm:$0xf]
        %v2032 = vld [vmem:[%s2028 + $0xc] sm:$0xf]
        %v2033 = vld [vmem:[%s2028 + $0x10] sm:$0xf]
        %v2034 = vld [vmem:[%s2028 + $0x14] sm:$0xf]
        %v2035 = vld [vmem:[%s2028 + $0x18] sm:$0xf]
        %v2036 = vld [vmem:[%s2028 + $0x1c] sm:$0xf]
        %v2037 = vld [vmem:[%s2028 + $0x20] sm:$0xf]
        %v2038 = vld [vmem:[%s2028 + $0x24] sm:$0xf]
        %v2039 = vld [vmem:[%s2028 + $0x28] sm:$0xf]
        %v2040 = vld [vmem:[%s2028 + $0x2c] sm:$0xf]
        %v2041 = vld [vmem:[%s2028 + $0x30] sm:$0xf]
        %v2042 = vld [vmem:[%s2028 + $0x34] sm:$0xf]
        %v2043 = vld [vmem:[%s2028 + $0x38] sm:$0xf]
        %v2044 = vld [vmem:[%s2028 + $0x3c] sm:$0xf]
        %v2056 = vunpack.c.l.b16 %v2017
        %v2057 = vunpack.c.l.b16 %v2018
        %v2058 = vunpack.c.l.b16 %v2019
        %v2059 = vunpack.c.l.b16 %v2020
        %v2060 = vunpack.c.l.b16 %v2021
        %v2061 = vunpack.c.l.b16 %v2022
        %v2062 = vunpack.c.l.b16 %v2023
        %v2063 = vunpack.c.l.b16 %v2024
        %v2064 = vunpack.c.l.b16 %v2025
        %v2065 = vunpack.c.l.b16 %v2026
        %v2066 = vunpack.c.l.b16 %v2027
        %v2067 = vpack.c.b16 %v2057, %v2056
        %v2068 = vpack.c.b16 %v2059, %v2058
        %v2069 = vpack.c.b16 %v2061, %v2060
        %v2070 = vpack.c.b16 %v2063, %v2062
        %v2071 = vpack.c.b16 %v2065, %v2064
        %v2072 = vpack.c.b16 %v2066, %v2066
        %v2073 = vrot.slane %v2067, 1
        %v2074 = vrot.slane %v2068, 1
        %v2075 = vsel %vm734, %v2073, %v2074
        %v2076 = vrot.slane %v2069, 1
        %v2077 = vsel %vm734, %v2074, %v2076
        %v2078 = vrot.slane %v2070, 1
        %v2079 = vsel %vm734, %v2076, %v2078
        %v2080 = vrot.slane %v2071, 1
        %v2081 = vsel %vm734, %v2078, %v2080
        %v2082 = vrot.slane %v2072, 1
        %v2083 = vsel %vm734, %v2080, %v2082
        %v2105 = vunpack.c.l.b16 %v2029
        %v2106 = vunpack.c.l.b16 %v2030
        %v2107 = vunpack.c.l.b16 %v2031
        %v2108 = vunpack.c.l.b16 %v2032
        %v2109 = vunpack.c.l.b16 %v2033
        %v2110 = vunpack.c.l.b16 %v2034
        %v2111 = vunpack.c.l.b16 %v2035
        %v2112 = vunpack.c.l.b16 %v2036
        %v2113 = vunpack.c.l.b16 %v2037
        %v2114 = vunpack.c.l.b16 %v2038
        %v2115 = vunpack.c.l.b16 %v2039
        %v2116 = vunpack.c.l.b16 %v2040
        %v2117 = vunpack.c.l.b16 %v2041
        %v2118 = vunpack.c.l.b16 %v2042
        %v2119 = vunpack.c.l.b16 %v2043
        %v2120 = vunpack.c.l.b16 %v2044
        %v2121 = vpack.c.b16 %v2106, %v2105
        %v2122 = vpack.c.b16 %v2108, %v2107
        %v2123 = vpack.c.b16 %v2110, %v2109
        %v2124 = vpack.c.b16 %v2112, %v2111
        %v2125 = vpack.c.b16 %v2114, %v2113
        %v2126 = vpack.c.b16 %v2116, %v2115
        %v2127 = vpack.c.b16 %v2118, %v2117
        %v2128 = vpack.c.b16 %v2120, %v2119
        %2137 = vmatpush.bf16.msra.mxu0 %v2128
        %2138 = vmatpush.bf16.msra.mxu0 %v2127
        %2139 = vmatpush.bf16.msra.mxu0 %v2126
        %2140 = vmatpush.bf16.msra.mxu0 %v2125
        %2141 = vmatpush.bf16.msra.mxu0 %v2124
        %2142 = vmatpush.bf16.msra.mxu0 %v2123
        %2143 = vmatpush.bf16.msra.mxu0 %v2122
        %2144 = vmatpush.bf16.msra.mxu0 %v2121
        %2145 = vmatmul.bf16.gmra.mxu0 %v2075
        %v2146 = vpop.f32.mrf.mxu0
        %v2147 = vadd.f32 0.0, %v2146
        %v2148 = vpop.f32.mrf.mxu0
        %v2149 = vadd.f32 0.0, %v2148
        %2150 = vmatmul.bf16.gmra.mxu0 %v2077
        %v2151 = vpop.f32.mrf.mxu0
        %v2152 = vadd.f32 0.0, %v2151
        %v2153 = vpop.f32.mrf.mxu0
        %v2154 = vadd.f32 0.0, %v2153
        %2155 = vmatmul.bf16.gmra.mxu0 %v2079
        %v2156 = vpop.f32.mrf.mxu0
        %v2157 = vadd.f32 0.0, %v2156
        %v2158 = vpop.f32.mrf.mxu0
        %v2159 = vadd.f32 0.0, %v2158
        %2160 = vmatmul.bf16.gmra.mxu0 %v2081
        %v2161 = vpop.f32.mrf.mxu0
        %v2162 = vadd.f32 0.0, %v2161
        %v2163 = vpop.f32.mrf.mxu0
        %v2164 = vadd.f32 0.0, %v2163
        %2165 = vmatmul.bf16.gmra.mxu0 %v2083
        %v2166 = vpop.f32.mrf.mxu0
        %v2167 = vadd.f32 0.0, %v2166
        %v2168 = vpop.f32.mrf.mxu0
        %v2169 = vadd.f32 0.0, %v2168
        %2170 = vdwg.mxu0
        %v2171 = vld [vmem:[#allocation3] sm:$0xff]
        %v2172 = vld [vmem:[#allocation3 + $0x8] sm:$0xff]
        %v2173 = vld [vmem:[#allocation3 + $0x10] sm:$0xff]
        %v2174 = vld [vmem:[#allocation3 + $0x18] sm:$0xff]
        %v2175 = vld [vmem:[#allocation3 + $0x20] sm:$0xff]
        %v2176 = vld [vmem:[#allocation3 + $0x28] sm:$0xff]
        %v2177 = vld [vmem:[#allocation3 + $0x30] sm:$0xff]
        %v2178 = vld [vmem:[#allocation3 + $0x38] sm:$0xff]
        %v2179 = vld [vmem:[#allocation3 + $0x40] sm:$0xff]
        %v2180 = vld [vmem:[#allocation3 + $0x48] sm:$0xff]
        %v2181 = vadd.f32 %v2171, %v2147
        %v2182 = vadd.f32 %v2172, %v2149
        %v2183 = vadd.f32 %v2173, %v2152
        %v2184 = vadd.f32 %v2174, %v2154
        %v2185 = vadd.f32 %v2175, %v2157
        %v2186 = vadd.f32 %v2176, %v2159
        %v2187 = vadd.f32 %v2177, %v2162
        %v2188 = vadd.f32 %v2178, %v2164
        %v2189 = vadd.f32 %v2179, %v2167
        %v2190 = vadd.f32 %v2180, %v2169
        %2191 = vst [vmem:[#allocation3] sm:$0xff] %v2181
        %2192 = vst [vmem:[#allocation3 + $0x8] sm:$0xff] %v2182
        %2193 = vst [vmem:[#allocation3 + $0x10] sm:$0xff] %v2183
        %2194 = vst [vmem:[#allocation3 + $0x18] sm:$0xff] %v2184
        %2195 = vst [vmem:[#allocation3 + $0x20] sm:$0xff] %v2185
        %2196 = vst [vmem:[#allocation3 + $0x28] sm:$0xff] %v2186
        %2197 = vst [vmem:[#allocation3 + $0x30] sm:$0xff] %v2187
        %2198 = vst [vmem:[#allocation3 + $0x38] sm:$0xff] %v2188
        %2199 = vst [vmem:[#allocation3 + $0x40] sm:$0xff] %v2189
        %2200 = vst [vmem:[#allocation3 + $0x48] sm:$0xff] %v2190
        %v2201 = vld [vmem:[#allocation2 + $0x4] sm:$0xe]
        %v2202 = vld [vmem:[#allocation2 + $0x8] sm:$0xf]
        %v2203 = vld [vmem:[#allocation2 + $0xc] sm:$0xf]
        %v2204 = vld [vmem:[#allocation2 + $0x10] sm:$0xf]
        %v2205 = vld [vmem:[#allocation2 + $0x14] sm:$0xf]
        %v2206 = vld [vmem:[#allocation2 + $0x18] sm:$0xf]
        %v2207 = vld [vmem:[#allocation2 + $0x1c] sm:$0xf]
        %v2208 = vld [vmem:[#allocation2 + $0x20] sm:$0xf]
        %v2209 = vld [vmem:[#allocation2 + $0x24] sm:$0xf]
        %v2210 = vld [vmem:[#allocation2 + $0x28] sm:$0xf]
        %v2211 = vld [vmem:[#allocation2 + $0x2c] sm:$0x1]
        %s2212 = scalar_lea.vmem [#allocation7], 192
        %v2213 = vld [vmem:[%s2212] sm:$0xf]
        %v2214 = vld [vmem:[%s2212 + $0x4] sm:$0xf]
        %v2215 = vld [vmem:[%s2212 + $0x8] sm:$0xf]
        %v2216 = vld [vmem:[%s2212 + $0xc] sm:$0xf]
        %v2217 = vld [vmem:[%s2212 + $0x10] sm:$0xf]
        %v2218 = vld [vmem:[%s2212 + $0x14] sm:$0xf]
        %v2219 = vld [vmem:[%s2212 + $0x18] sm:$0xf]
        %v2220 = vld [vmem:[%s2212 + $0x1c] sm:$0xf]
        %v2221 = vld [vmem:[%s2212 + $0x20] sm:$0xf]
        %v2222 = vld [vmem:[%s2212 + $0x24] sm:$0xf]
        %v2223 = vld [vmem:[%s2212 + $0x28] sm:$0xf]
        %v2224 = vld [vmem:[%s2212 + $0x2c] sm:$0xf]
        %v2225 = vld [vmem:[%s2212 + $0x30] sm:$0xf]
        %v2226 = vld [vmem:[%s2212 + $0x34] sm:$0xf]
        %v2227 = vld [vmem:[%s2212 + $0x38] sm:$0xf]
        %v2228 = vld [vmem:[%s2212 + $0x3c] sm:$0xf]
        %v2240 = vunpack.c.l.b16 %v2201
        %v2241 = vunpack.c.l.b16 %v2202
        %v2242 = vunpack.c.l.b16 %v2203
        %v2243 = vunpack.c.l.b16 %v2204
        %v2244 = vunpack.c.l.b16 %v2205
        %v2245 = vunpack.c.l.b16 %v2206
        %v2246 = vunpack.c.l.b16 %v2207
        %v2247 = vunpack.c.l.b16 %v2208
        %v2248 = vunpack.c.l.b16 %v2209
        %v2249 = vunpack.c.l.b16 %v2210
        %v2250 = vunpack.c.l.b16 %v2211
        %v2251 = vpack.c.b16 %v2241, %v2240
        %v2252 = vpack.c.b16 %v2243, %v2242
        %v2253 = vpack.c.b16 %v2245, %v2244
        %v2254 = vpack.c.b16 %v2247, %v2246
        %v2255 = vpack.c.b16 %v2249, %v2248
        %v2256 = vpack.c.b16 %v2250, %v2250
        %v2257 = vrot.slane %v2251, 1
        %v2258 = vrot.slane %v2252, 1
        %v2259 = vsel %vm734, %v2257, %v2258
        %v2260 = vrot.slane %v2253, 1
        %v2261 = vsel %vm734, %v2258, %v2260
        %v2262 = vrot.slane %v2254, 1
        %v2263 = vsel %vm734, %v2260, %v2262
        %v2264 = vrot.slane %v2255, 1
        %v2265 = vsel %vm734, %v2262, %v2264
        %v2266 = vrot.slane %v2256, 1
        %v2267 = vsel %vm734, %v2264, %v2266
        %v2289 = vunpack.c.l.b16 %v2213
        %v2290 = vunpack.c.l.b16 %v2214
        %v2291 = vunpack.c.l.b16 %v2215
        %v2292 = vunpack.c.l.b16 %v2216
        %v2293 = vunpack.c.l.b16 %v2217
        %v2294 = vunpack.c.l.b16 %v2218
        %v2295 = vunpack.c.l.b16 %v2219
        %v2296 = vunpack.c.l.b16 %v2220
        %v2297 = vunpack.c.l.b16 %v2221
        %v2298 = vunpack.c.l.b16 %v2222
        %v2299 = vunpack.c.l.b16 %v2223
        %v2300 = vunpack.c.l.b16 %v2224
        %v2301 = vunpack.c.l.b16 %v2225
        %v2302 = vunpack.c.l.b16 %v2226
        %v2303 = vunpack.c.l.b16 %v2227
        %v2304 = vunpack.c.l.b16 %v2228
        %v2305 = vpack.c.b16 %v2290, %v2289
        %v2306 = vpack.c.b16 %v2292, %v2291
        %v2307 = vpack.c.b16 %v2294, %v2293
        %v2308 = vpack.c.b16 %v2296, %v2295
        %v2309 = vpack.c.b16 %v2298, %v2297
        %v2310 = vpack.c.b16 %v2300, %v2299
        %v2311 = vpack.c.b16 %v2302, %v2301
        %v2312 = vpack.c.b16 %v2304, %v2303
        %2321 = vmatpush.bf16.msra.mxu0 %v2312
        %2322 = vmatpush.bf16.msra.mxu0 %v2311
        %2323 = vmatpush.bf16.msra.mxu0 %v2310
        %2324 = vmatpush.bf16.msra.mxu0 %v2309
        %2325 = vmatpush.bf16.msra.mxu0 %v2308
        %2326 = vmatpush.bf16.msra.mxu0 %v2307
        %2327 = vmatpush.bf16.msra.mxu0 %v2306
        %2328 = vmatpush.bf16.msra.mxu0 %v2305
        %2329 = vmatmul.bf16.gmra.mxu0 %v2259
        %v2330 = vpop.f32.mrf.mxu0
        %v2331 = vadd.f32 0.0, %v2330
        %v2332 = vpop.f32.mrf.mxu0
        %v2333 = vadd.f32 0.0, %v2332
        %2334 = vmatmul.bf16.gmra.mxu0 %v2261
        %v2335 = vpop.f32.mrf.mxu0
        %v2336 = vadd.f32 0.0, %v2335
        %v2337 = vpop.f32.mrf.mxu0
        %v2338 = vadd.f32 0.0, %v2337
        %2339 = vmatmul.bf16.gmra.mxu0 %v2263
        %v2340 = vpop.f32.mrf.mxu0
        %v2341 = vadd.f32 0.0, %v2340
        %v2342 = vpop.f32.mrf.mxu0
        %v2343 = vadd.f32 0.0, %v2342
        %2344 = vmatmul.bf16.gmra.mxu0 %v2265
        %v2345 = vpop.f32.mrf.mxu0
        %v2346 = vadd.f32 0.0, %v2345
        %v2347 = vpop.f32.mrf.mxu0
        %v2348 = vadd.f32 0.0, %v2347
        %2349 = vmatmul.bf16.gmra.mxu0 %v2267
        %v2350 = vpop.f32.mrf.mxu0
        %v2351 = vadd.f32 0.0, %v2350
        %v2352 = vpop.f32.mrf.mxu0
        %v2353 = vadd.f32 0.0, %v2352
        %2354 = vdwg.mxu0
        %v2355 = vld [vmem:[#allocation3] sm:$0xff]
        %v2356 = vld [vmem:[#allocation3 + $0x8] sm:$0xff]
        %v2357 = vld [vmem:[#allocation3 + $0x10] sm:$0xff]
        %v2358 = vld [vmem:[#allocation3 + $0x18] sm:$0xff]
        %v2359 = vld [vmem:[#allocation3 + $0x20] sm:$0xff]
        %v2360 = vld [vmem:[#allocation3 + $0x28] sm:$0xff]
        %v2361 = vld [vmem:[#allocation3 + $0x30] sm:$0xff]
        %v2362 = vld [vmem:[#allocation3 + $0x38] sm:$0xff]
        %v2363 = vld [vmem:[#allocation3 + $0x40] sm:$0xff]
        %v2364 = vld [vmem:[#allocation3 + $0x48] sm:$0xff]
        %v2365 = vadd.f32 %v2355, %v2331
        %v2366 = vadd.f32 %v2356, %v2333
        %v2367 = vadd.f32 %v2357, %v2336
        %v2368 = vadd.f32 %v2358, %v2338
        %v2369 = vadd.f32 %v2359, %v2341
        %v2370 = vadd.f32 %v2360, %v2343
        %v2371 = vadd.f32 %v2361, %v2346
        %v2372 = vadd.f32 %v2362, %v2348
        %v2373 = vadd.f32 %v2363, %v2351
        %v2374 = vadd.f32 %v2364, %v2353
        %2375 = vst [vmem:[#allocation3] sm:$0xff] %v2365
        %2376 = vst [vmem:[#allocation3 + $0x8] sm:$0xff] %v2366
        %2377 = vst [vmem:[#allocation3 + $0x10] sm:$0xff] %v2367
        %2378 = vst [vmem:[#allocation3 + $0x18] sm:$0xff] %v2368
        %2379 = vst [vmem:[#allocation3 + $0x20] sm:$0xff] %v2369
        %2380 = vst [vmem:[#allocation3 + $0x28] sm:$0xff] %v2370
        %2381 = vst [vmem:[#allocation3 + $0x30] sm:$0xff] %v2371
        %2382 = vst [vmem:[#allocation3 + $0x38] sm:$0xff] %v2372
        %2383 = vst [vmem:[#allocation3 + $0x40] sm:$0xff] %v2373
        %2384 = vst [vmem:[#allocation3 + $0x48] sm:$0xff] %v2374
        %v2385 = vld [vmem:[#allocation2 + $0x4] sm:$0xe]
        %v2386 = vld [vmem:[#allocation2 + $0x8] sm:$0xf]
        %v2387 = vld [vmem:[#allocation2 + $0xc] sm:$0xf]
        %v2388 = vld [vmem:[#allocation2 + $0x10] sm:$0xf]
        %v2389 = vld [vmem:[#allocation2 + $0x14] sm:$0xf]
        %v2390 = vld [vmem:[#allocation2 + $0x18] sm:$0xf]
        %v2391 = vld [vmem:[#allocation2 + $0x1c] sm:$0xf]
        %v2392 = vld [vmem:[#allocation2 + $0x20] sm:$0xf]
        %v2393 = vld [vmem:[#allocation2 + $0x24] sm:$0xf]
        %v2394 = vld [vmem:[#allocation2 + $0x28] sm:$0xf]
        %v2395 = vld [vmem:[#allocation2 + $0x2c] sm:$0x3]
        %s2396 = scalar_lea.vmem [#allocation7], 256
        %v2397 = vld [vmem:[%s2396] sm:$0xf]
        %v2398 = vld [vmem:[%s2396 + $0x4] sm:$0xf]
        %v2399 = vld [vmem:[%s2396 + $0x8] sm:$0xf]
        %v2400 = vld [vmem:[%s2396 + $0xc] sm:$0xf]
        %v2401 = vld [vmem:[%s2396 + $0x10] sm:$0xf]
        %v2402 = vld [vmem:[%s2396 + $0x14] sm:$0xf]
        %v2403 = vld [vmem:[%s2396 + $0x18] sm:$0xf]
        %v2404 = vld [vmem:[%s2396 + $0x1c] sm:$0xf]
        %v2405 = vld [vmem:[%s2396 + $0x20] sm:$0xf]
        %v2406 = vld [vmem:[%s2396 + $0x24] sm:$0xf]
        %v2407 = vld [vmem:[%s2396 + $0x28] sm:$0xf]
        %v2408 = vld [vmem:[%s2396 + $0x2c] sm:$0xf]
        %v2409 = vld [vmem:[%s2396 + $0x30] sm:$0xf]
        %v2410 = vld [vmem:[%s2396 + $0x34] sm:$0xf]
        %v2411 = vld [vmem:[%s2396 + $0x38] sm:$0xf]
        %v2412 = vld [vmem:[%s2396 + $0x3c] sm:$0xf]
        %v2424 = vunpack.c.l.b16 %v2385
        %v2425 = vunpack.c.l.b16 %v2386
        %v2426 = vunpack.c.l.b16 %v2387
        %v2427 = vunpack.c.l.b16 %v2388
        %v2428 = vunpack.c.l.b16 %v2389
        %v2429 = vunpack.c.l.b16 %v2390
        %v2430 = vunpack.c.l.b16 %v2391
        %v2431 = vunpack.c.l.b16 %v2392
        %v2432 = vunpack.c.l.b16 %v2393
        %v2433 = vunpack.c.l.b16 %v2394
        %v2434 = vunpack.c.l.b16 %v2395
        %v2435 = vpack.c.b16 %v2425, %v2424
        %v2436 = vpack.c.b16 %v2427, %v2426
        %v2437 = vpack.c.b16 %v2429, %v2428
        %v2438 = vpack.c.b16 %v2431, %v2430
        %v2439 = vpack.c.b16 %v2433, %v2432
        %v2440 = vpack.c.b16 %v2434, %v2434
        %v2442 = vshrl.u32 %v2435, 16
        %v2444 = vrot.slane %v2442, 1
        %v2445 = vshll.u32 %v2435, 16
        %v2447 = vrot.slane %v2445, 2
        %v2448 = vor.u32 %v2444, %v2447
        %v2450 = vshrl.u32 %v2436, 16
        %v2452 = vrot.slane %v2450, 1
        %v2453 = vshll.u32 %v2436, 16
        %v2455 = vrot.slane %v2453, 2
        %v2456 = vor.u32 %v2452, %v2455
        %v2457 = vsel %vm919, %v2448, %v2456
        %v2459 = vshrl.u32 %v2437, 16
        %v2461 = vrot.slane %v2459, 1
        %v2462 = vshll.u32 %v2437, 16
        %v2464 = vrot.slane %v2462, 2
        %v2465 = vor.u32 %v2461, %v2464
        %v2466 = vsel %vm919, %v2456, %v2465
        %v2468 = vshrl.u32 %v2438, 16
        %v2470 = vrot.slane %v2468, 1
        %v2471 = vshll.u32 %v2438, 16
        %v2473 = vrot.slane %v2471, 2
        %v2474 = vor.u32 %v2470, %v2473
        %v2475 = vsel %vm919, %v2465, %v2474
        %v2477 = vshrl.u32 %v2439, 16
        %v2479 = vrot.slane %v2477, 1
        %v2480 = vshll.u32 %v2439, 16
        %v2482 = vrot.slane %v2480, 2
        %v2483 = vor.u32 %v2479, %v2482
        %v2484 = vsel %vm919, %v2474, %v2483
        %v2486 = vshrl.u32 %v2440, 16
        %v2488 = vrot.slane %v2486, 1
        %v2489 = vshll.u32 %v2440, 16
        %v2491 = vrot.slane %v2489, 2
        %v2492 = vor.u32 %v2488, %v2491
        %v2493 = vsel %vm919, %v2483, %v2492
        %v2515 = vunpack.c.l.b16 %v2397
        %v2516 = vunpack.c.l.b16 %v2398
        %v2517 = vunpack.c.l.b16 %v2399
        %v2518 = vunpack.c.l.b16 %v2400
        %v2519 = vunpack.c.l.b16 %v2401
        %v2520 = vunpack.c.l.b16 %v2402
        %v2521 = vunpack.c.l.b16 %v2403
        %v2522 = vunpack.c.l.b16 %v2404
        %v2523 = vunpack.c.l.b16 %v2405
        %v2524 = vunpack.c.l.b16 %v2406
        %v2525 = vunpack.c.l.b16 %v2407
        %v2526 = vunpack.c.l.b16 %v2408
        %v2527 = vunpack.c.l.b16 %v2409
        %v2528 = vunpack.c.l.b16 %v2410
        %v2529 = vunpack.c.l.b16 %v2411
        %v2530 = vunpack.c.l.b16 %v2412
        %v2531 = vpack.c.b16 %v2516, %v2515
        %v2532 = vpack.c.b16 %v2518, %v2517
        %v2533 = vpack.c.b16 %v2520, %v2519
        %v2534 = vpack.c.b16 %v2522, %v2521
        %v2535 = vpack.c.b16 %v2524, %v2523
        %v2536 = vpack.c.b16 %v2526, %v2525
        %v2537 = vpack.c.b16 %v2528, %v2527
        %v2538 = vpack.c.b16 %v2530, %v2529
        %2547 = vmatpush.bf16.msra.mxu0 %v2538
        %2548 = vmatpush.bf16.msra.mxu0 %v2537
        %2549 = vmatpush.bf16.msra.mxu0 %v2536
        %2550 = vmatpush.bf16.msra.mxu0 %v2535
        %2551 = vmatpush.bf16.msra.mxu0 %v2534
        %2552 = vmatpush.bf16.msra.mxu0 %v2533
        %2553 = vmatpush.bf16.msra.mxu0 %v2532
        %2554 = vmatpush.bf16.msra.mxu0 %v2531
        %2555 = vmatmul.bf16.gmra.mxu0 %v2457
        %v2556 = vpop.f32.mrf.mxu0
        %v2557 = vadd.f32 0.0, %v2556
        %v2558 = vpop.f32.mrf.mxu0
        %v2559 = vadd.f32 0.0, %v2558
        %2560 = vmatmul.bf16.gmra.mxu0 %v2466
        %v2561 = vpop.f32.mrf.mxu0
        %v2562 = vadd.f32 0.0, %v2561
        %v2563 = vpop.f32.mrf.mxu0
        %v2564 = vadd.f32 0.0, %v2563
        %2565 = vmatmul.bf16.gmra.mxu0 %v2475
        %v2566 = vpop.f32.mrf.mxu0
        %v2567 = vadd.f32 0.0, %v2566
        %v2568 = vpop.f32.mrf.mxu0
        %v2569 = vadd.f32 0.0, %v2568
        %2570 = vmatmul.bf16.gmra.mxu0 %v2484
        %v2571 = vpop.f32.mrf.mxu0
        %v2572 = vadd.f32 0.0, %v2571
        %v2573 = vpop.f32.mrf.mxu0
        %v2574 = vadd.f32 0.0, %v2573
        %2575 = vmatmul.bf16.gmra.mxu0 %v2493
        %v2576 = vpop.f32.mrf.mxu0
        %v2577 = vadd.f32 0.0, %v2576
        %v2578 = vpop.f32.mrf.mxu0
        %v2579 = vadd.f32 0.0, %v2578
        %2580 = vdwg.mxu0
        %v2581 = vld [vmem:[#allocation3] sm:$0xff]
        %v2582 = vld [vmem:[#allocation3 + $0x8] sm:$0xff]
        %v2583 = vld [vmem:[#allocation3 + $0x10] sm:$0xff]
        %v2584 = vld [vmem:[#allocation3 + $0x18] sm:$0xff]
        %v2585 = vld [vmem:[#allocation3 + $0x20] sm:$0xff]
        %v2586 = vld [vmem:[#allocation3 + $0x28] sm:$0xff]
        %v2587 = vld [vmem:[#allocation3 + $0x30] sm:$0xff]
        %v2588 = vld [vmem:[#allocation3 + $0x38] sm:$0xff]
        %v2589 = vld [vmem:[#allocation3 + $0x40] sm:$0xff]
        %v2590 = vld [vmem:[#allocation3 + $0x48] sm:$0xff]
        %v2591 = vadd.f32 %v2581, %v2557
        %v2592 = vadd.f32 %v2582, %v2559
        %v2593 = vadd.f32 %v2583, %v2562
        %v2594 = vadd.f32 %v2584, %v2564
        %v2595 = vadd.f32 %v2585, %v2567
        %v2596 = vadd.f32 %v2586, %v2569
        %v2597 = vadd.f32 %v2587, %v2572
        %v2598 = vadd.f32 %v2588, %v2574
        %v2599 = vadd.f32 %v2589, %v2577
        %v2600 = vadd.f32 %v2590, %v2579
        %2601 = vst [vmem:[#allocation3] sm:$0xff] %v2591
        %2602 = vst [vmem:[#allocation3 + $0x8] sm:$0xff] %v2592
        %2603 = vst [vmem:[#allocation3 + $0x10] sm:$0xff] %v2593
        %2604 = vst [vmem:[#allocation3 + $0x18] sm:$0xff] %v2594
        %2605 = vst [vmem:[#allocation3 + $0x20] sm:$0xff] %v2595
        %2606 = vst [vmem:[#allocation3 + $0x28] sm:$0xff] %v2596
        %2607 = vst [vmem:[#allocation3 + $0x30] sm:$0xff] %v2597
        %2608 = vst [vmem:[#allocation3 + $0x38] sm:$0xff] %v2598
        %2609 = vst [vmem:[#allocation3 + $0x40] sm:$0xff] %v2599
        %2610 = vst [vmem:[#allocation3 + $0x48] sm:$0xff] %v2600
        %v2611 = vld [vmem:[#allocation2 + $0x4] sm:$0xc]
        %v2612 = vld [vmem:[#allocation2 + $0x8] sm:$0xf]
        %v2613 = vld [vmem:[#allocation2 + $0xc] sm:$0xf]
        %v2614 = vld [vmem:[#allocation2 + $0x10] sm:$0xf]
        %v2615 = vld [vmem:[#allocation2 + $0x14] sm:$0xf]
        %v2616 = vld [vmem:[#allocation2 + $0x18] sm:$0xf]
        %v2617 = vld [vmem:[#allocation2 + $0x1c] sm:$0xf]
        %v2618 = vld [vmem:[#allocation2 + $0x20] sm:$0xf]
        %v2619 = vld [vmem:[#allocation2 + $0x24] sm:$0xf]
        %v2620 = vld [vmem:[#allocation2 + $0x28] sm:$0xf]
        %v2621 = vld [vmem:[#allocation2 + $0x2c] sm:$0x3]
        %s2622 = scalar_lea.vmem [#allocation7], 320
        %v2623 = vld [vmem:[%s2622] sm:$0xf]
        %v2624 = vld [vmem:[%s2622 + $0x4] sm:$0xf]
        %v2625 = vld [vmem:[%s2622 + $0x8] sm:$0xf]
        %v2626 = vld [vmem:[%s2622 + $0xc] sm:$0xf]
        %v2627 = vld [vmem:[%s2622 + $0x10] sm:$0xf]
        %v2628 = vld [vmem:[%s2622 + $0x14] sm:$0xf]
        %v2629 = vld [vmem:[%s2622 + $0x18] sm:$0xf]
        %v2630 = vld [vmem:[%s2622 + $0x1c] sm:$0xf]
        %v2631 = vld [vmem:[%s2622 + $0x20] sm:$0xf]
        %v2632 = vld [vmem:[%s2622 + $0x24] sm:$0xf]
        %v2633 = vld [vmem:[%s2622 + $0x28] sm:$0xf]
        %v2634 = vld [vmem:[%s2622 + $0x2c] sm:$0xf]
        %v2635 = vld [vmem:[%s2622 + $0x30] sm:$0xf]
        %v2636 = vld [vmem:[%s2622 + $0x34] sm:$0xf]
        %v2637 = vld [vmem:[%s2622 + $0x38] sm:$0xf]
        %v2638 = vld [vmem:[%s2622 + $0x3c] sm:$0xf]
        %v2650 = vunpack.c.l.b16 %v2611
        %v2651 = vunpack.c.l.b16 %v2612
        %v2652 = vunpack.c.l.b16 %v2613
        %v2653 = vunpack.c.l.b16 %v2614
        %v2654 = vunpack.c.l.b16 %v2615
        %v2655 = vunpack.c.l.b16 %v2616
        %v2656 = vunpack.c.l.b16 %v2617
        %v2657 = vunpack.c.l.b16 %v2618
        %v2658 = vunpack.c.l.b16 %v2619
        %v2659 = vunpack.c.l.b16 %v2620
        %v2660 = vunpack.c.l.b16 %v2621
        %v2661 = vpack.c.b16 %v2651, %v2650
        %v2662 = vpack.c.b16 %v2653, %v2652
        %v2663 = vpack.c.b16 %v2655, %v2654
        %v2664 = vpack.c.b16 %v2657, %v2656
        %v2665 = vpack.c.b16 %v2659, %v2658
        %v2666 = vpack.c.b16 %v2660, %v2660
        %vm2667 = vcmask 1045504
        %v2668 = vrot.slane %v2661, 2
        %v2669 = vrot.slane %v2662, 2
        %v2670 = vsel %vm2667, %v2668, %v2669
        %v2671 = vrot.slane %v2663, 2
        %v2672 = vsel %vm2667, %v2669, %v2671
        %v2673 = vrot.slane %v2664, 2
        %v2674 = vsel %vm2667, %v2671, %v2673
        %v2675 = vrot.slane %v2665, 2
        %v2676 = vsel %vm2667, %v2673, %v2675
        %v2677 = vrot.slane %v2666, 2
        %v2678 = vsel %vm2667, %v2675, %v2677
        %v2700 = vunpack.c.l.b16 %v2623
        %v2701 = vunpack.c.l.b16 %v2624
        %v2702 = vunpack.c.l.b16 %v2625
        %v2703 = vunpack.c.l.b16 %v2626
        %v2704 = vunpack.c.l.b16 %v2627
        %v2705 = vunpack.c.l.b16 %v2628
        %v2706 = vunpack.c.l.b16 %v2629
        %v2707 = vunpack.c.l.b16 %v2630
        %v2708 = vunpack.c.l.b16 %v2631
        %v2709 = vunpack.c.l.b16 %v2632
        %v2710 = vunpack.c.l.b16 %v2633
        %v2711 = vunpack.c.l.b16 %v2634
        %v2712 = vunpack.c.l.b16 %v2635
        %v2713 = vunpack.c.l.b16 %v2636
        %v2714 = vunpack.c.l.b16 %v2637
        %v2715 = vunpack.c.l.b16 %v2638
        %v2716 = vpack.c.b16 %v2701, %v2700
        %v2717 = vpack.c.b16 %v2703, %v2702
        %v2718 = vpack.c.b16 %v2705, %v2704
        %v2719 = vpack.c.b16 %v2707, %v2706
        %v2720 = vpack.c.b16 %v2709, %v2708
        %v2721 = vpack.c.b16 %v2711, %v2710
        %v2722 = vpack.c.b16 %v2713, %v2712
        %v2723 = vpack.c.b16 %v2715, %v2714
        %2732 = vmatpush.bf16.msra.mxu0 %v2723
        %2733 = vmatpush.bf16.msra.mxu0 %v2722
        %2734 = vmatpush.bf16.msra.mxu0 %v2721
        %2735 = vmatpush.bf16.msra.mxu0 %v2720
        %2736 = vmatpush.bf16.msra.mxu0 %v2719
        %2737 = vmatpush.bf16.msra.mxu0 %v2718
        %2738 = vmatpush.bf16.msra.mxu0 %v2717
        %2739 = vmatpush.bf16.msra.mxu0 %v2716
        %2740 = vmatmul.bf16.gmra.mxu0 %v2670
        %v2741 = vpop.f32.mrf.mxu0
        %v2742 = vadd.f32 0.0, %v2741
        %v2743 = vpop.f32.mrf.mxu0
        %v2744 = vadd.f32 0.0, %v2743
        %2745 = vmatmul.bf16.gmra.mxu0 %v2672
        %v2746 = vpop.f32.mrf.mxu0
        %v2747 = vadd.f32 0.0, %v2746
        %v2748 = vpop.f32.mrf.mxu0
        %v2749 = vadd.f32 0.0, %v2748
        %2750 = vmatmul.bf16.gmra.mxu0 %v2674
        %v2751 = vpop.f32.mrf.mxu0
        %v2752 = vadd.f32 0.0, %v2751
        %v2753 = vpop.f32.mrf.mxu0
        %v2754 = vadd.f32 0.0, %v2753
        %2755 = vmatmul.bf16.gmra.mxu0 %v2676
        %v2756 = vpop.f32.mrf.mxu0
        %v2757 = vadd.f32 0.0, %v2756
        %v2758 = vpop.f32.mrf.mxu0
        %v2759 = vadd.f32 0.0, %v2758
        %2760 = vmatmul.bf16.gmra.mxu0 %v2678
        %v2761 = vpop.f32.mrf.mxu0
        %v2762 = vadd.f32 0.0, %v2761
        %v2763 = vpop.f32.mrf.mxu0
        %v2764 = vadd.f32 0.0, %v2763
        %2765 = vdwg.mxu0
        %v2766 = vld [vmem:[#allocation3] sm:$0xff]
        %v2767 = vld [vmem:[#allocation3 + $0x8] sm:$0xff]
        %v2768 = vld [vmem:[#allocation3 + $0x10] sm:$0xff]
        %v2769 = vld [vmem:[#allocation3 + $0x18] sm:$0xff]
        %v2770 = vld [vmem:[#allocation3 + $0x20] sm:$0xff]
        %v2771 = vld [vmem:[#allocation3 + $0x28] sm:$0xff]
        %v2772 = vld [vmem:[#allocation3 + $0x30] sm:$0xff]
        %v2773 = vld [vmem:[#allocation3 + $0x38] sm:$0xff]
        %v2774 = vld [vmem:[#allocation3 + $0x40] sm:$0xff]
        %v2775 = vld [vmem:[#allocation3 + $0x48] sm:$0xff]
        %v2776 = vadd.f32 %v2766, %v2742
        %v2777 = vadd.f32 %v2767, %v2744
        %v2778 = vadd.f32 %v2768, %v2747
        %v2779 = vadd.f32 %v2769, %v2749
        %v2780 = vadd.f32 %v2770, %v2752
        %v2781 = vadd.f32 %v2771, %v2754
        %v2782 = vadd.f32 %v2772, %v2757
        %v2783 = vadd.f32 %v2773, %v2759
        %v2784 = vadd.f32 %v2774, %v2762
        %v2785 = vadd.f32 %v2775, %v2764
        %2786 = vst [vmem:[#allocation3] sm:$0xff] %v2776
        %2787 = vst [vmem:[#allocation3 + $0x8] sm:$0xff] %v2777
        %2788 = vst [vmem:[#allocation3 + $0x10] sm:$0xff] %v2778
        %2789 = vst [vmem:[#allocation3 + $0x18] sm:$0xff] %v2779
        %2790 = vst [vmem:[#allocation3 + $0x20] sm:$0xff] %v2780
        %2791 = vst [vmem:[#allocation3 + $0x28] sm:$0xff] %v2781
        %2792 = vst [vmem:[#allocation3 + $0x30] sm:$0xff] %v2782
        %2793 = vst [vmem:[#allocation3 + $0x38] sm:$0xff] %v2783
        %2794 = vst [vmem:[#allocation3 + $0x40] sm:$0xff] %v2784
        %2795 = vst [vmem:[#allocation3 + $0x48] sm:$0xff] %v2785
        %v2796 = vld [vmem:[#allocation2 + $0x8] sm:$0xc]
        %v2797 = vld [vmem:[#allocation2 + $0xc] sm:$0xf]
        %v2798 = vld [vmem:[#allocation2 + $0x10] sm:$0xf]
        %v2799 = vld [vmem:[#allocation2 + $0x14] sm:$0xf]
        %v2800 = vld [vmem:[#allocation2 + $0x18] sm:$0xf]
        %v2801 = vld [vmem:[#allocation2 + $0x1c] sm:$0xf]
        %v2802 = vld [vmem:[#allocation2 + $0x20] sm:$0xf]
        %v2803 = vld [vmem:[#allocation2 + $0x24] sm:$0xf]
        %v2804 = vld [vmem:[#allocation2 + $0x28] sm:$0xf]
        %v2805 = vld [vmem:[#allocation2 + $0x2c] sm:$0xf]
        %v2806 = vld [vmem:[#allocation2 + $0x30] sm:$0x3]
        %s2807 = scalar_lea.vmem [#allocation7], 384
        %v2808 = vld [vmem:[%s2807] sm:$0xf]
        %v2809 = vld [vmem:[%s2807 + $0x4] sm:$0xf]
        %v2810 = vld [vmem:[%s2807 + $0x8] sm:$0xf]
        %v2811 = vld [vmem:[%s2807 + $0xc] sm:$0xf]
        %v2812 = vld [vmem:[%s2807 + $0x10] sm:$0xf]
        %v2813 = vld [vmem:[%s2807 + $0x14] sm:$0xf]
        %v2814 = vld [vmem:[%s2807 + $0x18] sm:$0xf]
        %v2815 = vld [vmem:[%s2807 + $0x1c] sm:$0xf]
        %v2816 = vld [vmem:[%s2807 + $0x20] sm:$0xf]
        %v2817 = vld [vmem:[%s2807 + $0x24] sm:$0xf]
        %v2818 = vld [vmem:[%s2807 + $0x28] sm:$0xf]
        %v2819 = vld [vmem:[%s2807 + $0x2c] sm:$0xf]
        %v2820 = vld [vmem:[%s2807 + $0x30] sm:$0xf]
        %v2821 = vld [vmem:[%s2807 + $0x34] sm:$0xf]
        %v2822 = vld [vmem:[%s2807 + $0x38] sm:$0xf]
        %v2823 = vld [vmem:[%s2807 + $0x3c] sm:$0xf]
        %v2835 = vunpack.c.l.b16 %v2796
        %v2836 = vunpack.c.l.b16 %v2797
        %v2837 = vunpack.c.l.b16 %v2798
        %v2838 = vunpack.c.l.b16 %v2799
        %v2839 = vunpack.c.l.b16 %v2800
        %v2840 = vunpack.c.l.b16 %v2801
        %v2841 = vunpack.c.l.b16 %v2802
        %v2842 = vunpack.c.l.b16 %v2803
        %v2843 = vunpack.c.l.b16 %v2804
        %v2844 = vunpack.c.l.b16 %v2805
        %v2845 = vunpack.c.l.b16 %v2806
        %v2846 = vpack.c.b16 %v2836, %v2835
        %v2847 = vpack.c.b16 %v2838, %v2837
        %v2848 = vpack.c.b16 %v2840, %v2839
        %v2849 = vpack.c.b16 %v2842, %v2841
        %v2850 = vpack.c.b16 %v2844, %v2843
        %v2851 = vpack.c.b16 %v2845, %v2845
        %v2852 = vrot.slane %v2846, 2
        %v2853 = vrot.slane %v2847, 2
        %v2854 = vsel %vm2667, %v2852, %v2853
        %v2855 = vrot.slane %v2848, 2
        %v2856 = vsel %vm2667, %v2853, %v2855
        %v2857 = vrot.slane %v2849, 2
        %v2858 = vsel %vm2667, %v2855, %v2857
        %v2859 = vrot.slane %v2850, 2
        %v2860 = vsel %vm2667, %v2857, %v2859
        %v2861 = vrot.slane %v2851, 2
        %v2862 = vsel %vm2667, %v2859, %v2861
        %v2884 = vunpack.c.l.b16 %v2808
        %v2885 = vunpack.c.l.b16 %v2809
        %v2886 = vunpack.c.l.b16 %v2810
        %v2887 = vunpack.c.l.b16 %v2811
        %v2888 = vunpack.c.l.b16 %v2812
        %v2889 = vunpack.c.l.b16 %v2813
        %v2890 = vunpack.c.l.b16 %v2814
        %v2891 = vunpack.c.l.b16 %v2815
        %v2892 = vunpack.c.l.b16 %v2816
        %v2893 = vunpack.c.l.b16 %v2817
        %v2894 = vunpack.c.l.b16 %v2818
        %v2895 = vunpack.c.l.b16 %v2819
        %v2896 = vunpack.c.l.b16 %v2820
        %v2897 = vunpack.c.l.b16 %v2821
        %v2898 = vunpack.c.l.b16 %v2822
        %v2899 = vunpack.c.l.b16 %v2823
        %v2900 = vpack.c.b16 %v2885, %v2884
        %v2901 = vpack.c.b16 %v2887, %v2886
        %v2902 = vpack.c.b16 %v2889, %v2888
        %v2903 = vpack.c.b16 %v2891, %v2890
        %v2904 = vpack.c.b16 %v2893, %v2892
        %v2905 = vpack.c.b16 %v2895, %v2894
        %v2906 = vpack.c.b16 %v2897, %v2896
        %v2907 = vpack.c.b16 %v2899, %v2898
        %2916 = vmatpush.bf16.msra.mxu0 %v2907
        %2917 = vmatpush.bf16.msra.mxu0 %v2906
        %2918 = vmatpush.bf16.msra.mxu0 %v2905
        %2919 = vmatpush.bf16.msra.mxu0 %v2904
        %2920 = vmatpush.bf16.msra.mxu0 %v2903
        %2921 = vmatpush.bf16.msra.mxu0 %v2902
        %2922 = vmatpush.bf16.msra.mxu0 %v2901
        %2923 = vmatpush.bf16.msra.mxu0 %v2900
        %2924 = vmatmul.bf16.gmra.mxu0 %v2854
        %v2925 = vpop.f32.mrf.mxu0
        %v2926 = vadd.f32 0.0, %v2925
        %v2927 = vpop.f32.mrf.mxu0
        %v2928 = vadd.f32 0.0, %v2927
        %2929 = vmatmul.bf16.gmra.mxu0 %v2856
        %v2930 = vpop.f32.mrf.mxu0
        %v2931 = vadd.f32 0.0, %v2930
        %v2932 = vpop.f32.mrf.mxu0
        %v2933 = vadd.f32 0.0, %v2932
        %2934 = vmatmul.bf16.gmra.mxu0 %v2858
        %v2935 = vpop.f32.mrf.mxu0
        %v2936 = vadd.f32 0.0, %v2935
        %v2937 = vpop.f32.mrf.mxu0
        %v2938 = vadd.f32 0.0, %v2937
        %2939 = vmatmul.bf16.gmra.mxu0 %v2860
        %v2940 = vpop.f32.mrf.mxu0
        %v2941 = vadd.f32 0.0, %v2940
        %v2942 = vpop.f32.mrf.mxu0
        %v2943 = vadd.f32 0.0, %v2942
        %2944 = vmatmul.bf16.gmra.mxu0 %v2862
        %v2945 = vpop.f32.mrf.mxu0
        %v2946 = vadd.f32 0.0, %v2945
        %v2947 = vpop.f32.mrf.mxu0
        %v2948 = vadd.f32 0.0, %v2947
        %2949 = vdwg.mxu0
        %v2950 = vld [vmem:[#allocation3] sm:$0xff]
        %v2951 = vld [vmem:[#allocation3 + $0x8] sm:$0xff]
        %v2952 = vld [vmem:[#allocation3 + $0x10] sm:$0xff]
        %v2953 = vld [vmem:[#allocation3 + $0x18] sm:$0xff]
        %v2954 = vld [vmem:[#allocation3 + $0x20] sm:$0xff]
        %v2955 = vld [vmem:[#allocation3 + $0x28] sm:$0xff]
        %v2956 = vld [vmem:[#allocation3 + $0x30] sm:$0xff]
        %v2957 = vld [vmem:[#allocation3 + $0x38] sm:$0xff]
        %v2958 = vld [vmem:[#allocation3 + $0x40] sm:$0xff]
        %v2959 = vld [vmem:[#allocation3 + $0x48] sm:$0xff]
        %v2960 = vadd.f32 %v2950, %v2926
        %v2961 = vadd.f32 %v2951, %v2928
        %v2962 = vadd.f32 %v2952, %v2931
        %v2963 = vadd.f32 %v2953, %v2933
        %v2964 = vadd.f32 %v2954, %v2936
        %v2965 = vadd.f32 %v2955, %v2938
        %v2966 = vadd.f32 %v2956, %v2941
        %v2967 = vadd.f32 %v2957, %v2943
        %v2968 = vadd.f32 %v2958, %v2946
        %v2969 = vadd.f32 %v2959, %v2948
        %2970 = vst [vmem:[#allocation3] sm:$0xff] %v2960
        %2971 = vst [vmem:[#allocation3 + $0x8] sm:$0xff] %v2961
        %2972 = vst [vmem:[#allocation3 + $0x10] sm:$0xff] %v2962
        %2973 = vst [vmem:[#allocation3 + $0x18] sm:$0xff] %v2963
        %2974 = vst [vmem:[#allocation3 + $0x20] sm:$0xff] %v2964
        %2975 = vst [vmem:[#allocation3 + $0x28] sm:$0xff] %v2965
        %2976 = vst [vmem:[#allocation3 + $0x30] sm:$0xff] %v2966
        %2977 = vst [vmem:[#allocation3 + $0x38] sm:$0xff] %v2967
        %2978 = vst [vmem:[#allocation3 + $0x40] sm:$0xff] %v2968
        %2979 = vst [vmem:[#allocation3 + $0x48] sm:$0xff] %v2969
        %v2980 = vld [vmem:[#allocation2 + $0x8] sm:$0xc]
        %v2981 = vld [vmem:[#allocation2 + $0xc] sm:$0xf]
        %v2982 = vld [vmem:[#allocation2 + $0x10] sm:$0xf]
        %v2983 = vld [vmem:[#allocation2 + $0x14] sm:$0xf]
        %v2984 = vld [vmem:[#allocation2 + $0x18] sm:$0xf]
        %v2985 = vld [vmem:[#allocation2 + $0x1c] sm:$0xf]
        %v2986 = vld [vmem:[#allocation2 + $0x20] sm:$0xf]
        %v2987 = vld [vmem:[#allocation2 + $0x24] sm:$0xf]
        %v2988 = vld [vmem:[#allocation2 + $0x28] sm:$0xf]
        %v2989 = vld [vmem:[#allocation2 + $0x2c] sm:$0xf]
        %v2990 = vld [vmem:[#allocation2 + $0x30] sm:$0x7]
        %s2991 = scalar_lea.vmem [#allocation7], 448
        %v2992 = vld [vmem:[%s2991] sm:$0xf]
        %v2993 = vld [vmem:[%s2991 + $0x4] sm:$0xf]
        %v2994 = vld [vmem:[%s2991 + $0x8] sm:$0xf]
        %v2995 = vld [vmem:[%s2991 + $0xc] sm:$0xf]
        %v2996 = vld [vmem:[%s2991 + $0x10] sm:$0xf]
        %v2997 = vld [vmem:[%s2991 + $0x14] sm:$0xf]
        %v2998 = vld [vmem:[%s2991 + $0x18] sm:$0xf]
        %v2999 = vld [vmem:[%s2991 + $0x1c] sm:$0xf]
        %v3000 = vld [vmem:[%s2991 + $0x20] sm:$0xf]
        %v3001 = vld [vmem:[%s2991 + $0x24] sm:$0xf]
        %v3002 = vld [vmem:[%s2991 + $0x28] sm:$0xf]
        %v3003 = vld [vmem:[%s2991 + $0x2c] sm:$0xf]
        %v3004 = vld [vmem:[%s2991 + $0x30] sm:$0xf]
        %v3005 = vld [vmem:[%s2991 + $0x34] sm:$0xf]
        %v3006 = vld [vmem:[%s2991 + $0x38] sm:$0xf]
        %v3007 = vld [vmem:[%s2991 + $0x3c] sm:$0xf]
        %v3019 = vunpack.c.l.b16 %v2980
        %v3020 = vunpack.c.l.b16 %v2981
        %v3021 = vunpack.c.l.b16 %v2982
        %v3022 = vunpack.c.l.b16 %v2983
        %v3023 = vunpack.c.l.b16 %v2984
        %v3024 = vunpack.c.l.b16 %v2985
        %v3025 = vunpack.c.l.b16 %v2986
        %v3026 = vunpack.c.l.b16 %v2987
        %v3027 = vunpack.c.l.b16 %v2988
        %v3028 = vunpack.c.l.b16 %v2989
        %v3029 = vunpack.c.l.b16 %v2990
        %v3030 = vpack.c.b16 %v3020, %v3019
        %v3031 = vpack.c.b16 %v3022, %v3021
        %v3032 = vpack.c.b16 %v3024, %v3023
        %v3033 = vpack.c.b16 %v3026, %v3025
        %v3034 = vpack.c.b16 %v3028, %v3027
        %v3035 = vpack.c.b16 %v3029, %v3029
        %vm3036 = vsmask.f32 5376
        %v3038 = vshrl.u32 %v3030, 16
        %v3040 = vrot.slane %v3038, 2
        %v3041 = vshll.u32 %v3030, 16
        %v3043 = vrot.slane %v3041, 3
        %v3044 = vor.u32 %v3040, %v3043
        %v3046 = vshrl.u32 %v3031, 16
        %v3048 = vrot.slane %v3046, 2
        %v3049 = vshll.u32 %v3031, 16
        %v3051 = vrot.slane %v3049, 3
        %v3052 = vor.u32 %v3048, %v3051
        %v3053 = vsel %vm3036, %v3044, %v3052
        %v3055 = vshrl.u32 %v3032, 16
        %v3057 = vrot.slane %v3055, 2
        %v3058 = vshll.u32 %v3032, 16
        %v3060 = vrot.slane %v3058, 3
        %v3061 = vor.u32 %v3057, %v3060
        %v3062 = vsel %vm3036, %v3052, %v3061
        %v3064 = vshrl.u32 %v3033, 16
        %v3066 = vrot.slane %v3064, 2
        %v3067 = vshll.u32 %v3033, 16
        %v3069 = vrot.slane %v3067, 3
        %v3070 = vor.u32 %v3066, %v3069
        %v3071 = vsel %vm3036, %v3061, %v3070
        %v3073 = vshrl.u32 %v3034, 16
        %v3075 = vrot.slane %v3073, 2
        %v3076 = vshll.u32 %v3034, 16
        %v3078 = vrot.slane %v3076, 3
        %v3079 = vor.u32 %v3075, %v3078
        %v3080 = vsel %vm3036, %v3070, %v3079
        %v3082 = vshrl.u32 %v3035, 16
        %v3084 = vrot.slane %v3082, 2
        %v3085 = vshll.u32 %v3035, 16
        %v3087 = vrot.slane %v3085, 3
        %v3088 = vor.u32 %v3084, %v3087
        %v3089 = vsel %vm3036, %v3079, %v3088
        %v3111 = vunpack.c.l.b16 %v2992
        %v3112 = vunpack.c.l.b16 %v2993
        %v3113 = vunpack.c.l.b16 %v2994
        %v3114 = vunpack.c.l.b16 %v2995
        %v3115 = vunpack.c.l.b16 %v2996
        %v3116 = vunpack.c.l.b16 %v2997
        %v3117 = vunpack.c.l.b16 %v2998
        %v3118 = vunpack.c.l.b16 %v2999
        %v3119 = vunpack.c.l.b16 %v3000
        %v3120 = vunpack.c.l.b16 %v3001
        %v3121 = vunpack.c.l.b16 %v3002
        %v3122 = vunpack.c.l.b16 %v3003
        %v3123 = vunpack.c.l.b16 %v3004
        %v3124 = vunpack.c.l.b16 %v3005
        %v3125 = vunpack.c.l.b16 %v3006
        %v3126 = vunpack.c.l.b16 %v3007
        %v3127 = vpack.c.b16 %v3112, %v3111
        %v3128 = vpack.c.b16 %v3114, %v3113
        %v3129 = vpack.c.b16 %v3116, %v3115
        %v3130 = vpack.c.b16 %v3118, %v3117
        %v3131 = vpack.c.b16 %v3120, %v3119
        %v3132 = vpack.c.b16 %v3122, %v3121
        %v3133 = vpack.c.b16 %v3124, %v3123
        %v3134 = vpack.c.b16 %v3126, %v3125
        %3143 = vmatpush.bf16.msra.mxu0 %v3134
        %3144 = vmatpush.bf16.msra.mxu0 %v3133
        %3145 = vmatpush.bf16.msra.mxu0 %v3132
        %3146 = vmatpush.bf16.msra.mxu0 %v3131
        %3147 = vmatpush.bf16.msra.mxu0 %v3130
        %3148 = vmatpush.bf16.msra.mxu0 %v3129
        %3149 = vmatpush.bf16.msra.mxu0 %v3128
        %3150 = vmatpush.bf16.msra.mxu0 %v3127
        %3151 = vmatmul.bf16.gmra.mxu0 %v3053
        %v3152 = vpop.f32.mrf.mxu0
        %v3153 = vadd.f32 0.0, %v3152
        %v3154 = vpop.f32.mrf.mxu0
        %v3155 = vadd.f32 0.0, %v3154
        %3156 = vmatmul.bf16.gmra.mxu0 %v3062
        %v3157 = vpop.f32.mrf.mxu0
        %v3158 = vadd.f32 0.0, %v3157
        %v3159 = vpop.f32.mrf.mxu0
        %v3160 = vadd.f32 0.0, %v3159
        %3161 = vmatmul.bf16.gmra.mxu0 %v3071
        %v3162 = vpop.f32.mrf.mxu0
        %v3163 = vadd.f32 0.0, %v3162
        %v3164 = vpop.f32.mrf.mxu0
        %v3165 = vadd.f32 0.0, %v3164
        %3166 = vmatmul.bf16.gmra.mxu0 %v3080
        %v3167 = vpop.f32.mrf.mxu0
        %v3168 = vadd.f32 0.0, %v3167
        %v3169 = vpop.f32.mrf.mxu0
        %v3170 = vadd.f32 0.0, %v3169
        %3171 = vmatmul.bf16.gmra.mxu0 %v3089
        %v3172 = vpop.f32.mrf.mxu0
        %v3173 = vadd.f32 0.0, %v3172
        %v3174 = vpop.f32.mrf.mxu0
        %v3175 = vadd.f32 0.0, %v3174
        %3176 = vdwg.mxu0
        %v3177 = vld [vmem:[#allocation3] sm:$0xff]
        %v3178 = vld [vmem:[#allocation3 + $0x8] sm:$0xff]
        %v3179 = vld [vmem:[#allocation3 + $0x10] sm:$0xff]
        %v3180 = vld [vmem:[#allocation3 + $0x18] sm:$0xff]
        %v3181 = vld [vmem:[#allocation3 + $0x20] sm:$0xff]
        %v3182 = vld [vmem:[#allocation3 + $0x28] sm:$0xff]
        %v3183 = vld [vmem:[#allocation3 + $0x30] sm:$0xff]
        %v3184 = vld [vmem:[#allocation3 + $0x38] sm:$0xff]
        %v3185 = vld [vmem:[#allocation3 + $0x40] sm:$0xff]
        %v3186 = vld [vmem:[#allocation3 + $0x48] sm:$0xff]
        %v3187 = vadd.f32 %v3177, %v3153
        %v3188 = vadd.f32 %v3178, %v3155
        %v3189 = vadd.f32 %v3179, %v3158
        %v3190 = vadd.f32 %v3180, %v3160
        %v3191 = vadd.f32 %v3181, %v3163
        %v3192 = vadd.f32 %v3182, %v3165
        %v3193 = vadd.f32 %v3183, %v3168
        %v3194 = vadd.f32 %v3184, %v3170
        %v3195 = vadd.f32 %v3185, %v3173
        %v3196 = vadd.f32 %v3186, %v3175
        %3197 = vst [vmem:[#allocation3] sm:$0xff] %v3187
        %3198 = vst [vmem:[#allocation3 + $0x8] sm:$0xff] %v3188
        %3199 = vst [vmem:[#allocation3 + $0x10] sm:$0xff] %v3189
        %3200 = vst [vmem:[#allocation3 + $0x18] sm:$0xff] %v3190
        %3201 = vst [vmem:[#allocation3 + $0x20] sm:$0xff] %v3191
        %3202 = vst [vmem:[#allocation3 + $0x28] sm:$0xff] %v3192
        %3203 = vst [vmem:[#allocation3 + $0x30] sm:$0xff] %v3193
        %3204 = vst [vmem:[#allocation3 + $0x38] sm:$0xff] %v3194
        %3205 = vst [vmem:[#allocation3 + $0x40] sm:$0xff] %v3195
        %3206 = vst [vmem:[#allocation3 + $0x48] sm:$0xff] %v3196
        %v3207 = vld [vmem:[#allocation2 + $0x8] sm:$0x8]
        %v3208 = vld [vmem:[#allocation2 + $0xc] sm:$0xf]
        %v3209 = vld [vmem:[#allocation2 + $0x10] sm:$0xf]
        %v3210 = vld [vmem:[#allocation2 + $0x14] sm:$0xf]
        %v3211 = vld [vmem:[#allocation2 + $0x18] sm:$0xf]
        %v3212 = vld [vmem:[#allocation2 + $0x1c] sm:$0xf]
        %v3213 = vld [vmem:[#allocation2 + $0x20] sm:$0xf]
        %v3214 = vld [vmem:[#allocation2 + $0x24] sm:$0xf]
        %v3215 = vld [vmem:[#allocation2 + $0x28] sm:$0xf]
        %v3216 = vld [vmem:[#allocation2 + $0x2c] sm:$0xf]
        %v3217 = vld [vmem:[#allocation2 + $0x30] sm:$0x7]
        %s3218 = scalar_lea.vmem [#allocation7], 512
        %v3219 = vld [vmem:[%s3218] sm:$0xf]
        %v3220 = vld [vmem:[%s3218 + $0x4] sm:$0xf]
        %v3221 = vld [vmem:[%s3218 + $0x8] sm:$0xf]
        %v3222 = vld [vmem:[%s3218 + $0xc] sm:$0xf]
        %v3223 = vld [vmem:[%s3218 + $0x10] sm:$0xf]
        %v3224 = vld [vmem:[%s3218 + $0x14] sm:$0xf]
        %v3225 = vld [vmem:[%s3218 + $0x18] sm:$0xf]
        %v3226 = vld [vmem:[%s3218 + $0x1c] sm:$0xf]
        %v3227 = vld [vmem:[%s3218 + $0x20] sm:$0xf]
        %v3228 = vld [vmem:[%s3218 + $0x24] sm:$0xf]
        %v3229 = vld [vmem:[%s3218 + $0x28] sm:$0xf]
        %v3230 = vld [vmem:[%s3218 + $0x2c] sm:$0xf]
        %v3231 = vld [vmem:[%s3218 + $0x30] sm:$0xf]
        %v3232 = vld [vmem:[%s3218 + $0x34] sm:$0xf]
        %v3233 = vld [vmem:[%s3218 + $0x38] sm:$0xf]
        %v3234 = vld [vmem:[%s3218 + $0x3c] sm:$0xf]
        %v3246 = vunpack.c.l.b16 %v3207
        %v3247 = vunpack.c.l.b16 %v3208
        %v3248 = vunpack.c.l.b16 %v3209
        %v3249 = vunpack.c.l.b16 %v3210
        %v3250 = vunpack.c.l.b16 %v3211
        %v3251 = vunpack.c.l.b16 %v3212
        %v3252 = vunpack.c.l.b16 %v3213
        %v3253 = vunpack.c.l.b16 %v3214
        %v3254 = vunpack.c.l.b16 %v3215
        %v3255 = vunpack.c.l.b16 %v3216
        %v3256 = vunpack.c.l.b16 %v3217
        %v3257 = vpack.c.b16 %v3247, %v3246
        %v3258 = vpack.c.b16 %v3249, %v3248
        %v3259 = vpack.c.b16 %v3251, %v3250
        %v3260 = vpack.c.b16 %v3253, %v3252
        %v3261 = vpack.c.b16 %v3255, %v3254
        %v3262 = vpack.c.b16 %v3256, %v3256
        %vm3263 = vcmask 1044480
        %v3264 = vrot.slane %v3257, 3
        %v3265 = vrot.slane %v3258, 3
        %v3266 = vsel %vm3263, %v3264, %v3265
        %v3267 = vrot.slane %v3259, 3
        %v3268 = vsel %vm3263, %v3265, %v3267
        %v3269 = vrot.slane %v3260, 3
        %v3270 = vsel %vm3263, %v3267, %v3269
        %v3271 = vrot.slane %v3261, 3
        %v3272 = vsel %vm3263, %v3269, %v3271
        %v3273 = vrot.slane %v3262, 3
        %v3274 = vsel %vm3263, %v3271, %v3273
        %v3296 = vunpack.c.l.b16 %v3219
        %v3297 = vunpack.c.l.b16 %v3220
        %v3298 = vunpack.c.l.b16 %v3221
        %v3299 = vunpack.c.l.b16 %v3222
        %v3300 = vunpack.c.l.b16 %v3223
        %v3301 = vunpack.c.l.b16 %v3224
        %v3302 = vunpack.c.l.b16 %v3225
        %v3303 = vunpack.c.l.b16 %v3226
        %v3304 = vunpack.c.l.b16 %v3227
        %v3305 = vunpack.c.l.b16 %v3228
        %v3306 = vunpack.c.l.b16 %v3229
        %v3307 = vunpack.c.l.b16 %v3230
        %v3308 = vunpack.c.l.b16 %v3231
        %v3309 = vunpack.c.l.b16 %v3232
        %v3310 = vunpack.c.l.b16 %v3233
        %v3311 = vunpack.c.l.b16 %v3234
        %v3312 = vpack.c.b16 %v3297, %v3296
        %v3313 = vpack.c.b16 %v3299, %v3298
        %v3314 = vpack.c.b16 %v3301, %v3300
        %v3315 = vpack.c.b16 %v3303, %v3302
        %v3316 = vpack.c.b16 %v3305, %v3304
        %v3317 = vpack.c.b16 %v3307, %v3306
        %v3318 = vpack.c.b16 %v3309, %v3308
        %v3319 = vpack.c.b16 %v3311, %v3310
        %3328 = vmatpush.bf16.msra.mxu0 %v3319
        %3329 = vmatpush.bf16.msra.mxu0 %v3318
        %3330 = vmatpush.bf16.msra.mxu0 %v3317
        %3331 = vmatpush.bf16.msra.mxu0 %v3316
        %3332 = vmatpush.bf16.msra.mxu0 %v3315
        %3333 = vmatpush.bf16.msra.mxu0 %v3314
        %3334 = vmatpush.bf16.msra.mxu0 %v3313
        %3335 = vmatpush.bf16.msra.mxu0 %v3312
        %3336 = vmatmul.bf16.gmra.mxu0 %v3266
        %v3337 = vpop.f32.mrf.mxu0
        %v3338 = vadd.f32 0.0, %v3337
        %v3339 = vpop.f32.mrf.mxu0
        %v3340 = vadd.f32 0.0, %v3339
        %3341 = vmatmul.bf16.gmra.mxu0 %v3268
        %v3342 = vpop.f32.mrf.mxu0
        %v3343 = vadd.f32 0.0, %v3342
        %v3344 = vpop.f32.mrf.mxu0
        %v3345 = vadd.f32 0.0, %v3344
        %3346 = vmatmul.bf16.gmra.mxu0 %v3270
        %v3347 = vpop.f32.mrf.mxu0
        %v3348 = vadd.f32 0.0, %v3347
        %v3349 = vpop.f32.mrf.mxu0
        %v3350 = vadd.f32 0.0, %v3349
        %3351 = vmatmul.bf16.gmra.mxu0 %v3272
        %v3352 = vpop.f32.mrf.mxu0
        %v3353 = vadd.f32 0.0, %v3352
        %v3354 = vpop.f32.mrf.mxu0
        %v3355 = vadd.f32 0.0, %v3354
        %3356 = vmatmul.bf16.gmra.mxu0 %v3274
        %v3357 = vpop.f32.mrf.mxu0
        %v3358 = vadd.f32 0.0, %v3357
        %v3359 = vpop.f32.mrf.mxu0
        %v3360 = vadd.f32 0.0, %v3359
        %3361 = vdwg.mxu0
        %v3362 = vld [vmem:[#allocation3] sm:$0xff]
        %v3363 = vld [vmem:[#allocation3 + $0x8] sm:$0xff]
        %v3364 = vld [vmem:[#allocation3 + $0x10] sm:$0xff]
        %v3365 = vld [vmem:[#allocation3 + $0x18] sm:$0xff]
        %v3366 = vld [vmem:[#allocation3 + $0x20] sm:$0xff]
        %v3367 = vld [vmem:[#allocation3 + $0x28] sm:$0xff]
        %v3368 = vld [vmem:[#allocation3 + $0x30] sm:$0xff]
        %v3369 = vld [vmem:[#allocation3 + $0x38] sm:$0xff]
        %v3370 = vld [vmem:[#allocation3 + $0x40] sm:$0xff]
        %v3371 = vld [vmem:[#allocation3 + $0x48] sm:$0xff]
        %v3372 = vadd.f32 %v3362, %v3338
        %v3373 = vadd.f32 %v3363, %v3340
        %v3374 = vadd.f32 %v3364, %v3343
        %v3375 = vadd.f32 %v3365, %v3345
        %v3376 = vadd.f32 %v3366, %v3348
        %v3377 = vadd.f32 %v3367, %v3350
        %v3378 = vadd.f32 %v3368, %v3353
        %v3379 = vadd.f32 %v3369, %v3355
        %v3380 = vadd.f32 %v3370, %v3358
        %v3381 = vadd.f32 %v3371, %v3360
        %3382 = vst [vmem:[#allocation3] sm:$0xff] %v3372
        %3383 = vst [vmem:[#allocation3 + $0x8] sm:$0xff] %v3373
        %3384 = vst [vmem:[#allocation3 + $0x10] sm:$0xff] %v3374
        %3385 = vst [vmem:[#allocation3 + $0x18] sm:$0xff] %v3375
        %3386 = vst [vmem:[#allocation3 + $0x20] sm:$0xff] %v3376
        %3387 = vst [vmem:[#allocation3 + $0x28] sm:$0xff] %v3377
        %3388 = vst [vmem:[#allocation3 + $0x30] sm:$0xff] %v3378
        %3389 = vst [vmem:[#allocation3 + $0x38] sm:$0xff] %v3379
        %3390 = vst [vmem:[#allocation3 + $0x40] sm:$0xff] %v3380
        %3391 = vst [vmem:[#allocation3 + $0x48] sm:$0xff] %v3381
        %v3392 = vld [vmem:[#allocation3] sm:$0xff]
        %v3393 = vld [vmem:[#allocation3 + $0x8] sm:$0xff]
        %v3394 = vld [vmem:[#allocation3 + $0x10] sm:$0xff]
        %v3395 = vld [vmem:[#allocation3 + $0x18] sm:$0xff]
        %v3396 = vld [vmem:[#allocation3 + $0x20] sm:$0xff]
        %v3397 = vld [vmem:[#allocation3 + $0x28] sm:$0xff]
        %v3398 = vld [vmem:[#allocation3 + $0x30] sm:$0xff]
        %v3399 = vld [vmem:[#allocation3 + $0x38] sm:$0xff]
        %v3400 = vld [vmem:[#allocation3 + $0x40] sm:$0xff]
        %v3401 = vld [vmem:[#allocation3 + $0x48] sm:$0xff]
        %v3402 = vld [vmem:[%s4] sm:$0x1]
        %v3404 = vperm.slane %v3402, 0
        %v3406 = vadd.f32 %v3392, %v3404
        %v3407 = vadd.f32 %v3393, %v3404
        %v3408 = vadd.f32 %v3394, %v3404
        %v3409 = vadd.f32 %v3395, %v3404
        %v3410 = vadd.f32 %v3396, %v3404
        %v3411 = vadd.f32 %v3397, %v3404
        %v3412 = vadd.f32 %v3398, %v3404
        %v3413 = vadd.f32 %v3399, %v3404
        %v3414 = vadd.f32 %v3400, %v3404
        %v3415 = vadd.f32 %v3401, %v3404
        %v3416 = vld [vmem:[%s310] sm:$0xf]
        %v3417 = vld [vmem:[%s310 + $0x4] sm:$0xf]
        %v3418 = vld [vmem:[%s310 + $0x8] sm:$0xf]
        %v3419 = vld [vmem:[%s310 + $0xc] sm:$0xf]
        %v3420 = vld [vmem:[%s310 + $0x10] sm:$0xf]
        %v3421 = vld [vmem:[%s310 + $0x14] sm:$0xf]
        %v3422 = vld [vmem:[%s310 + $0x18] sm:$0xf]
        %v3423 = vld [vmem:[%s310 + $0x1c] sm:$0xf]
        %v3424 = vld [vmem:[%s310 + $0x20] sm:$0xf]
        %v3425 = vld [vmem:[%s310 + $0x24] sm:$0xf]
        %v3426 = vld [vmem:[%s5] sm:$0xf]
        %v3427 = vld [vmem:[%s5 + $0x4] sm:$0xf]
        %v3428 = vld [vmem:[%s5 + $0x8] sm:$0xf]
        %v3429 = vld [vmem:[%s5 + $0xc] sm:$0xf]
        %v3430 = vld [vmem:[%s5 + $0x10] sm:$0xf]
        %v3431 = vld [vmem:[%s5 + $0x14] sm:$0xf]
        %v3432 = vld [vmem:[%s5 + $0x18] sm:$0xf]
        %v3433 = vld [vmem:[%s5 + $0x1c] sm:$0xf]
        %v3434 = vld [vmem:[%s5 + $0x20] sm:$0xf]
        %v3435 = vld [vmem:[%s5 + $0x24] sm:$0xf]
        %v3436 = vld [vmem:[%s5 + $0x28] sm:$0xf]
        %v3437 = vld [vmem:[%s5 + $0x2c] sm:$0xf]
        %v3438 = vld [vmem:[%s5 + $0x30] sm:$0xf]
        %v3439 = vld [vmem:[%s5 + $0x34] sm:$0xf]
        %v3440 = vld [vmem:[%s5 + $0x38] sm:$0xf]
        %v3441 = vld [vmem:[%s5 + $0x3c] sm:$0xf]
        %v3452 = vunpack.c.l.b16 %v3416
        %v3453 = vunpack.c.l.b16 %v3417
        %v3454 = vunpack.c.l.b16 %v3418
        %v3455 = vunpack.c.l.b16 %v3419
        %v3456 = vunpack.c.l.b16 %v3420
        %v3457 = vunpack.c.l.b16 %v3421
        %v3458 = vunpack.c.l.b16 %v3422
        %v3459 = vunpack.c.l.b16 %v3423
        %v3460 = vunpack.c.l.b16 %v3424
        %v3461 = vunpack.c.l.b16 %v3425
        %v3462 = vpack.c.b16 %v3453, %v3452
        %v3463 = vpack.c.b16 %v3455, %v3454
        %v3464 = vpack.c.b16 %v3457, %v3456
        %v3465 = vpack.c.b16 %v3459, %v3458
        %v3466 = vpack.c.b16 %v3461, %v3460
        %v3488 = vunpack.c.l.b16 %v3426
        %v3489 = vunpack.c.l.b16 %v3427
        %v3490 = vunpack.c.l.b16 %v3428
        %v3491 = vunpack.c.l.b16 %v3429
        %v3492 = vunpack.c.l.b16 %v3430
        %v3493 = vunpack.c.l.b16 %v3431
        %v3494 = vunpack.c.l.b16 %v3432
        %v3495 = vunpack.c.l.b16 %v3433
        %v3496 = vunpack.c.l.b16 %v3434
        %v3497 = vunpack.c.l.b16 %v3435
        %v3498 = vunpack.c.l.b16 %v3436
        %v3499 = vunpack.c.l.b16 %v3437
        %v3500 = vunpack.c.l.b16 %v3438
        %v3501 = vunpack.c.l.b16 %v3439
        %v3502 = vunpack.c.l.b16 %v3440
        %v3503 = vunpack.c.l.b16 %v3441
        %v3504 = vpack.c.b16 %v3489, %v3488
        %v3505 = vpack.c.b16 %v3491, %v3490
        %v3506 = vpack.c.b16 %v3493, %v3492
        %v3507 = vpack.c.b16 %v3495, %v3494
        %v3508 = vpack.c.b16 %v3497, %v3496
        %v3509 = vpack.c.b16 %v3499, %v3498
        %v3510 = vpack.c.b16 %v3501, %v3500
        %v3511 = vpack.c.b16 %v3503, %v3502
        %3520 = vmatpush.bf16.msra.mxu0 %v3511
        %3521 = vmatpush.bf16.msra.mxu0 %v3510
        %3522 = vmatpush.bf16.msra.mxu0 %v3509
        %3523 = vmatpush.bf16.msra.mxu0 %v3508
        %3524 = vmatpush.bf16.msra.mxu0 %v3507
        %3525 = vmatpush.bf16.msra.mxu0 %v3506
        %3526 = vmatpush.bf16.msra.mxu0 %v3505
        %3527 = vmatpush.bf16.msra.mxu0 %v3504
        %3528 = vmatmul.bf16.gmra.mxu0 %v3462
        %v3529 = vpop.f32.mrf.mxu0
        %v3530 = vadd.f32 0.0, %v3529
        %v3531 = vpop.f32.mrf.mxu0
        %v3532 = vadd.f32 0.0, %v3531
        %3533 = vmatmul.bf16.gmra.mxu0 %v3463
        %v3534 = vpop.f32.mrf.mxu0
        %v3535 = vadd.f32 0.0, %v3534
        %v3536 = vpop.f32.mrf.mxu0
        %v3537 = vadd.f32 0.0, %v3536
        %3538 = vmatmul.bf16.gmra.mxu0 %v3464
        %v3539 = vpop.f32.mrf.mxu0
        %v3540 = vadd.f32 0.0, %v3539
        %v3541 = vpop.f32.mrf.mxu0
        %v3542 = vadd.f32 0.0, %v3541
        %3543 = vmatmul.bf16.gmra.mxu0 %v3465
        %v3544 = vpop.f32.mrf.mxu0
        %v3545 = vadd.f32 0.0, %v3544
        %v3546 = vpop.f32.mrf.mxu0
        %v3547 = vadd.f32 0.0, %v3546
        %3548 = vmatmul.bf16.gmra.mxu0 %v3466
        %v3549 = vpop.f32.mrf.mxu0
        %v3550 = vadd.f32 0.0, %v3549
        %v3551 = vpop.f32.mrf.mxu0
        %v3552 = vadd.f32 0.0, %v3551
        %3553 = vdwg.mxu0
        %v3554 = vadd.f32 %v3406, %v3530
        %v3555 = vadd.f32 %v3407, %v3532
        %v3556 = vadd.f32 %v3408, %v3535
        %v3557 = vadd.f32 %v3409, %v3537
        %v3558 = vadd.f32 %v3410, %v3540
        %v3559 = vadd.f32 %v3411, %v3542
        %v3560 = vadd.f32 %v3412, %v3545
        %v3561 = vadd.f32 %v3413, %v3547
        %v3562 = vadd.f32 %v3414, %v3550
        %v3563 = vadd.f32 %v3415, %v3552
        %v3564 = vld [vmem:[%s6] sm:$0x1]
        %v3566 = vperm.slane %v3564, 0
        %v3568 = vadd.f32 %v3554, %v3566
        %v3569 = vadd.f32 %v3555, %v3566
        %v3570 = vadd.f32 %v3556, %v3566
        %v3571 = vadd.f32 %v3557, %v3566
        %v3572 = vadd.f32 %v3558, %v3566
        %v3573 = vadd.f32 %v3559, %v3566
        %v3574 = vadd.f32 %v3560, %v3566
        %v3575 = vadd.f32 %v3561, %v3566
        %v3576 = vadd.f32 %v3562, %v3566
        %v3577 = vadd.f32 %v3563, %v3566
        %v3578 = vmax.f32 %v3568, 0.0
        %v3579 = vmax.f32 %v3569, 0.0
        %v3580 = vmax.f32 %v3570, 0.0
        %v3581 = vmax.f32 %v3571, 0.0
        %v3582 = vmax.f32 %v3572, 0.0
        %v3583 = vmax.f32 %v3573, 0.0
        %v3584 = vmax.f32 %v3574, 0.0
        %v3585 = vmax.f32 %v3575, 0.0
        %v3586 = vmax.f32 %v3576, 0.0
        %v3587 = vmax.f32 %v3577, 0.0
        %3588 = vst [vmem:[%s305] sm:$0xff] %v3578
        %3589 = vst [vmem:[%s305 + $0x8] sm:$0xff] %v3579
        %3590 = vst [vmem:[%s305 + $0x10] sm:$0xff] %v3580
        %3591 = vst [vmem:[%s305 + $0x18] sm:$0xff] %v3581
        %3592 = vst [vmem:[%s305 + $0x20] sm:$0xff] %v3582
        %3593 = vst [vmem:[%s305 + $0x28] sm:$0xff] %v3583
        %3594 = vst [vmem:[%s305 + $0x30] sm:$0xff] %v3584
        %3595 = vst [vmem:[%s305 + $0x38] sm:$0xff] %v3585
        %3596 = vst [vmem:[%s305 + $0x40] sm:$0xff] %v3586
        %3597 = vst [vmem:[%s305 + $0x48] sm:$0xff] %v3587
        %s3598 = sand.u32 %s183, 1
        %s3599 = scalar_lea.sflag [#allocation6], %s3598
        %s3600 = sand.u32 %s183, 1
        %s3601 = smul.addr %s3600, 80
        %s3602 = scalar_lea.vmem [#allocation9], %s3601
        // Predicated region
        $region57: #{tpu_custom_call.1} parent=47 // pred_check
          %p3603 = pneg %p193
        $region58: #{tpu_custom_call.1} parent=47 // pred_check_branch
          %3605 = sbr.rel (%p3603) target = $region60
        $region59: #{tpu_custom_call.1} parent=47 // pred_region
          %3607 = vsyncadd %s3599, 0
          %s3608 = smul.addr %s23, 10
          %s3609 = smul.addr %s3608, 8
          %s3610 = scalar_lea.hbm %s7, %s3609
          %s3611 = sshll.u32 %s3602, 4
          %s3612 = int_to_ptr.vmem [resolvable:$true] %s3611
          %s3613 = sshll.u32 %s3610, 4
          %s3614 = int_to_ptr.hbm [resolvable:$true] %s3613
          %3619 = dma.vmem_to_hbm [thread:$0]  %s3612, 1280, %s3614, %s3599, 128, 128, 8
        $region60: #{tpu_custom_call.1} parent=47 // pred_fallthru
          _
      $region48: #{tpu_custom_call.1} parent=5 // pred_fallthru
        _
      %p3620 = scmp.le.s32.totalorder 2, %s18
      // Predicated region
      $region61: #{tpu_custom_call.1} parent=5 // pred_check
        %p3621 = pneg %p3620
      $region62: #{tpu_custom_call.1} parent=5 // pred_check_branch
        %3623 = sbr.rel (%p3621) target = $region64
      $region63: #{tpu_custom_call.1} parent=5 // pred_region
        %s3624 = ssub.s32 %s18, 2
        // Predicated region
        $region65: #{tpu_custom_call.1} parent=63 // pred_check
          %p3625 = pneg %p199
        $region66: #{tpu_custom_call.1} parent=63 // pred_check_branch
          %3627 = sbr.rel (%p3625) target = $region68
        $region67: #{tpu_custom_call.1} parent=63 // pred_region
          %s3628 = sand.u32 %s184, 1
          %s3629 = scalar_lea.sflag [#allocation6], %s3628
          %s3630 = sand.u32 %s184, 1
          %s3631 = smul.addr %s3630, 80
          %s3632 = scalar_lea.vmem [#allocation9], %s3631
          %3634 = dma.done %s3629, 1280
        $region68: #{tpu_custom_call.1} parent=63 // pred_fallthru
          _
      $region64: #{tpu_custom_call.1} parent=5 // pred_fallthru
        _
    $region6: #{tpu_custom_call.1} parent=1 // loop_footer
      %s22 = sadd.s32 1, %s18
    $region7: #{tpu_custom_call.1} parent=1 // loop_footer_branch
      %17 = sbr.rel target = $region3
    $region8: #{tpu_custom_call.1} parent=1 // loop_exit
      _
    %3635 = vsyncpa [#allocation5], 1
    %s3636 = scalar_lea.sflag [#allocation5], 1
    %3637 = vsyncpa %s3636, 1
    %3638 = vsyncpa [#allocation8], 1
    %3639 = vsyncpa [#allocation6], 1
    %s3640 = scalar_lea.sflag [#allocation6], 1
    %3641 = vsyncpa %s3640, 1

</llo_original>
